<compile_context>
chip_gen: v7x
topology: tpu7x:2x2x1
jax: 0.10.0
libtpu: 0.0.40
codegen_flags: <defaults>
</compile_context>

<pallas_src>
import jax
import jax.numpy as jnp
from jax.experimental import pallas as pl
from jax.experimental.pallas import tpu as pltpu


# ----------------------------- tiling configuration -------------------------

def _round_up(x, m):
    return -(-x // m) * m


def _query_vmem_bytes():
    try:
        return pltpu.get_tpu_info().vmem_capacity_bytes
    except Exception:
        return 64 * 1024 * 1024  # conservative (v7x-sized) fallback


_VMEM_BYTES = _query_vmem_bytes()
_LARGE_VMEM = _VMEM_BYTES >= (100 << 20)          # v5e / v6e: 128 MiB physical
_TILE_M = 2048 if _LARGE_VMEM else 1024           # pixel-axis tile (multiple of 8)
_VMEM_LIMIT = (64 << 20) if _LARGE_VMEM else None  # raise scoped VMEM only where safe
_LINEAR_OUT_PAD = 128                             # lane-dense Linear output


# ----------------------------- Pallas kernels ------------------------------

def _conv_relu_pool_kernel(a_ref, w_ref, b_ref, o_ref):
    # a_ref: (4, TM, F) bf16 -- 4 maxpool quadrants of im2col patches (row tile)
    # w_ref: (F, Cout)  bf16 -- conv weight as a matmul matrix (VMEM-resident)
    # b_ref: (1, Cout)  f32  -- conv bias
    # o_ref: (TM, Cout) f32  -- pooled + ReLU'd conv output tile
    q, tm, f = a_ref.shape
    cout = w_ref.shape[1]
    # Fused quadrant matmul: one long LHS stream through the MXU.
    a = a_ref[...].reshape(q * tm, f)                 # sublane-contiguous (TM % 8 == 0)
    acc = jnp.dot(a, w_ref[...], preferred_element_type=jnp.float32)  # (4*TM, Cout) f32
    pooled = jnp.max(acc.reshape(q, tm, cout), axis=0)                # VPU quadrant max
    # bias is per-channel, so max-then-bias == bias-then-max; ReLU is monotone.
    o_ref[...] = jnp.maximum(pooled + b_ref[...], 0.0).astype(o_ref.dtype)


def _linear_kernel(x_ref, w_ref, b_ref, o_ref):
    # x_ref: (TN, K) bf16, w_ref: (K, 128) bf16, b_ref: (1, 128) f32, o_ref: (TN, 128) f32
    o_ref[...] = (
        jnp.dot(x_ref[...], w_ref[...], preferred_element_type=jnp.float32)
        + b_ref[...]
    ).astype(o_ref.dtype)


# ------------------------------ pallas_call wrappers ------------------------

def conv_relu_pool(patches4, w_mat, b_vec, *, tile_m=None):
    Q, M, F = patches4.shape
    Cout = w_mat.shape[1]
    if tile_m is None:
        tile_m = _TILE_M
    tm = min(tile_m, _round_up(M, 8))      # multiple of 8; partial tiles are masked
    grid = (pl.cdiv(M, tm),)
    b2 = b_vec.reshape(1, Cout).astype(jnp.float32)
    return pl.pallas_call(
        _conv_relu_pool_kernel,
        out_shape=jax.ShapeDtypeStruct((M, Cout), jnp.float32),
        grid=grid,
        in_specs=[
            pl.BlockSpec((Q, tm, F), lambda i: (0, i, 0)),   # stream pixel tiles
            pl.BlockSpec((F, Cout), lambda i: (0, 0)),       # weight resident
            pl.BlockSpec((1, Cout), lambda i: (0, 0)),       # bias resident
        ],
        out_specs=pl.BlockSpec((tm, Cout), lambda i: (i, 0)),
        compiler_params=pltpu.CompilerParams(
            dimension_semantics=("parallel",),
            vmem_limit_bytes=_VMEM_LIMIT,
        ),
    )(patches4.astype(jnp.bfloat16), w_mat.astype(jnp.bfloat16), b2)


def linear(x, w_mat, b_vec, *, out_dim):
    N, K = x.shape
    O = w_mat.shape[1]                     # padded to a multiple of 128 lanes
    tn = min(256, _round_up(N, 8))
    grid = (pl.cdiv(N, tn),)
    b2 = b_vec.reshape(1, O).astype(jnp.float32)
    y = pl.pallas_call(
        _linear_kernel,
        out_shape=jax.ShapeDtypeStruct((N, O), jnp.float32),
        grid=grid,
        in_specs=[
            pl.BlockSpec((tn, K), lambda i: (i, 0)),
            pl.BlockSpec((K, O), lambda i: (0, 0)),
            pl.BlockSpec((1, O), lambda i: (0, 0)),
        ],
        out_specs=pl.BlockSpec((tn, O), lambda i: (i, 0)),
        compiler_params=pltpu.CompilerParams(dimension_semantics=("parallel",)),
    )(x.astype(jnp.bfloat16), w_mat.astype(jnp.bfloat16), b2)
    return y[:, :out_dim]


# ------------------------------ host-side glue ------------------------------

def _im2col_pool_groups(x_nhwc, k=5, pad=2):
    """im2col for a stride-1 kxk conv (pad=2) followed by 2x2 maxpool grouping.

    Returns (4, N*PH*PW, k*k*C) in bf16 where axis 0 indexes the four pixels of
    each 2x2 pool window and the feature order is (kh, kw, cin).
    """
    x_nhwc = x_nhwc.astype(jnp.bfloat16)
    N, H, W, C = x_nhwc.shape
    xp = jnp.pad(x_nhwc, ((0, 0), (pad, pad), (pad, pad), (0, 0)))
    cols = []
    for kh in range(k):
        for kw in range(k):
            cols.append(xp[:, kh:kh + H, kw:kw + W, :])      # (N, H, W, C)
    patches = jnp.concatenate(cols, axis=-1)                  # (N, H, W, k*k*C)
    F = k * k * C
    PH, PW = H // 2, W // 2
    p = patches.reshape(N, PH, 2, PW, 2, F)
    p = jnp.transpose(p, (2, 4, 0, 1, 3, 5))                  # (2, 2, N, PH, PW, F)
    return p.reshape(4, N * PH * PW, F), (N, PH, PW)


def _conv_w_to_mat(w):
    # torch Conv2d weight layout (Cout, Cin, KH, KW) -> matmul (KH*KW*Cin, Cout)
    Cout, Cin, KH, KW = w.shape
    return jnp.transpose(w, (2, 3, 1, 0)).reshape(KH * KW * Cin, Cout)


def init_params(key):
    k1, k2, k3, k4, k5, k6 = jax.random.split(key, 6)
    w1 = jax.random.normal(k1, (16, 1, 5, 5), jnp.float32) * 0.1    # conv1
    b1 = jax.random.normal(k2, (16,), jnp.float32) * 0.01
    w2 = jax.random.normal(k3, (32, 16, 5, 5), jnp.float32) * 0.05  # conv2
    b2 = jax.random.normal(k4, (32,), jnp.float32) * 0.01
    w3 = jax.random.normal(k5, (32 * 7 * 7, 10), jnp.float32) * 0.02  # linear
    b3 = jax.random.normal(k6, (10,), jnp.float32) * 0.01
    # Pad the Linear output dim to 128 lanes (lane-dense stores); slice later.
    w3p = jnp.zeros((32 * 7 * 7, _LINEAR_OUT_PAD), jnp.float32).at[:, :10].set(w3)
    b3p = jnp.zeros((_LINEAR_OUT_PAD,), jnp.float32).at[:10].set(b3)
    return {
        "w1": _conv_w_to_mat(w1).astype(jnp.bfloat16), "b1": b1,
        "w2": _conv_w_to_mat(w2).astype(jnp.bfloat16), "b2": b2,
        "w3": w3p.astype(jnp.bfloat16), "b3": b3p,
    }


def cnn_forward(x_nchw, params):
    # NCHW (PyTorch) -> NHWC, bf16 activations for HBM-traffic reasons.
    x = jnp.transpose(x_nchw, (0, 2, 3, 1)).astype(jnp.bfloat16)  # (N, 28, 28, 1)

    # conv1 (1->16, k5, pad2) + ReLU + maxpool2
    p1, (N, PH1, PW1) = _im2col_pool_groups(x)
    y1 = conv_relu_pool(p1, params["w1"], params["b1"])           # (N*14*14, 16) f32
    y1 = y1.reshape(N, PH1, PW1, 16)

    # conv2 (16->32, k5, pad2) + ReLU + maxpool2
    p2, (_, PH2, PW2) = _im2col_pool_groups(y1)
    y2 = conv_relu_pool(p2, params["w2"], params["b2"])           # (N*7*7, 32) f32
    y2 = y2.reshape(N, PH2, PW2, 32)

    # flatten in PyTorch NCHW order: (N, C, H, W) -> (N, C*H*W), then Linear
    flat = jnp.transpose(y2, (0, 3, 1, 2)).reshape(N, 32 * PH2 * PW2)
    return linear(flat, params["w3"], params["b3"], out_dim=10)   # (N, 10)


if __name__ == "__main__":
    key = jax.random.PRNGKey(0)
    kx, kp = jax.random.split(key)
    # Module implies 28x28 single-channel input (Linear expects 32*7*7).
    x = jax.random.normal(kx, (2, 1, 28, 28), jnp.float32)
    params = init_params(kp)

    out = jax.jit(cnn_forward)(x, params)
    out = jax.block_until_ready(out)
    assert out.shape == (2, 10) and out.dtype == jnp.float32
    print("KERNEL_OK")
</pallas_src>

<mosaic_0001>
module attributes {stable_mosaic.version = 11 : i64} {
  func.func @_conv_relu_pool_kernel(%arg0: i32, %arg1: memref<4x392x25xbf16, #tpu.memory_space<vmem>>, %arg2: memref<25x16xbf16, #tpu.memory_space<vmem>>, %arg3: memref<1x16xf32, #tpu.memory_space<vmem>>, %arg4: memref<392x16xf32, #tpu.memory_space<vmem>>) attributes {dimension_semantics = [#tpu.dimension_semantics<parallel>], iteration_bounds = array<i64: 1>, scalar_prefetch = 0 : i64, scratch_operands = 0 : i64, tpu.core_type = #tpu.core_type<tc>, window_params = [{transform_indices = @transform_0, window_bounds = array<i64: 4, 392, 25>}, {pipeline_mode = #tpu.pipeline_mode<synchronous>, transform_indices = @transform_1, window_bounds = array<i64: 25, 16>}, {pipeline_mode = #tpu.pipeline_mode<synchronous>, transform_indices = @transform_2, window_bounds = array<i64: 1, 16>}, {transform_indices = @transform_3, window_bounds = array<i64: 392, 16>}]} {
    %c0 = arith.constant 0 : index
    %c0_0 = arith.constant 0 : index
    %c0_1 = arith.constant 0 : index
    %0 = vector.load %arg1[%c0, %c0_0, %c0_1] : memref<4x392x25xbf16, #tpu.memory_space<vmem>>, vector<4x392x25xbf16>
    %1 = vector.shape_cast %0 : vector<4x392x25xbf16> to vector<1568x25xbf16>
    %c0_2 = arith.constant 0 : index
    %c0_3 = arith.constant 0 : index
    %2 = vector.load %arg2[%c0_2, %c0_3] : memref<25x16xbf16, #tpu.memory_space<vmem>>, vector<25x16xbf16>
    %cst = arith.constant dense<0.000000e+00> : vector<1568x16xf32>
    %3 = tpu.matmul %1, %2, %cst {dimension_numbers = #tpu.dot_dimension_numbers<[1], [0], [0], [1], [0, 0, 1, 1], [], []>} : vector<1568x25xbf16>, vector<25x16xbf16>, vector<1568x16xf32> -> vector<1568x16xf32>
    %4 = vector.shape_cast %3 : vector<1568x16xf32> to vector<4x392x16xf32>
    %cst_4 = arith.constant dense<0xFF800000> : vector<392x16xf32>
    %5 = vector.multi_reduction <maximumf>, %4, %cst_4 [0] : vector<4x392x16xf32> to vector<392x16xf32>
    %c0_5 = arith.constant 0 : index
    %c0_6 = arith.constant 0 : index
    %6 = vector.load %arg3[%c0_5, %c0_6] : memref<1x16xf32, #tpu.memory_space<vmem>>, vector<1x16xf32>
    %7 = vector.broadcast %6 : vector<1x16xf32> to vector<392x16xf32>
    %8 = arith.addf %5, %7 : vector<392x16xf32>
    %cst_7 = arith.constant 0.000000e+00 : f32
    %9 = vector.broadcast %cst_7 : f32 to vector<392x16xf32>
    %10 = arith.maximumf %8, %9 : vector<392x16xf32>
    %c0_8 = arith.constant 0 : index
    %c0_9 = arith.constant 0 : index
    %11 = vector.load %arg4[%c0_8, %c0_9] : memref<392x16xf32, #tpu.memory_space<vmem>>, vector<392x16xf32>
    tpu.vector_store %arg4[%c0_8, %c0_9], %10 {strides = array<i32>} : memref<392x16xf32, #tpu.memory_space<vmem>>, vector<392x16xf32>,
    return
  }
  func.func @transform_0(%arg0: i32) -> (i32, i32, i32) {
    %c0_i32 = arith.constant 0 : i32
    %c0_i32_0 = arith.constant 0 : i32
    %c0_i32_1 = arith.constant 0 : i32
    return %c0_i32, %arg0, %c0_i32_0 : i32, i32, i32
  }
  func.func @transform_1(%arg0: i32) -> (i32, i32) {
    %c0_i32 = arith.constant 0 : i32
    %c0_i32_0 = arith.constant 0 : i32
    %c0_i32_1 = arith.constant 0 : i32
    return %c0_i32, %c0_i32_0 : i32, i32
  }
  func.func @transform_2(%arg0: i32) -> (i32, i32) {
    %c0_i32 = arith.constant 0 : i32
    %c0_i32_0 = arith.constant 0 : i32
    %c0_i32_1 = arith.constant 0 : i32
    return %c0_i32, %c0_i32_0 : i32, i32
  }
  func.func @transform_3(%arg0: i32) -> (i32, i32) {
    %c0_i32 = arith.constant 0 : i32
    %c0_i32_0 = arith.constant 0 : i32
    return %arg0, %c0_i32 : i32, i32
  }
}

module attributes {stable_mosaic.version = 11 : i64} {
  func.func @_conv_relu_pool_kernel(%arg0: i32, %arg1: memref<4x104x400xbf16, #tpu.memory_space<vmem>>, %arg2: memref<400x32xbf16, #tpu.memory_space<vmem>>, %arg3: memref<1x32xf32, #tpu.memory_space<vmem>>, %arg4: memref<104x32xf32, #tpu.memory_space<vmem>>) attributes {dimension_semantics = [#tpu.dimension_semantics<parallel>], iteration_bounds = array<i64: 1>, scalar_prefetch = 0 : i64, scratch_operands = 0 : i64, tpu.core_type = #tpu.core_type<tc>, window_params = [{transform_indices = @transform_0, window_bounds = array<i64: 4, 104, 400>}, {pipeline_mode = #tpu.pipeline_mode<synchronous>, transform_indices = @transform_1, window_bounds = array<i64: 400, 32>}, {pipeline_mode = #tpu.pipeline_mode<synchronous>, transform_indices = @transform_2, window_bounds = array<i64: 1, 32>}, {transform_indices = @transform_3, window_bounds = array<i64: 104, 32>}]} {
    %c0 = arith.constant 0 : index
    %c0_0 = arith.constant 0 : index
    %c0_1 = arith.constant 0 : index
    %0 = vector.load %arg1[%c0, %c0_0, %c0_1] : memref<4x104x400xbf16, #tpu.memory_space<vmem>>, vector<4x104x400xbf16>
    %1 = vector.shape_cast %0 : vector<4x104x400xbf16> to vector<416x400xbf16>
    %c0_2 = arith.constant 0 : index
    %c0_3 = arith.constant 0 : index
    %2 = vector.load %arg2[%c0_2, %c0_3] : memref<400x32xbf16, #tpu.memory_space<vmem>>, vector<400x32xbf16>
    %cst = arith.constant dense<0.000000e+00> : vector<416x32xf32>
    %3 = tpu.matmul %1, %2, %cst {dimension_numbers = #tpu.dot_dimension_numbers<[1], [0], [0], [1], [0, 0, 1, 1], [], []>} : vector<416x400xbf16>, vector<400x32xbf16>, vector<416x32xf32> -> vector<416x32xf32>
    %4 = vector.shape_cast %3 : vector<416x32xf32> to vector<4x104x32xf32>
    %cst_4 = arith.constant dense<0xFF800000> : vector<104x32xf32>
    %5 = vector.multi_reduction <maximumf>, %4, %cst_4 [0] : vector<4x104x32xf32> to vector<104x32xf32>
    %c0_5 = arith.constant 0 : index
    %c0_6 = arith.constant 0 : index
    %6 = vector.load %arg3[%c0_5, %c0_6] : memref<1x32xf32, #tpu.memory_space<vmem>>, vector<1x32xf32>
    %7 = vector.broadcast %6 : vector<1x32xf32> to vector<104x32xf32>
    %8 = arith.addf %5, %7 : vector<104x32xf32>
    %cst_7 = arith.constant 0.000000e+00 : f32
    %9 = vector.broadcast %cst_7 : f32 to vector<104x32xf32>
    %10 = arith.maximumf %8, %9 : vector<104x32xf32>
    %c0_8 = arith.constant 0 : index
    %c0_9 = arith.constant 0 : index
    %11 = vector.load %arg4[%c0_8, %c0_9] : memref<104x32xf32, #tpu.memory_space<vmem>>, vector<104x32xf32>
    tpu.vector_store %arg4[%c0_8, %c0_9], %10 {strides = array<i32>} : memref<104x32xf32, #tpu.memory_space<vmem>>, vector<104x32xf32>,
    return
  }
  func.func @transform_0(%arg0: i32) -> (i32, i32, i32) {
    %c0_i32 = arith.constant 0 : i32
    %c0_i32_0 = arith.constant 0 : i32
    %c0_i32_1 = arith.constant 0 : i32
    return %c0_i32, %arg0, %c0_i32_0 : i32, i32, i32
  }
  func.func @transform_1(%arg0: i32) -> (i32, i32) {
    %c0_i32 = arith.constant 0 : i32
    %c0_i32_0 = arith.constant 0 : i32
    %c0_i32_1 = arith.constant 0 : i32
    return %c0_i32, %c0_i32_0 : i32, i32
  }
  func.func @transform_2(%arg0: i32) -> (i32, i32) {
    %c0_i32 = arith.constant 0 : i32
    %c0_i32_0 = arith.constant 0 : i32
    %c0_i32_1 = arith.constant 0 : i32
    return %c0_i32, %c0_i32_0 : i32, i32
  }
  func.func @transform_3(%arg0: i32) -> (i32, i32) {
    %c0_i32 = arith.constant 0 : i32
    %c0_i32_0 = arith.constant 0 : i32
    return %arg0, %c0_i32 : i32, i32
  }
}

module attributes {stable_mosaic.version = 11 : i64} {
  func.func @_linear_kernel(%arg0: i32, %arg1: memref<8x1568xbf16, #tpu.memory_space<vmem>>, %arg2: memref<1568x128xbf16, #tpu.memory_space<vmem>>, %arg3: memref<1x128xf32, #tpu.memory_space<vmem>>, %arg4: memref<8x128xf32, #tpu.memory_space<vmem>>) attributes {dimension_semantics = [#tpu.dimension_semantics<parallel>], iteration_bounds = array<i64: 1>, scalar_prefetch = 0 : i64, scratch_operands = 0 : i64, tpu.core_type = #tpu.core_type<tc>, window_params = [{transform_indices = @transform_0, window_bounds = array<i64: 8, 1568>}, {pipeline_mode = #tpu.pipeline_mode<synchronous>, transform_indices = @transform_1, window_bounds = array<i64: 1568, 128>}, {pipeline_mode = #tpu.pipeline_mode<synchronous>, transform_indices = @transform_2, window_bounds = array<i64: 1, 128>}, {transform_indices = @transform_3, window_bounds = array<i64: 8, 128>}]} {
    %c0 = arith.constant 0 : index
    %c0_0 = arith.constant 0 : index
    %0 = vector.load %arg1[%c0, %c0_0] : memref<8x1568xbf16, #tpu.memory_space<vmem>>, vector<8x1568xbf16>
    %c0_1 = arith.constant 0 : index
    %c0_2 = arith.constant 0 : index
    %1 = vector.load %arg2[%c0_1, %c0_2] : memref<1568x128xbf16, #tpu.memory_space<vmem>>, vector<1568x128xbf16>
    %cst = arith.constant dense<0.000000e+00> : vector<8x128xf32>
    %2 = tpu.matmul %0, %1, %cst {dimension_numbers = #tpu.dot_dimension_numbers<[1], [0], [0], [1], [0, 0, 1, 1], [], []>} : vector<8x1568xbf16>, vector<1568x128xbf16>, vector<8x128xf32> -> vector<8x128xf32>
    %c0_3 = arith.constant 0 : index
    %c0_4 = arith.constant 0 : index
    %3 = vector.load %arg3[%c0_3, %c0_4] : memref<1x128xf32, #tpu.memory_space<vmem>>, vector<1x128xf32>
    %4 = vector.broadcast %3 : vector<1x128xf32> to vector<8x128xf32>
    %5 = arith.addf %2, %4 : vector<8x128xf32>
    %c0_5 = arith.constant 0 : index
    %c0_6 = arith.constant 0 : index
    %6 = vector.load %arg4[%c0_5, %c0_6] : memref<8x128xf32, #tpu.memory_space<vmem>>, vector<8x128xf32>
    tpu.vector_store %arg4[%c0_5, %c0_6], %5 {strides = array<i32>} : memref<8x128xf32, #tpu.memory_space<vmem>>, vector<8x128xf32>,
    return
  }
  func.func @transform_0(%arg0: i32) -> (i32, i32) {
    %c0_i32 = arith.constant 0 : i32
    %c0_i32_0 = arith.constant 0 : i32
    return %arg0, %c0_i32 : i32, i32
  }
  func.func @transform_1(%arg0: i32) -> (i32, i32) {
    %c0_i32 = arith.constant 0 : i32
    %c0_i32_0 = arith.constant 0 : i32
    %c0_i32_1 = arith.constant 0 : i32
    return %c0_i32, %c0_i32_0 : i32, i32
  }
  func.func @transform_2(%arg0: i32) -> (i32, i32) {
    %c0_i32 = arith.constant 0 : i32
    %c0_i32_0 = arith.constant 0 : i32
    %c0_i32_1 = arith.constant 0 : i32
    return %c0_i32, %c0_i32_0 : i32, i32
  }
  func.func @transform_3(%arg0: i32) -> (i32, i32) {
    %c0_i32 = arith.constant 0 : i32
    %c0_i32_0 = arith.constant 0 : i32
    return %arg0, %c0_i32 : i32, i32
  }
}

</mosaic_0001>

<llo_original>
// kernel: cnn_forward.3
$region0: #{cnn_forward.3}
  #allocation0 [shape = 'u32[]', space=smem, size = 0x4, offset = 0x4, fixed_abs, tag = 'smem constant byte address 0x4 - core index']
  #allocation1 [shape = 'u32[144,128]{1,0:T(1,128)}', space=vmem, size = 0x12000, scoped, tag = 'internal scratch']
  %s0 = inlined_call_operand.vmem [shape: bf16[4,392,25], index: 0, kind: input, shape index: {}]
  %s1 = inlined_call_operand.vmem [shape: bf16[25,16], index: 1, kind: input, shape index: {}]
  %s2 = inlined_call_operand.vmem [shape: f32[1,16], index: 2, kind: input, shape index: {}]
  %s3 = inlined_call_operand.vmem [shape: f32[392,16], index: 3, kind: output, shape index: {}]
  %s4 = sld [smem:[#allocation0]]
  $region22: #{cnn_forward.3} parent=0
    _
  %s6 = ssub.s32 1, %s4
  %s7 = scalar_select 0, %s6, %s4
  // Predicated region
  $region2: #{cnn_forward.3} parent=0 // pred_check
    _
  $region3: #{cnn_forward.3} parent=0 // pred_check_branch
    %9 = sbr.rel (0) target = $region5
  $region4: #{cnn_forward.3} parent=0 // pred_region
    _
  $region5: #{cnn_forward.3} parent=0 // pred_fallthru
    _
  // Predicated region
  $region6: #{cnn_forward.3} parent=0 // pred_check
    _
  $region7: #{cnn_forward.3} parent=0 // pred_check_branch
    %11 = sbr.rel (0) target = $region9
  $region8: #{cnn_forward.3} parent=0 // pred_region
    _
  $region9: #{cnn_forward.3} parent=0 // pred_fallthru
    _
  // Predicated region
  $region10: #{cnn_forward.3} parent=0 // pred_check
    _
  $region11: #{cnn_forward.3} parent=0 // pred_check_branch
    %13 = sbr.rel (0) target = $region13
  $region12: #{cnn_forward.3} parent=0 // pred_region
    _
  $region13: #{cnn_forward.3} parent=0 // pred_fallthru
    _
  %v15 = vld [vmem:[%s0] sm:$0xf]
  %v16 = vld [vmem:[%s0 + $0x4] sm:$0xf]
  %v17 = vld [vmem:[%s0 + $0x8] sm:$0xf]
  %v18 = vld [vmem:[%s0 + $0xc] sm:$0xf]
  %v19 = vld [vmem:[%s0 + $0x10] sm:$0xf]
  %v20 = vld [vmem:[%s0 + $0x14] sm:$0xf]
  %v21 = vld [vmem:[%s0 + $0x18] sm:$0xf]
  %v22 = vld [vmem:[%s0 + $0x1c] sm:$0xf]
  %v23 = vld [vmem:[%s0 + $0x20] sm:$0xf]
  %v24 = vld [vmem:[%s0 + $0x24] sm:$0xf]
  %v25 = vld [vmem:[%s0 + $0x28] sm:$0xf]
  %v26 = vld [vmem:[%s0 + $0x2c] sm:$0xf]
  %v27 = vld [vmem:[%s0 + $0x30] sm:$0xf]
  %v28 = vld [vmem:[%s0 + $0x34] sm:$0xf]
  %v29 = vld [vmem:[%s0 + $0x38] sm:$0xf]
  %v30 = vld [vmem:[%s0 + $0x3c] sm:$0xf]
  %v31 = vld [vmem:[%s0 + $0x40] sm:$0xf]
  %v32 = vld [vmem:[%s0 + $0x44] sm:$0xf]
  %v33 = vld [vmem:[%s0 + $0x48] sm:$0xf]
  %v34 = vld [vmem:[%s0 + $0x4c] sm:$0xf]
  %v35 = vld [vmem:[%s0 + $0x50] sm:$0xf]
  %v36 = vld [vmem:[%s0 + $0x54] sm:$0xf]
  %v37 = vld [vmem:[%s0 + $0x58] sm:$0xf]
  %v38 = vld [vmem:[%s0 + $0x5c] sm:$0xf]
  %v39 = vld [vmem:[%s0 + $0x60] sm:$0xf]
  %v40 = vld [vmem:[%s0 + $0x64] sm:$0xf]
  %v41 = vld [vmem:[%s0 + $0x68] sm:$0xf]
  %v42 = vld [vmem:[%s0 + $0x6c] sm:$0xf]
  %v43 = vld [vmem:[%s0 + $0x70] sm:$0xf]
  %v44 = vld [vmem:[%s0 + $0x74] sm:$0xf]
  %v45 = vld [vmem:[%s0 + $0x78] sm:$0xf]
  %v46 = vld [vmem:[%s0 + $0x7c] sm:$0xf]
  %v47 = vld [vmem:[%s0 + $0x80] sm:$0xf]
  %v48 = vld [vmem:[%s0 + $0x84] sm:$0xf]
  %v49 = vld [vmem:[%s0 + $0x88] sm:$0xf]
  %v50 = vld [vmem:[%s0 + $0x8c] sm:$0xf]
  %v51 = vld [vmem:[%s0 + $0x90] sm:$0xf]
  %v52 = vld [vmem:[%s0 + $0x94] sm:$0xf]
  %v53 = vld [vmem:[%s0 + $0x98] sm:$0xf]
  %v54 = vld [vmem:[%s0 + $0x9c] sm:$0xf]
  %v55 = vld [vmem:[%s0 + $0xa0] sm:$0xf]
  %v56 = vld [vmem:[%s0 + $0xa4] sm:$0xf]
  %v57 = vld [vmem:[%s0 + $0xa8] sm:$0xf]
  %v58 = vld [vmem:[%s0 + $0xac] sm:$0xf]
  %v59 = vld [vmem:[%s0 + $0xb0] sm:$0xf]
  %v60 = vld [vmem:[%s0 + $0xb4] sm:$0xf]
  %v61 = vld [vmem:[%s0 + $0xb8] sm:$0xf]
  %v62 = vld [vmem:[%s0 + $0xbc] sm:$0xf]
  %v63 = vld [vmem:[%s0 + $0xc0] sm:$0xf]
  %v64 = vld [vmem:[%s0 + $0xc4] sm:$0xf]
  %v65 = vld [vmem:[%s0 + $0xc8] sm:$0xf]
  %v66 = vld [vmem:[%s0 + $0xcc] sm:$0xf]
  %v67 = vld [vmem:[%s0 + $0xd0] sm:$0xf]
  %v68 = vld [vmem:[%s0 + $0xd4] sm:$0xf]
  %v69 = vld [vmem:[%s0 + $0xd8] sm:$0xf]
  %v70 = vld [vmem:[%s0 + $0xdc] sm:$0xf]
  %v71 = vld [vmem:[%s0 + $0xe0] sm:$0xf]
  %v72 = vld [vmem:[%s0 + $0xe4] sm:$0xf]
  %v73 = vld [vmem:[%s0 + $0xe8] sm:$0xf]
  %v74 = vld [vmem:[%s0 + $0xec] sm:$0xf]
  %v75 = vld [vmem:[%s0 + $0xf0] sm:$0xf]
  %v76 = vld [vmem:[%s0 + $0xf4] sm:$0xf]
  %v77 = vld [vmem:[%s0 + $0xf8] sm:$0xf]
  %v78 = vld [vmem:[%s0 + $0xfc] sm:$0xf]
  %v79 = vld [vmem:[%s0 + $0x100] sm:$0xf]
  %v80 = vld [vmem:[%s0 + $0x104] sm:$0xf]
  %v81 = vld [vmem:[%s0 + $0x108] sm:$0xf]
  %v82 = vld [vmem:[%s0 + $0x10c] sm:$0xf]
  %v83 = vld [vmem:[%s0 + $0x110] sm:$0xf]
  %v84 = vld [vmem:[%s0 + $0x114] sm:$0xf]
  %v85 = vld [vmem:[%s0 + $0x118] sm:$0xf]
  %v86 = vld [vmem:[%s0 + $0x11c] sm:$0xf]
  %v87 = vld [vmem:[%s0 + $0x120] sm:$0xf]
  %v88 = vld [vmem:[%s0 + $0x124] sm:$0xf]
  %v89 = vld [vmem:[%s0 + $0x128] sm:$0xf]
  %v90 = vld [vmem:[%s0 + $0x12c] sm:$0xf]
  %v91 = vld [vmem:[%s0 + $0x130] sm:$0xf]
  %v92 = vld [vmem:[%s0 + $0x134] sm:$0xf]
  %v93 = vld [vmem:[%s0 + $0x138] sm:$0xf]
  %v94 = vld [vmem:[%s0 + $0x13c] sm:$0xf]
  %v95 = vld [vmem:[%s0 + $0x140] sm:$0xf]
  %v96 = vld [vmem:[%s0 + $0x144] sm:$0xf]
  %v97 = vld [vmem:[%s0 + $0x148] sm:$0xf]
  %v98 = vld [vmem:[%s0 + $0x14c] sm:$0xf]
  %v99 = vld [vmem:[%s0 + $0x150] sm:$0xf]
  %v100 = vld [vmem:[%s0 + $0x154] sm:$0xf]
  %v101 = vld [vmem:[%s0 + $0x158] sm:$0xf]
  %v102 = vld [vmem:[%s0 + $0x15c] sm:$0xf]
  %v103 = vld [vmem:[%s0 + $0x160] sm:$0xf]
  %v104 = vld [vmem:[%s0 + $0x164] sm:$0xf]
  %v105 = vld [vmem:[%s0 + $0x168] sm:$0xf]
  %v106 = vld [vmem:[%s0 + $0x16c] sm:$0xf]
  %v107 = vld [vmem:[%s0 + $0x170] sm:$0xf]
  %v108 = vld [vmem:[%s0 + $0x174] sm:$0xf]
  %v109 = vld [vmem:[%s0 + $0x178] sm:$0xf]
  %v110 = vld [vmem:[%s0 + $0x17c] sm:$0xf]
  %v111 = vld [vmem:[%s0 + $0x180] sm:$0xf]
  %v112 = vld [vmem:[%s0 + $0x184] sm:$0xf]
  %v113 = vld [vmem:[%s0 + $0x188] sm:$0xf]
  %v114 = vld [vmem:[%s0 + $0x18c] sm:$0xf]
  %v115 = vld [vmem:[%s0 + $0x190] sm:$0xf]
  %v116 = vld [vmem:[%s0 + $0x194] sm:$0xf]
  %v117 = vld [vmem:[%s0 + $0x198] sm:$0xf]
  %v118 = vld [vmem:[%s0 + $0x19c] sm:$0xf]
  %v119 = vld [vmem:[%s0 + $0x1a0] sm:$0xf]
  %v120 = vld [vmem:[%s0 + $0x1a4] sm:$0xf]
  %v121 = vld [vmem:[%s0 + $0x1a8] sm:$0xf]
  %v122 = vld [vmem:[%s0 + $0x1ac] sm:$0xf]
  %v123 = vld [vmem:[%s0 + $0x1b0] sm:$0xf]
  %v124 = vld [vmem:[%s0 + $0x1b4] sm:$0xf]
  %v125 = vld [vmem:[%s0 + $0x1b8] sm:$0xf]
  %v126 = vld [vmem:[%s0 + $0x1bc] sm:$0xf]
  %v127 = vld [vmem:[%s0 + $0x1c0] sm:$0xf]
  %v128 = vld [vmem:[%s0 + $0x1c4] sm:$0xf]
  %v129 = vld [vmem:[%s0 + $0x1c8] sm:$0xf]
  %v130 = vld [vmem:[%s0 + $0x1cc] sm:$0xf]
  %v131 = vld [vmem:[%s0 + $0x1d0] sm:$0xf]
  %v132 = vld [vmem:[%s0 + $0x1d4] sm:$0xf]
  %v133 = vld [vmem:[%s0 + $0x1d8] sm:$0xf]
  %v134 = vld [vmem:[%s0 + $0x1dc] sm:$0xf]
  %v135 = vld [vmem:[%s0 + $0x1e0] sm:$0xf]
  %v136 = vld [vmem:[%s0 + $0x1e4] sm:$0xf]
  %v137 = vld [vmem:[%s0 + $0x1e8] sm:$0xf]
  %v138 = vld [vmem:[%s0 + $0x1ec] sm:$0xf]
  %v139 = vld [vmem:[%s0 + $0x1f0] sm:$0xf]
  %v140 = vld [vmem:[%s0 + $0x1f4] sm:$0xf]
  %v141 = vld [vmem:[%s0 + $0x1f8] sm:$0xf]
  %v142 = vld [vmem:[%s0 + $0x1fc] sm:$0xf]
  %v143 = vld [vmem:[%s0 + $0x200] sm:$0xf]
  %v144 = vld [vmem:[%s0 + $0x204] sm:$0xf]
  %v145 = vld [vmem:[%s0 + $0x208] sm:$0xf]
  %v146 = vld [vmem:[%s0 + $0x20c] sm:$0xf]
  %v147 = vld [vmem:[%s0 + $0x210] sm:$0xf]
  %v148 = vld [vmem:[%s0 + $0x214] sm:$0xf]
  %v149 = vld [vmem:[%s0 + $0x218] sm:$0xf]
  %v150 = vld [vmem:[%s0 + $0x21c] sm:$0xf]
  %v151 = vld [vmem:[%s0 + $0x220] sm:$0xf]
  %v152 = vld [vmem:[%s0 + $0x224] sm:$0xf]
  %v153 = vld [vmem:[%s0 + $0x228] sm:$0xf]
  %v154 = vld [vmem:[%s0 + $0x22c] sm:$0xf]
  %v155 = vld [vmem:[%s0 + $0x230] sm:$0xf]
  %v156 = vld [vmem:[%s0 + $0x234] sm:$0xf]
  %v157 = vld [vmem:[%s0 + $0x238] sm:$0xf]
  %v158 = vld [vmem:[%s0 + $0x23c] sm:$0xf]
  %v159 = vld [vmem:[%s0 + $0x240] sm:$0xf]
  %v160 = vld [vmem:[%s0 + $0x244] sm:$0xf]
  %v161 = vld [vmem:[%s0 + $0x248] sm:$0xf]
  %v162 = vld [vmem:[%s0 + $0x24c] sm:$0xf]
  %v163 = vld [vmem:[%s0 + $0x250] sm:$0xf]
  %v164 = vld [vmem:[%s0 + $0x254] sm:$0xf]
  %v165 = vld [vmem:[%s0 + $0x258] sm:$0xf]
  %v166 = vld [vmem:[%s0 + $0x25c] sm:$0xf]
  %v167 = vld [vmem:[%s0 + $0x260] sm:$0xf]
  %v168 = vld [vmem:[%s0 + $0x264] sm:$0xf]
  %v169 = vld [vmem:[%s0 + $0x268] sm:$0xf]
  %v170 = vld [vmem:[%s0 + $0x26c] sm:$0xf]
  %v171 = vld [vmem:[%s0 + $0x270] sm:$0xf]
  %v172 = vld [vmem:[%s0 + $0x274] sm:$0xf]
  %v173 = vld [vmem:[%s0 + $0x278] sm:$0xf]
  %v174 = vld [vmem:[%s0 + $0x27c] sm:$0xf]
  %v175 = vld [vmem:[%s0 + $0x280] sm:$0xf]
  %v176 = vld [vmem:[%s0 + $0x284] sm:$0xf]
  %v177 = vld [vmem:[%s0 + $0x288] sm:$0xf]
  %v178 = vld [vmem:[%s0 + $0x28c] sm:$0xf]
  %v179 = vld [vmem:[%s0 + $0x290] sm:$0xf]
  %v180 = vld [vmem:[%s0 + $0x294] sm:$0xf]
  %v181 = vld [vmem:[%s0 + $0x298] sm:$0xf]
  %v182 = vld [vmem:[%s0 + $0x29c] sm:$0xf]
  %v183 = vld [vmem:[%s0 + $0x2a0] sm:$0xf]
  %v184 = vld [vmem:[%s0 + $0x2a4] sm:$0xf]
  %v185 = vld [vmem:[%s0 + $0x2a8] sm:$0xf]
  %v186 = vld [vmem:[%s0 + $0x2ac] sm:$0xf]
  %v187 = vld [vmem:[%s0 + $0x2b0] sm:$0xf]
  %v188 = vld [vmem:[%s0 + $0x2b4] sm:$0xf]
  %v189 = vld [vmem:[%s0 + $0x2b8] sm:$0xf]
  %v190 = vld [vmem:[%s0 + $0x2bc] sm:$0xf]
  %v191 = vld [vmem:[%s0 + $0x2c0] sm:$0xf]
  %v192 = vld [vmem:[%s0 + $0x2c4] sm:$0xf]
  %v193 = vld [vmem:[%s0 + $0x2c8] sm:$0xf]
  %v194 = vld [vmem:[%s0 + $0x2cc] sm:$0xf]
  %v195 = vld [vmem:[%s0 + $0x2d0] sm:$0xf]
  %v196 = vld [vmem:[%s0 + $0x2d4] sm:$0xf]
  %v197 = vld [vmem:[%s0 + $0x2d8] sm:$0xf]
  %v198 = vld [vmem:[%s0 + $0x2dc] sm:$0xf]
  %v199 = vld [vmem:[%s0 + $0x2e0] sm:$0xf]
  %v200 = vld [vmem:[%s0 + $0x2e4] sm:$0xf]
  %v201 = vld [vmem:[%s0 + $0x2e8] sm:$0xf]
  %v202 = vld [vmem:[%s0 + $0x2ec] sm:$0xf]
  %v203 = vld [vmem:[%s0 + $0x2f0] sm:$0xf]
  %v204 = vld [vmem:[%s0 + $0x2f4] sm:$0xf]
  %v205 = vld [vmem:[%s0 + $0x2f8] sm:$0xf]
  %v206 = vld [vmem:[%s0 + $0x2fc] sm:$0xf]
  %v207 = vld [vmem:[%s0 + $0x300] sm:$0xf]
  %v208 = vld [vmem:[%s0 + $0x304] sm:$0xf]
  %v209 = vld [vmem:[%s0 + $0x308] sm:$0xf]
  %v210 = vld [vmem:[%s0 + $0x30c] sm:$0xf]
  %v211 = vld [vmem:[%s1] sm:$0xf]
  %v212 = vld [vmem:[%s1 + $0x4] sm:$0xf]
  %v213 = vld [vmem:[%s1 + $0x8] sm:$0xf]
  %v214 = vld [vmem:[%s1 + $0xc] sm:$0x1]
  %v411 = vunpack.c.l.b16 %v15
  %v412 = vunpack.c.l.b16 %v16
  %v413 = vunpack.c.l.b16 %v17
  %v414 = vunpack.c.l.b16 %v18
  %v415 = vunpack.c.l.b16 %v19
  %v416 = vunpack.c.l.b16 %v20
  %v417 = vunpack.c.l.b16 %v21
  %v418 = vunpack.c.l.b16 %v22
  %v419 = vunpack.c.l.b16 %v23
  %v420 = vunpack.c.l.b16 %v24
  %v421 = vunpack.c.l.b16 %v25
  %v422 = vunpack.c.l.b16 %v26
  %v423 = vunpack.c.l.b16 %v27
  %v424 = vunpack.c.l.b16 %v28
  %v425 = vunpack.c.l.b16 %v29
  %v426 = vunpack.c.l.b16 %v30
  %v427 = vunpack.c.l.b16 %v31
  %v428 = vunpack.c.l.b16 %v32
  %v429 = vunpack.c.l.b16 %v33
  %v430 = vunpack.c.l.b16 %v34
  %v431 = vunpack.c.l.b16 %v35
  %v432 = vunpack.c.l.b16 %v36
  %v433 = vunpack.c.l.b16 %v37
  %v434 = vunpack.c.l.b16 %v38
  %v435 = vunpack.c.l.b16 %v39
  %v436 = vunpack.c.l.b16 %v40
  %v437 = vunpack.c.l.b16 %v41
  %v438 = vunpack.c.l.b16 %v42
  %v439 = vunpack.c.l.b16 %v43
  %v440 = vunpack.c.l.b16 %v44
  %v441 = vunpack.c.l.b16 %v45
  %v442 = vunpack.c.l.b16 %v46
  %v443 = vunpack.c.l.b16 %v47
  %v444 = vunpack.c.l.b16 %v48
  %v445 = vunpack.c.l.b16 %v49
  %v446 = vunpack.c.l.b16 %v50
  %v447 = vunpack.c.l.b16 %v51
  %v448 = vunpack.c.l.b16 %v52
  %v449 = vunpack.c.l.b16 %v53
  %v450 = vunpack.c.l.b16 %v54
  %v451 = vunpack.c.l.b16 %v55
  %v452 = vunpack.c.l.b16 %v56
  %v453 = vunpack.c.l.b16 %v57
  %v454 = vunpack.c.l.b16 %v58
  %v455 = vunpack.c.l.b16 %v59
  %v456 = vunpack.c.l.b16 %v60
  %v457 = vunpack.c.l.b16 %v61
  %v458 = vunpack.c.l.b16 %v62
  %v459 = vunpack.c.l.b16 %v63
  %v460 = vunpack.c.l.b16 %v64
  %v461 = vunpack.c.l.b16 %v65
  %v462 = vunpack.c.l.b16 %v66
  %v463 = vunpack.c.l.b16 %v67
  %v464 = vunpack.c.l.b16 %v68
  %v465 = vunpack.c.l.b16 %v69
  %v466 = vunpack.c.l.b16 %v70
  %v467 = vunpack.c.l.b16 %v71
  %v468 = vunpack.c.l.b16 %v72
  %v469 = vunpack.c.l.b16 %v73
  %v470 = vunpack.c.l.b16 %v74
  %v471 = vunpack.c.l.b16 %v75
  %v472 = vunpack.c.l.b16 %v76
  %v473 = vunpack.c.l.b16 %v77
  %v474 = vunpack.c.l.b16 %v78
  %v475 = vunpack.c.l.b16 %v79
  %v476 = vunpack.c.l.b16 %v80
  %v477 = vunpack.c.l.b16 %v81
  %v478 = vunpack.c.l.b16 %v82
  %v479 = vunpack.c.l.b16 %v83
  %v480 = vunpack.c.l.b16 %v84
  %v481 = vunpack.c.l.b16 %v85
  %v482 = vunpack.c.l.b16 %v86
  %v483 = vunpack.c.l.b16 %v87
  %v484 = vunpack.c.l.b16 %v88
  %v485 = vunpack.c.l.b16 %v89
  %v486 = vunpack.c.l.b16 %v90
  %v487 = vunpack.c.l.b16 %v91
  %v488 = vunpack.c.l.b16 %v92
  %v489 = vunpack.c.l.b16 %v93
  %v490 = vunpack.c.l.b16 %v94
  %v491 = vunpack.c.l.b16 %v95
  %v492 = vunpack.c.l.b16 %v96
  %v493 = vunpack.c.l.b16 %v97
  %v494 = vunpack.c.l.b16 %v98
  %v495 = vunpack.c.l.b16 %v99
  %v496 = vunpack.c.l.b16 %v100
  %v497 = vunpack.c.l.b16 %v101
  %v498 = vunpack.c.l.b16 %v102
  %v499 = vunpack.c.l.b16 %v103
  %v500 = vunpack.c.l.b16 %v104
  %v501 = vunpack.c.l.b16 %v105
  %v502 = vunpack.c.l.b16 %v106
  %v503 = vunpack.c.l.b16 %v107
  %v504 = vunpack.c.l.b16 %v108
  %v505 = vunpack.c.l.b16 %v109
  %v506 = vunpack.c.l.b16 %v110
  %v507 = vunpack.c.l.b16 %v111
  %v508 = vunpack.c.l.b16 %v112
  %v509 = vunpack.c.l.b16 %v113
  %v510 = vunpack.c.l.b16 %v114
  %v511 = vunpack.c.l.b16 %v115
  %v512 = vunpack.c.l.b16 %v116
  %v513 = vunpack.c.l.b16 %v117
  %v514 = vunpack.c.l.b16 %v118
  %v515 = vunpack.c.l.b16 %v119
  %v516 = vunpack.c.l.b16 %v120
  %v517 = vunpack.c.l.b16 %v121
  %v518 = vunpack.c.l.b16 %v122
  %v519 = vunpack.c.l.b16 %v123
  %v520 = vunpack.c.l.b16 %v124
  %v521 = vunpack.c.l.b16 %v125
  %v522 = vunpack.c.l.b16 %v126
  %v523 = vunpack.c.l.b16 %v127
  %v524 = vunpack.c.l.b16 %v128
  %v525 = vunpack.c.l.b16 %v129
  %v526 = vunpack.c.l.b16 %v130
  %v527 = vunpack.c.l.b16 %v131
  %v528 = vunpack.c.l.b16 %v132
  %v529 = vunpack.c.l.b16 %v133
  %v530 = vunpack.c.l.b16 %v134
  %v531 = vunpack.c.l.b16 %v135
  %v532 = vunpack.c.l.b16 %v136
  %v533 = vunpack.c.l.b16 %v137
  %v534 = vunpack.c.l.b16 %v138
  %v535 = vunpack.c.l.b16 %v139
  %v536 = vunpack.c.l.b16 %v140
  %v537 = vunpack.c.l.b16 %v141
  %v538 = vunpack.c.l.b16 %v142
  %v539 = vunpack.c.l.b16 %v143
  %v540 = vunpack.c.l.b16 %v144
  %v541 = vunpack.c.l.b16 %v145
  %v542 = vunpack.c.l.b16 %v146
  %v543 = vunpack.c.l.b16 %v147
  %v544 = vunpack.c.l.b16 %v148
  %v545 = vunpack.c.l.b16 %v149
  %v546 = vunpack.c.l.b16 %v150
  %v547 = vunpack.c.l.b16 %v151
  %v548 = vunpack.c.l.b16 %v152
  %v549 = vunpack.c.l.b16 %v153
  %v550 = vunpack.c.l.b16 %v154
  %v551 = vunpack.c.l.b16 %v155
  %v552 = vunpack.c.l.b16 %v156
  %v553 = vunpack.c.l.b16 %v157
  %v554 = vunpack.c.l.b16 %v158
  %v555 = vunpack.c.l.b16 %v159
  %v556 = vunpack.c.l.b16 %v160
  %v557 = vunpack.c.l.b16 %v161
  %v558 = vunpack.c.l.b16 %v162
  %v559 = vunpack.c.l.b16 %v163
  %v560 = vunpack.c.l.b16 %v164
  %v561 = vunpack.c.l.b16 %v165
  %v562 = vunpack.c.l.b16 %v166
  %v563 = vunpack.c.l.b16 %v167
  %v564 = vunpack.c.l.b16 %v168
  %v565 = vunpack.c.l.b16 %v169
  %v566 = vunpack.c.l.b16 %v170
  %v567 = vunpack.c.l.b16 %v171
  %v568 = vunpack.c.l.b16 %v172
  %v569 = vunpack.c.l.b16 %v173
  %v570 = vunpack.c.l.b16 %v174
  %v571 = vunpack.c.l.b16 %v175
  %v572 = vunpack.c.l.b16 %v176
  %v573 = vunpack.c.l.b16 %v177
  %v574 = vunpack.c.l.b16 %v178
  %v575 = vunpack.c.l.b16 %v179
  %v576 = vunpack.c.l.b16 %v180
  %v577 = vunpack.c.l.b16 %v181
  %v578 = vunpack.c.l.b16 %v182
  %v579 = vunpack.c.l.b16 %v183
  %v580 = vunpack.c.l.b16 %v184
  %v581 = vunpack.c.l.b16 %v185
  %v582 = vunpack.c.l.b16 %v186
  %v583 = vunpack.c.l.b16 %v187
  %v584 = vunpack.c.l.b16 %v188
  %v585 = vunpack.c.l.b16 %v189
  %v586 = vunpack.c.l.b16 %v190
  %v587 = vunpack.c.l.b16 %v191
  %v588 = vunpack.c.l.b16 %v192
  %v589 = vunpack.c.l.b16 %v193
  %v590 = vunpack.c.l.b16 %v194
  %v591 = vunpack.c.l.b16 %v195
  %v592 = vunpack.c.l.b16 %v196
  %v593 = vunpack.c.l.b16 %v197
  %v594 = vunpack.c.l.b16 %v198
  %v595 = vunpack.c.l.b16 %v199
  %v596 = vunpack.c.l.b16 %v200
  %v597 = vunpack.c.l.b16 %v201
  %v598 = vunpack.c.l.b16 %v202
  %v599 = vunpack.c.l.b16 %v203
  %v600 = vunpack.c.l.b16 %v204
  %v601 = vunpack.c.l.b16 %v205
  %v602 = vunpack.c.l.b16 %v206
  %v603 = vunpack.c.l.b16 %v207
  %v604 = vunpack.c.l.b16 %v208
  %v605 = vunpack.c.l.b16 %v209
  %v606 = vunpack.c.l.b16 %v210
  %v607 = vpack.c.b16 %v412, %v411
  %v608 = vpack.c.b16 %v414, %v413
  %v609 = vpack.c.b16 %v416, %v415
  %v610 = vpack.c.b16 %v418, %v417
  %v611 = vpack.c.b16 %v420, %v419
  %v612 = vpack.c.b16 %v422, %v421
  %v613 = vpack.c.b16 %v424, %v423
  %v614 = vpack.c.b16 %v426, %v425
  %v615 = vpack.c.b16 %v428, %v427
  %v616 = vpack.c.b16 %v430, %v429
  %v617 = vpack.c.b16 %v432, %v431
  %v618 = vpack.c.b16 %v434, %v433
  %v619 = vpack.c.b16 %v436, %v435
  %v620 = vpack.c.b16 %v438, %v437
  %v621 = vpack.c.b16 %v440, %v439
  %v622 = vpack.c.b16 %v442, %v441
  %v623 = vpack.c.b16 %v444, %v443
  %v624 = vpack.c.b16 %v446, %v445
  %v625 = vpack.c.b16 %v448, %v447
  %v626 = vpack.c.b16 %v450, %v449
  %v627 = vpack.c.b16 %v452, %v451
  %v628 = vpack.c.b16 %v454, %v453
  %v629 = vpack.c.b16 %v456, %v455
  %v630 = vpack.c.b16 %v458, %v457
  %v631 = vpack.c.b16 %v460, %v459
  %v632 = vpack.c.b16 %v462, %v461
  %v633 = vpack.c.b16 %v464, %v463
  %v634 = vpack.c.b16 %v466, %v465
  %v635 = vpack.c.b16 %v468, %v467
  %v636 = vpack.c.b16 %v470, %v469
  %v637 = vpack.c.b16 %v472, %v471
  %v638 = vpack.c.b16 %v474, %v473
  %v639 = vpack.c.b16 %v476, %v475
  %v640 = vpack.c.b16 %v478, %v477
  %v641 = vpack.c.b16 %v480, %v479
  %v642 = vpack.c.b16 %v482, %v481
  %v643 = vpack.c.b16 %v484, %v483
  %v644 = vpack.c.b16 %v486, %v485
  %v645 = vpack.c.b16 %v488, %v487
  %v646 = vpack.c.b16 %v490, %v489
  %v647 = vpack.c.b16 %v492, %v491
  %v648 = vpack.c.b16 %v494, %v493
  %v649 = vpack.c.b16 %v496, %v495
  %v650 = vpack.c.b16 %v498, %v497
  %v651 = vpack.c.b16 %v500, %v499
  %v652 = vpack.c.b16 %v502, %v501
  %v653 = vpack.c.b16 %v504, %v503
  %v654 = vpack.c.b16 %v506, %v505
  %v655 = vpack.c.b16 %v508, %v507
  %v656 = vpack.c.b16 %v510, %v509
  %v657 = vpack.c.b16 %v512, %v511
  %v658 = vpack.c.b16 %v514, %v513
  %v659 = vpack.c.b16 %v516, %v515
  %v660 = vpack.c.b16 %v518, %v517
  %v661 = vpack.c.b16 %v520, %v519
  %v662 = vpack.c.b16 %v522, %v521
  %v663 = vpack.c.b16 %v524, %v523
  %v664 = vpack.c.b16 %v526, %v525
  %v665 = vpack.c.b16 %v528, %v527
  %v666 = vpack.c.b16 %v530, %v529
  %v667 = vpack.c.b16 %v532, %v531
  %v668 = vpack.c.b16 %v534, %v533
  %v669 = vpack.c.b16 %v536, %v535
  %v670 = vpack.c.b16 %v538, %v537
  %v671 = vpack.c.b16 %v540, %v539
  %v672 = vpack.c.b16 %v542, %v541
  %v673 = vpack.c.b16 %v544, %v543
  %v674 = vpack.c.b16 %v546, %v545
  %v675 = vpack.c.b16 %v548, %v547
  %v676 = vpack.c.b16 %v550, %v549
  %v677 = vpack.c.b16 %v552, %v551
  %v678 = vpack.c.b16 %v554, %v553
  %v679 = vpack.c.b16 %v556, %v555
  %v680 = vpack.c.b16 %v558, %v557
  %v681 = vpack.c.b16 %v560, %v559
  %v682 = vpack.c.b16 %v562, %v561
  %v683 = vpack.c.b16 %v564, %v563
  %v684 = vpack.c.b16 %v566, %v565
  %v685 = vpack.c.b16 %v568, %v567
  %v686 = vpack.c.b16 %v570, %v569
  %v687 = vpack.c.b16 %v572, %v571
  %v688 = vpack.c.b16 %v574, %v573
  %v689 = vpack.c.b16 %v576, %v575
  %v690 = vpack.c.b16 %v578, %v577
  %v691 = vpack.c.b16 %v580, %v579
  %v692 = vpack.c.b16 %v582, %v581
  %v693 = vpack.c.b16 %v584, %v583
  %v694 = vpack.c.b16 %v586, %v585
  %v695 = vpack.c.b16 %v588, %v587
  %v696 = vpack.c.b16 %v590, %v589
  %v697 = vpack.c.b16 %v592, %v591
  %v698 = vpack.c.b16 %v594, %v593
  %v699 = vpack.c.b16 %v596, %v595
  %v700 = vpack.c.b16 %v598, %v597
  %v701 = vpack.c.b16 %v600, %v599
  %v702 = vpack.c.b16 %v602, %v601
  %v703 = vpack.c.b16 %v604, %v603
  %v704 = vpack.c.b16 %v606, %v605
  %v709 = vunpack.c.l.b16 %v211
  %v710 = vunpack.c.l.b16 %v212
  %v711 = vunpack.c.l.b16 %v213
  %v712 = vunpack.c.l.b16 %v214
  %v713 = vpack.c.b16 %v710, %v709
  %v714 = vpack.c.b16 %v712, %v711
  %vm716 = vcmask 203776
  %v718 = vsel %vm716, %v607, 0
  %v721 = vsel %vm716, %v608, 0
  %v724 = vsel %vm716, %v609, 0
  %v727 = vsel %vm716, %v610, 0
  %v730 = vsel %vm716, %v611, 0
  %v733 = vsel %vm716, %v612, 0
  %v736 = vsel %vm716, %v613, 0
  %v739 = vsel %vm716, %v614, 0
  %v742 = vsel %vm716, %v615, 0
  %v745 = vsel %vm716, %v616, 0
  %v748 = vsel %vm716, %v617, 0
  %v751 = vsel %vm716, %v618, 0
  %v754 = vsel %vm716, %v619, 0
  %v757 = vsel %vm716, %v620, 0
  %v760 = vsel %vm716, %v621, 0
  %v763 = vsel %vm716, %v622, 0
  %v766 = vsel %vm716, %v623, 0
  %v769 = vsel %vm716, %v624, 0
  %v772 = vsel %vm716, %v625, 0
  %v775 = vsel %vm716, %v626, 0
  %v778 = vsel %vm716, %v627, 0
  %v781 = vsel %vm716, %v628, 0
  %v784 = vsel %vm716, %v629, 0
  %v787 = vsel %vm716, %v630, 0
  %v790 = vsel %vm716, %v631, 0
  %v793 = vsel %vm716, %v632, 0
  %v796 = vsel %vm716, %v633, 0
  %v799 = vsel %vm716, %v634, 0
  %v802 = vsel %vm716, %v635, 0
  %v805 = vsel %vm716, %v636, 0
  %v808 = vsel %vm716, %v637, 0
  %v811 = vsel %vm716, %v638, 0
  %v814 = vsel %vm716, %v639, 0
  %v817 = vsel %vm716, %v640, 0
  %v820 = vsel %vm716, %v641, 0
  %v823 = vsel %vm716, %v642, 0
  %v826 = vsel %vm716, %v643, 0
  %v829 = vsel %vm716, %v644, 0
  %v832 = vsel %vm716, %v645, 0
  %v835 = vsel %vm716, %v646, 0
  %v838 = vsel %vm716, %v647, 0
  %v841 = vsel %vm716, %v648, 0
  %v844 = vsel %vm716, %v649, 0
  %v847 = vsel %vm716, %v650, 0
  %v850 = vsel %vm716, %v651, 0
  %v853 = vsel %vm716, %v652, 0
  %v856 = vsel %vm716, %v653, 0
  %v859 = vsel %vm716, %v654, 0
  %v862 = vsel %vm716, %v655, 0
  %v865 = vsel %vm716, %v656, 0
  %v868 = vsel %vm716, %v657, 0
  %v871 = vsel %vm716, %v658, 0
  %v874 = vsel %vm716, %v659, 0
  %v877 = vsel %vm716, %v660, 0
  %v880 = vsel %vm716, %v661, 0
  %v883 = vsel %vm716, %v662, 0
  %v886 = vsel %vm716, %v663, 0
  %v889 = vsel %vm716, %v664, 0
  %v892 = vsel %vm716, %v665, 0
  %v895 = vsel %vm716, %v666, 0
  %v898 = vsel %vm716, %v667, 0
  %v901 = vsel %vm716, %v668, 0
  %v904 = vsel %vm716, %v669, 0
  %v907 = vsel %vm716, %v670, 0
  %v910 = vsel %vm716, %v671, 0
  %v913 = vsel %vm716, %v672, 0
  %v916 = vsel %vm716, %v673, 0
  %v919 = vsel %vm716, %v674, 0
  %v922 = vsel %vm716, %v675, 0
  %v925 = vsel %vm716, %v676, 0
  %v928 = vsel %vm716, %v677, 0
  %v931 = vsel %vm716, %v678, 0
  %v934 = vsel %vm716, %v679, 0
  %v937 = vsel %vm716, %v680, 0
  %v940 = vsel %vm716, %v681, 0
  %v943 = vsel %vm716, %v682, 0
  %v946 = vsel %vm716, %v683, 0
  %v949 = vsel %vm716, %v684, 0
  %v952 = vsel %vm716, %v685, 0
  %v955 = vsel %vm716, %v686, 0
  %v958 = vsel %vm716, %v687, 0
  %v961 = vsel %vm716, %v688, 0
  %v964 = vsel %vm716, %v689, 0
  %v967 = vsel %vm716, %v690, 0
  %v970 = vsel %vm716, %v691, 0
  %v973 = vsel %vm716, %v692, 0
  %v976 = vsel %vm716, %v693, 0
  %v979 = vsel %vm716, %v694, 0
  %v982 = vsel %vm716, %v695, 0
  %v985 = vsel %vm716, %v696, 0
  %v988 = vsel %vm716, %v697, 0
  %v991 = vsel %vm716, %v698, 0
  %v994 = vsel %vm716, %v699, 0
  %v997 = vsel %vm716, %v700, 0
  %v1000 = vsel %vm716, %v701, 0
  %v1003 = vsel %vm716, %v702, 0
  %v1006 = vsel %vm716, %v703, 0
  %v1009 = vsel %vm716, %v704, 0
  %vm1011 = vcmask 1043456
  %vm1012 = vcmask 1044480
  %v1013 = vsel %vm1011, 4294967295, 65535
  %v1014 = vsel %vm1012, %v1013, 0
  %v1016 = vand.u32 %v714, %v1014
  %1018 = vmatprep.subr.bf16.mxu0 0
  %1019 = vmatpush1.bf16.msra.mxu0 %v713
  %1020 = vmatprep.subr.bf16.mxu0 0
  %1021 = vmatpush1.bf16.msra.mxu0 %v1016
  %1022 = vmatprep.subr.bf16.mxu0 0
  %1023 = vmatpush1.bf16.msra.mxu0 0
  %1024 = vmatprep.subr.bf16.mxu0 0
  %1025 = vmatpush1.bf16.msra.mxu0 0
  %1026 = vmatprep.subr.bf16.mxu0 0
  %1027 = vmatpush1.bf16.msra.mxu0 0
  %1028 = vmatprep.subr.bf16.mxu0 0
  %1029 = vmatpush1.bf16.msra.mxu0 0
  %1030 = vmatprep.subr.bf16.mxu0 0
  %1031 = vmatpush1.bf16.msra.mxu0 0
  %1032 = vmatprep.subr.bf16.mxu0 0
  %1033 = vmatpush1.bf16.msra.mxu0 0
  %1034 = vmatprep.subr.bf16.mxu0 0
  %1035 = vmatpush1.bf16.msra.mxu0 0
  %1036 = vmatprep.subr.bf16.mxu0 0
  %1037 = vmatpush1.bf16.msra.mxu0 0
  %1038 = vmatprep.subr.bf16.mxu0 0
  %1039 = vmatpush1.bf16.msra.mxu0 0
  %1040 = vmatprep.subr.bf16.mxu0 0
  %1041 = vmatpush1.bf16.msra.mxu0 0
  %1042 = vmatprep.subr.bf16.mxu0 0
  %1043 = vmatpush1.bf16.msra.mxu0 0
  %1044 = vmatprep.subr.bf16.mxu0 0
  %1045 = vmatpush1.bf16.msra.mxu0 0
  %1046 = vmatprep.subr.bf16.mxu0 0
  %1047 = vmatpush1.bf16.msra.mxu0 0
  %1048 = vmatprep.subr.bf16.mxu0 0
  %1049 = vmatpush1.bf16.msra.mxu0 0
  %1050 = vmatprep.mubr.bf16.mxu0 0
  %1051 = vmatmul.mubr.bf16.gmra.mrb[0].mxu0 %v718
  %v1052 = vpop.f32.mrb[0].mxu0
  %v1053 = vadd.f32 0.0, %v1052
  %v1054 = vpop.f32.mrb[0].mxu0
  %v1055 = vpop.f32.mrb[0].mxu0
  %v1056 = vadd.f32 0.0, %v1055
  %v1057 = vpop.f32.mrb[0].mxu0
  %1058 = vmatprep.mubr.bf16.mxu0 0
  %1059 = vmatmul.mubr.bf16.gmra.mrb[0].mxu0 %v721
  %v1060 = vpop.f32.mrb[0].mxu0
  %v1061 = vadd.f32 0.0, %v1060
  %v1062 = vpop.f32.mrb[0].mxu0
  %v1063 = vpop.f32.mrb[0].mxu0
  %v1064 = vadd.f32 0.0, %v1063
  %v1065 = vpop.f32.mrb[0].mxu0
  %1066 = vmatprep.mubr.bf16.mxu0 0
  %1067 = vmatmul.mubr.bf16.gmra.mrb[0].mxu0 %v724
  %v1068 = vpop.f32.mrb[0].mxu0
  %v1069 = vadd.f32 0.0, %v1068
  %v1070 = vpop.f32.mrb[0].mxu0
  %v1071 = vpop.f32.mrb[0].mxu0
  %v1072 = vadd.f32 0.0, %v1071
  %v1073 = vpop.f32.mrb[0].mxu0
  %1074 = vmatprep.mubr.bf16.mxu0 0
  %1075 = vmatmul.mubr.bf16.gmra.mrb[0].mxu0 %v727
  %v1076 = vpop.f32.mrb[0].mxu0
  %v1077 = vadd.f32 0.0, %v1076
  %v1078 = vpop.f32.mrb[0].mxu0
  %v1079 = vpop.f32.mrb[0].mxu0
  %v1080 = vadd.f32 0.0, %v1079
  %v1081 = vpop.f32.mrb[0].mxu0
  %1082 = vmatprep.mubr.bf16.mxu0 0
  %1083 = vmatmul.mubr.bf16.gmra.mrb[0].mxu0 %v730
  %v1084 = vpop.f32.mrb[0].mxu0
  %v1085 = vadd.f32 0.0, %v1084
  %v1086 = vpop.f32.mrb[0].mxu0
  %v1087 = vpop.f32.mrb[0].mxu0
  %v1088 = vadd.f32 0.0, %v1087
  %v1089 = vpop.f32.mrb[0].mxu0
  %1090 = vmatprep.mubr.bf16.mxu0 0
  %1091 = vmatmul.mubr.bf16.gmra.mrb[0].mxu0 %v733
  %v1092 = vpop.f32.mrb[0].mxu0
  %v1093 = vadd.f32 0.0, %v1092
  %v1094 = vpop.f32.mrb[0].mxu0
  %v1095 = vpop.f32.mrb[0].mxu0
  %v1096 = vadd.f32 0.0, %v1095
  %v1097 = vpop.f32.mrb[0].mxu0
  %1098 = vmatprep.mubr.bf16.mxu0 0
  %1099 = vmatmul.mubr.bf16.gmra.mrb[0].mxu0 %v736
  %v1100 = vpop.f32.mrb[0].mxu0
  %v1101 = vadd.f32 0.0, %v1100
  %v1102 = vpop.f32.mrb[0].mxu0
  %v1103 = vpop.f32.mrb[0].mxu0
  %v1104 = vadd.f32 0.0, %v1103
  %v1105 = vpop.f32.mrb[0].mxu0
  %1106 = vmatprep.mubr.bf16.mxu0 0
  %1107 = vmatmul.mubr.bf16.gmra.mrb[0].mxu0 %v739
  %v1108 = vpop.f32.mrb[0].mxu0
  %v1109 = vadd.f32 0.0, %v1108
  %v1110 = vpop.f32.mrb[0].mxu0
  %v1111 = vpop.f32.mrb[0].mxu0
  %v1112 = vadd.f32 0.0, %v1111
  %v1113 = vpop.f32.mrb[0].mxu0
  %1114 = vmatprep.mubr.bf16.mxu0 0
  %1115 = vmatmul.mubr.bf16.gmra.mrb[0].mxu0 %v742
  %v1116 = vpop.f32.mrb[0].mxu0
  %v1117 = vadd.f32 0.0, %v1116
  %v1118 = vpop.f32.mrb[0].mxu0
  %v1119 = vpop.f32.mrb[0].mxu0
  %v1120 = vadd.f32 0.0, %v1119
  %v1121 = vpop.f32.mrb[0].mxu0
  %1122 = vmatprep.mubr.bf16.mxu0 0
  %1123 = vmatmul.mubr.bf16.gmra.mrb[0].mxu0 %v745
  %v1124 = vpop.f32.mrb[0].mxu0
  %v1125 = vadd.f32 0.0, %v1124
  %v1126 = vpop.f32.mrb[0].mxu0
  %v1127 = vpop.f32.mrb[0].mxu0
  %v1128 = vadd.f32 0.0, %v1127
  %v1129 = vpop.f32.mrb[0].mxu0
  %1130 = vmatprep.mubr.bf16.mxu0 0
  %1131 = vmatmul.mubr.bf16.gmra.mrb[0].mxu0 %v748
  %v1132 = vpop.f32.mrb[0].mxu0
  %v1133 = vadd.f32 0.0, %v1132
  %v1134 = vpop.f32.mrb[0].mxu0
  %v1135 = vpop.f32.mrb[0].mxu0
  %v1136 = vadd.f32 0.0, %v1135
  %v1137 = vpop.f32.mrb[0].mxu0
  %1138 = vmatprep.mubr.bf16.mxu0 0
  %1139 = vmatmul.mubr.bf16.gmra.mrb[0].mxu0 %v751
  %v1140 = vpop.f32.mrb[0].mxu0
  %v1141 = vadd.f32 0.0, %v1140
  %v1142 = vpop.f32.mrb[0].mxu0
  %v1143 = vpop.f32.mrb[0].mxu0
  %v1144 = vadd.f32 0.0, %v1143
  %v1145 = vpop.f32.mrb[0].mxu0
  %1146 = vmatprep.mubr.bf16.mxu0 0
  %1147 = vmatmul.mubr.bf16.gmra.mrb[0].mxu0 %v754
  %v1148 = vpop.f32.mrb[0].mxu0
  %v1149 = vadd.f32 0.0, %v1148
  %v1150 = vpop.f32.mrb[0].mxu0
  %v1151 = vpop.f32.mrb[0].mxu0
  %v1152 = vadd.f32 0.0, %v1151
  %v1153 = vpop.f32.mrb[0].mxu0
  %1154 = vmatprep.mubr.bf16.mxu0 0
  %1155 = vmatmul.mubr.bf16.gmra.mrb[0].mxu0 %v757
  %v1156 = vpop.f32.mrb[0].mxu0
  %v1157 = vadd.f32 0.0, %v1156
  %v1158 = vpop.f32.mrb[0].mxu0
  %v1159 = vpop.f32.mrb[0].mxu0
  %v1160 = vadd.f32 0.0, %v1159
  %v1161 = vpop.f32.mrb[0].mxu0
  %1162 = vmatprep.mubr.bf16.mxu0 0
  %1163 = vmatmul.mubr.bf16.gmra.mrb[0].mxu0 %v760
  %v1164 = vpop.f32.mrb[0].mxu0
  %v1165 = vadd.f32 0.0, %v1164
  %v1166 = vpop.f32.mrb[0].mxu0
  %v1167 = vpop.f32.mrb[0].mxu0
  %v1168 = vadd.f32 0.0, %v1167
  %v1169 = vpop.f32.mrb[0].mxu0
  %1170 = vmatprep.mubr.bf16.mxu0 0
  %1171 = vmatmul.mubr.bf16.gmra.mrb[0].mxu0 %v763
  %v1172 = vpop.f32.mrb[0].mxu0
  %v1173 = vadd.f32 0.0, %v1172
  %v1174 = vpop.f32.mrb[0].mxu0
  %v1175 = vpop.f32.mrb[0].mxu0
  %v1176 = vadd.f32 0.0, %v1175
  %v1177 = vpop.f32.mrb[0].mxu0
  %1178 = vmatprep.mubr.bf16.mxu0 0
  %1179 = vmatmul.mubr.bf16.gmra.mrb[0].mxu0 %v766
  %v1180 = vpop.f32.mrb[0].mxu0
  %v1181 = vadd.f32 0.0, %v1180
  %v1182 = vpop.f32.mrb[0].mxu0
  %v1183 = vpop.f32.mrb[0].mxu0
  %v1184 = vadd.f32 0.0, %v1183
  %v1185 = vpop.f32.mrb[0].mxu0
  %1186 = vmatprep.mubr.bf16.mxu0 0
  %1187 = vmatmul.mubr.bf16.gmra.mrb[0].mxu0 %v769
  %v1188 = vpop.f32.mrb[0].mxu0
  %v1189 = vadd.f32 0.0, %v1188
  %v1190 = vpop.f32.mrb[0].mxu0
  %v1191 = vpop.f32.mrb[0].mxu0
  %v1192 = vadd.f32 0.0, %v1191
  %v1193 = vpop.f32.mrb[0].mxu0
  %1194 = vmatprep.mubr.bf16.mxu0 0
  %1195 = vmatmul.mubr.bf16.gmra.mrb[0].mxu0 %v772
  %v1196 = vpop.f32.mrb[0].mxu0
  %v1197 = vadd.f32 0.0, %v1196
  %v1198 = vpop.f32.mrb[0].mxu0
  %v1199 = vpop.f32.mrb[0].mxu0
  %v1200 = vadd.f32 0.0, %v1199
  %v1201 = vpop.f32.mrb[0].mxu0
  %1202 = vmatprep.mubr.bf16.mxu0 0
  %1203 = vmatmul.mubr.bf16.gmra.mrb[0].mxu0 %v775
  %v1204 = vpop.f32.mrb[0].mxu0
  %v1205 = vadd.f32 0.0, %v1204
  %v1206 = vpop.f32.mrb[0].mxu0
  %v1207 = vpop.f32.mrb[0].mxu0
  %v1208 = vadd.f32 0.0, %v1207
  %v1209 = vpop.f32.mrb[0].mxu0
  %1210 = vmatprep.mubr.bf16.mxu0 0
  %1211 = vmatmul.mubr.bf16.gmra.mrb[0].mxu0 %v778
  %v1212 = vpop.f32.mrb[0].mxu0
  %v1213 = vadd.f32 0.0, %v1212
  %v1214 = vpop.f32.mrb[0].mxu0
  %v1215 = vpop.f32.mrb[0].mxu0
  %v1216 = vadd.f32 0.0, %v1215
  %v1217 = vpop.f32.mrb[0].mxu0
  %1218 = vmatprep.mubr.bf16.mxu0 0
  %1219 = vmatmul.mubr.bf16.gmra.mrb[0].mxu0 %v781
  %v1220 = vpop.f32.mrb[0].mxu0
  %v1221 = vadd.f32 0.0, %v1220
  %v1222 = vpop.f32.mrb[0].mxu0
  %v1223 = vpop.f32.mrb[0].mxu0
  %v1224 = vadd.f32 0.0, %v1223
  %v1225 = vpop.f32.mrb[0].mxu0
  %1226 = vmatprep.mubr.bf16.mxu0 0
  %1227 = vmatmul.mubr.bf16.gmra.mrb[0].mxu0 %v784
  %v1228 = vpop.f32.mrb[0].mxu0
  %v1229 = vadd.f32 0.0, %v1228
  %v1230 = vpop.f32.mrb[0].mxu0
  %v1231 = vpop.f32.mrb[0].mxu0
  %v1232 = vadd.f32 0.0, %v1231
  %v1233 = vpop.f32.mrb[0].mxu0
  %1234 = vmatprep.mubr.bf16.mxu0 0
  %1235 = vmatmul.mubr.bf16.gmra.mrb[0].mxu0 %v787
  %v1236 = vpop.f32.mrb[0].mxu0
  %v1237 = vadd.f32 0.0, %v1236
  %v1238 = vpop.f32.mrb[0].mxu0
  %v1239 = vpop.f32.mrb[0].mxu0
  %v1240 = vadd.f32 0.0, %v1239
  %v1241 = vpop.f32.mrb[0].mxu0
  %1242 = vmatprep.mubr.bf16.mxu0 0
  %1243 = vmatmul.mubr.bf16.gmra.mrb[0].mxu0 %v790
  %v1244 = vpop.f32.mrb[0].mxu0
  %v1245 = vadd.f32 0.0, %v1244
  %v1246 = vpop.f32.mrb[0].mxu0
  %v1247 = vpop.f32.mrb[0].mxu0
  %v1248 = vadd.f32 0.0, %v1247
  %v1249 = vpop.f32.mrb[0].mxu0
  %1250 = vmatprep.mubr.bf16.mxu0 0
  %1251 = vmatmul.mubr.bf16.gmra.mrb[0].mxu0 %v793
  %v1252 = vpop.f32.mrb[0].mxu0
  %v1253 = vadd.f32 0.0, %v1252
  %v1254 = vpop.f32.mrb[0].mxu0
  %v1255 = vpop.f32.mrb[0].mxu0
  %v1256 = vadd.f32 0.0, %v1255
  %v1257 = vpop.f32.mrb[0].mxu0
  %1258 = vmatprep.mubr.bf16.mxu0 0
  %1259 = vmatmul.mubr.bf16.gmra.mrb[0].mxu0 %v796
  %v1260 = vpop.f32.mrb[0].mxu0
  %v1261 = vadd.f32 0.0, %v1260
  %v1262 = vpop.f32.mrb[0].mxu0
  %v1263 = vpop.f32.mrb[0].mxu0
  %v1264 = vadd.f32 0.0, %v1263
  %v1265 = vpop.f32.mrb[0].mxu0
  %1266 = vmatprep.mubr.bf16.mxu0 0
  %1267 = vmatmul.mubr.bf16.gmra.mrb[0].mxu0 %v799
  %v1268 = vpop.f32.mrb[0].mxu0
  %v1269 = vadd.f32 0.0, %v1268
  %v1270 = vpop.f32.mrb[0].mxu0
  %v1271 = vpop.f32.mrb[0].mxu0
  %v1272 = vadd.f32 0.0, %v1271
  %v1273 = vpop.f32.mrb[0].mxu0
  %1274 = vmatprep.mubr.bf16.mxu0 0
  %1275 = vmatmul.mubr.bf16.gmra.mrb[0].mxu0 %v802
  %v1276 = vpop.f32.mrb[0].mxu0
  %v1277 = vadd.f32 0.0, %v1276
  %v1278 = vpop.f32.mrb[0].mxu0
  %v1279 = vpop.f32.mrb[0].mxu0
  %v1280 = vadd.f32 0.0, %v1279
  %v1281 = vpop.f32.mrb[0].mxu0
  %1282 = vmatprep.mubr.bf16.mxu0 0
  %1283 = vmatmul.mubr.bf16.gmra.mrb[0].mxu0 %v805
  %v1284 = vpop.f32.mrb[0].mxu0
  %v1285 = vadd.f32 0.0, %v1284
  %v1286 = vpop.f32.mrb[0].mxu0
  %v1287 = vpop.f32.mrb[0].mxu0
  %v1288 = vadd.f32 0.0, %v1287
  %v1289 = vpop.f32.mrb[0].mxu0
  %1290 = vmatprep.mubr.bf16.mxu0 0
  %1291 = vmatmul.mubr.bf16.gmra.mrb[0].mxu0 %v808
  %v1292 = vpop.f32.mrb[0].mxu0
  %v1293 = vadd.f32 0.0, %v1292
  %v1294 = vpop.f32.mrb[0].mxu0
  %v1295 = vpop.f32.mrb[0].mxu0
  %v1296 = vadd.f32 0.0, %v1295
  %v1297 = vpop.f32.mrb[0].mxu0
  %1298 = vmatprep.mubr.bf16.mxu0 0
  %1299 = vmatmul.mubr.bf16.gmra.mrb[0].mxu0 %v811
  %v1300 = vpop.f32.mrb[0].mxu0
  %v1301 = vadd.f32 0.0, %v1300
  %v1302 = vpop.f32.mrb[0].mxu0
  %v1303 = vpop.f32.mrb[0].mxu0
  %v1304 = vadd.f32 0.0, %v1303
  %v1305 = vpop.f32.mrb[0].mxu0
  %1306 = vmatprep.mubr.bf16.mxu0 0
  %1307 = vmatmul.mubr.bf16.gmra.mrb[0].mxu0 %v814
  %v1308 = vpop.f32.mrb[0].mxu0
  %v1309 = vadd.f32 0.0, %v1308
  %v1310 = vpop.f32.mrb[0].mxu0
  %v1311 = vpop.f32.mrb[0].mxu0
  %v1312 = vadd.f32 0.0, %v1311
  %v1313 = vpop.f32.mrb[0].mxu0
  %1314 = vmatprep.mubr.bf16.mxu0 0
  %1315 = vmatmul.mubr.bf16.gmra.mrb[0].mxu0 %v817
  %v1316 = vpop.f32.mrb[0].mxu0
  %v1317 = vadd.f32 0.0, %v1316
  %v1318 = vpop.f32.mrb[0].mxu0
  %v1319 = vpop.f32.mrb[0].mxu0
  %v1320 = vadd.f32 0.0, %v1319
  %v1321 = vpop.f32.mrb[0].mxu0
  %1322 = vmatprep.mubr.bf16.mxu0 0
  %1323 = vmatmul.mubr.bf16.gmra.mrb[0].mxu0 %v820
  %v1324 = vpop.f32.mrb[0].mxu0
  %v1325 = vadd.f32 0.0, %v1324
  %v1326 = vpop.f32.mrb[0].mxu0
  %v1327 = vpop.f32.mrb[0].mxu0
  %v1328 = vadd.f32 0.0, %v1327
  %v1329 = vpop.f32.mrb[0].mxu0
  %1330 = vmatprep.mubr.bf16.mxu0 0
  %1331 = vmatmul.mubr.bf16.gmra.mrb[0].mxu0 %v823
  %v1332 = vpop.f32.mrb[0].mxu0
  %v1333 = vadd.f32 0.0, %v1332
  %v1334 = vpop.f32.mrb[0].mxu0
  %v1335 = vpop.f32.mrb[0].mxu0
  %v1336 = vadd.f32 0.0, %v1335
  %v1337 = vpop.f32.mrb[0].mxu0
  %1338 = vmatprep.mubr.bf16.mxu0 0
  %1339 = vmatmul.mubr.bf16.gmra.mrb[0].mxu0 %v826
  %v1340 = vpop.f32.mrb[0].mxu0
  %v1341 = vadd.f32 0.0, %v1340
  %v1342 = vpop.f32.mrb[0].mxu0
  %v1343 = vpop.f32.mrb[0].mxu0
  %v1344 = vadd.f32 0.0, %v1343
  %v1345 = vpop.f32.mrb[0].mxu0
  %1346 = vmatprep.mubr.bf16.mxu0 0
  %1347 = vmatmul.mubr.bf16.gmra.mrb[0].mxu0 %v829
  %v1348 = vpop.f32.mrb[0].mxu0
  %v1349 = vadd.f32 0.0, %v1348
  %v1350 = vpop.f32.mrb[0].mxu0
  %v1351 = vpop.f32.mrb[0].mxu0
  %v1352 = vadd.f32 0.0, %v1351
  %v1353 = vpop.f32.mrb[0].mxu0
  %1354 = vmatprep.mubr.bf16.mxu0 0
  %1355 = vmatmul.mubr.bf16.gmra.mrb[0].mxu0 %v832
  %v1356 = vpop.f32.mrb[0].mxu0
  %v1357 = vadd.f32 0.0, %v1356
  %v1358 = vpop.f32.mrb[0].mxu0
  %v1359 = vpop.f32.mrb[0].mxu0
  %v1360 = vadd.f32 0.0, %v1359
  %v1361 = vpop.f32.mrb[0].mxu0
  %1362 = vmatprep.mubr.bf16.mxu0 0
  %1363 = vmatmul.mubr.bf16.gmra.mrb[0].mxu0 %v835
  %v1364 = vpop.f32.mrb[0].mxu0
  %v1365 = vadd.f32 0.0, %v1364
  %v1366 = vpop.f32.mrb[0].mxu0
  %v1367 = vpop.f32.mrb[0].mxu0
  %v1368 = vadd.f32 0.0, %v1367
  %v1369 = vpop.f32.mrb[0].mxu0
  %1370 = vmatprep.mubr.bf16.mxu0 0
  %1371 = vmatmul.mubr.bf16.gmra.mrb[0].mxu0 %v838
  %v1372 = vpop.f32.mrb[0].mxu0
  %v1373 = vadd.f32 0.0, %v1372
  %v1374 = vpop.f32.mrb[0].mxu0
  %v1375 = vpop.f32.mrb[0].mxu0
  %v1376 = vadd.f32 0.0, %v1375
  %v1377 = vpop.f32.mrb[0].mxu0
  %1378 = vmatprep.mubr.bf16.mxu0 0
  %1379 = vmatmul.mubr.bf16.gmra.mrb[0].mxu0 %v841
  %v1380 = vpop.f32.mrb[0].mxu0
  %v1381 = vadd.f32 0.0, %v1380
  %v1382 = vpop.f32.mrb[0].mxu0
  %v1383 = vpop.f32.mrb[0].mxu0
  %v1384 = vadd.f32 0.0, %v1383
  %v1385 = vpop.f32.mrb[0].mxu0
  %1386 = vmatprep.mubr.bf16.mxu0 0
  %1387 = vmatmul.mubr.bf16.gmra.mrb[0].mxu0 %v844
  %v1388 = vpop.f32.mrb[0].mxu0
  %v1389 = vadd.f32 0.0, %v1388
  %v1390 = vpop.f32.mrb[0].mxu0
  %v1391 = vpop.f32.mrb[0].mxu0
  %v1392 = vadd.f32 0.0, %v1391
  %v1393 = vpop.f32.mrb[0].mxu0
  %1394 = vmatprep.mubr.bf16.mxu0 0
  %1395 = vmatmul.mubr.bf16.gmra.mrb[0].mxu0 %v847
  %v1396 = vpop.f32.mrb[0].mxu0
  %v1397 = vadd.f32 0.0, %v1396
  %v1398 = vpop.f32.mrb[0].mxu0
  %v1399 = vpop.f32.mrb[0].mxu0
  %v1400 = vadd.f32 0.0, %v1399
  %v1401 = vpop.f32.mrb[0].mxu0
  %1402 = vmatprep.mubr.bf16.mxu0 0
  %1403 = vmatmul.mubr.bf16.gmra.mrb[0].mxu0 %v850
  %v1404 = vpop.f32.mrb[0].mxu0
  %v1405 = vadd.f32 0.0, %v1404
  %v1406 = vpop.f32.mrb[0].mxu0
  %v1407 = vpop.f32.mrb[0].mxu0
  %v1408 = vadd.f32 0.0, %v1407
  %v1409 = vpop.f32.mrb[0].mxu0
  %1410 = vmatprep.mubr.bf16.mxu0 0
  %1411 = vmatmul.mubr.bf16.gmra.mrb[0].mxu0 %v853
  %v1412 = vpop.f32.mrb[0].mxu0
  %v1413 = vadd.f32 0.0, %v1412
  %v1414 = vpop.f32.mrb[0].mxu0
  %v1415 = vpop.f32.mrb[0].mxu0
  %v1416 = vadd.f32 0.0, %v1415
  %v1417 = vpop.f32.mrb[0].mxu0
  %1418 = vmatprep.mubr.bf16.mxu0 0
  %1419 = vmatmul.mubr.bf16.gmra.mrb[0].mxu0 %v856
  %v1420 = vpop.f32.mrb[0].mxu0
  %v1421 = vadd.f32 0.0, %v1420
  %v1422 = vpop.f32.mrb[0].mxu0
  %v1423 = vpop.f32.mrb[0].mxu0
  %v1424 = vadd.f32 0.0, %v1423
  %v1425 = vpop.f32.mrb[0].mxu0
  %1426 = vmatprep.mubr.bf16.mxu0 0
  %1427 = vmatmul.mubr.bf16.gmra.mrb[0].mxu0 %v859
  %v1428 = vpop.f32.mrb[0].mxu0
  %v1429 = vadd.f32 0.0, %v1428
  %v1430 = vpop.f32.mrb[0].mxu0
  %v1431 = vpop.f32.mrb[0].mxu0
  %v1432 = vadd.f32 0.0, %v1431
  %v1433 = vpop.f32.mrb[0].mxu0
  %1434 = vmatprep.mubr.bf16.mxu0 0
  %1435 = vmatmul.mubr.bf16.gmra.mrb[0].mxu0 %v862
  %v1436 = vpop.f32.mrb[0].mxu0
  %v1437 = vadd.f32 0.0, %v1436
  %v1438 = vpop.f32.mrb[0].mxu0
  %v1439 = vpop.f32.mrb[0].mxu0
  %v1440 = vadd.f32 0.0, %v1439
  %v1441 = vpop.f32.mrb[0].mxu0
  %1442 = vmatprep.mubr.bf16.mxu0 0
  %1443 = vmatmul.mubr.bf16.gmra.mrb[0].mxu0 %v865
  %v1444 = vpop.f32.mrb[0].mxu0
  %v1445 = vadd.f32 0.0, %v1444
  %v1446 = vpop.f32.mrb[0].mxu0
  %v1447 = vpop.f32.mrb[0].mxu0
  %v1448 = vadd.f32 0.0, %v1447
  %v1449 = vpop.f32.mrb[0].mxu0
  %1450 = vmatprep.mubr.bf16.mxu0 0
  %1451 = vmatmul.mubr.bf16.gmra.mrb[0].mxu0 %v868
  %v1452 = vpop.f32.mrb[0].mxu0
  %v1453 = vadd.f32 0.0, %v1452
  %v1454 = vpop.f32.mrb[0].mxu0
  %v1455 = vpop.f32.mrb[0].mxu0
  %v1456 = vadd.f32 0.0, %v1455
  %v1457 = vpop.f32.mrb[0].mxu0
  %1458 = vmatprep.mubr.bf16.mxu0 0
  %1459 = vmatmul.mubr.bf16.gmra.mrb[0].mxu0 %v871
  %v1460 = vpop.f32.mrb[0].mxu0
  %v1461 = vadd.f32 0.0, %v1460
  %v1462 = vpop.f32.mrb[0].mxu0
  %v1463 = vpop.f32.mrb[0].mxu0
  %v1464 = vadd.f32 0.0, %v1463
  %v1465 = vpop.f32.mrb[0].mxu0
  %1466 = vmatprep.mubr.bf16.mxu0 0
  %1467 = vmatmul.mubr.bf16.gmra.mrb[0].mxu0 %v874
  %v1468 = vpop.f32.mrb[0].mxu0
  %v1469 = vadd.f32 0.0, %v1468
  %v1470 = vpop.f32.mrb[0].mxu0
  %v1471 = vpop.f32.mrb[0].mxu0
  %v1472 = vadd.f32 0.0, %v1471
  %v1473 = vpop.f32.mrb[0].mxu0
  %1474 = vmatprep.mubr.bf16.mxu0 0
  %1475 = vmatmul.mubr.bf16.gmra.mrb[0].mxu0 %v877
  %v1476 = vpop.f32.mrb[0].mxu0
  %v1477 = vadd.f32 0.0, %v1476
  %v1478 = vpop.f32.mrb[0].mxu0
  %v1479 = vpop.f32.mrb[0].mxu0
  %v1480 = vadd.f32 0.0, %v1479
  %v1481 = vpop.f32.mrb[0].mxu0
  %1482 = vmatprep.mubr.bf16.mxu0 0
  %1483 = vmatmul.mubr.bf16.gmra.mrb[0].mxu0 %v880
  %v1484 = vpop.f32.mrb[0].mxu0
  %v1485 = vadd.f32 0.0, %v1484
  %v1486 = vpop.f32.mrb[0].mxu0
  %v1487 = vpop.f32.mrb[0].mxu0
  %v1488 = vadd.f32 0.0, %v1487
  %v1489 = vpop.f32.mrb[0].mxu0
  %1490 = vmatprep.mubr.bf16.mxu0 0
  %1491 = vmatmul.mubr.bf16.gmra.mrb[0].mxu0 %v883
  %v1492 = vpop.f32.mrb[0].mxu0
  %v1493 = vadd.f32 0.0, %v1492
  %v1494 = vpop.f32.mrb[0].mxu0
  %v1495 = vpop.f32.mrb[0].mxu0
  %v1496 = vadd.f32 0.0, %v1495
  %v1497 = vpop.f32.mrb[0].mxu0
  %1498 = vmatprep.mubr.bf16.mxu0 0
  %1499 = vmatmul.mubr.bf16.gmra.mrb[0].mxu0 %v886
  %v1500 = vpop.f32.mrb[0].mxu0
  %v1501 = vadd.f32 0.0, %v1500
  %v1502 = vpop.f32.mrb[0].mxu0
  %v1503 = vpop.f32.mrb[0].mxu0
  %v1504 = vadd.f32 0.0, %v1503
  %v1505 = vpop.f32.mrb[0].mxu0
  %1506 = vmatprep.mubr.bf16.mxu0 0
  %1507 = vmatmul.mubr.bf16.gmra.mrb[0].mxu0 %v889
  %v1508 = vpop.f32.mrb[0].mxu0
  %v1509 = vadd.f32 0.0, %v1508
  %v1510 = vpop.f32.mrb[0].mxu0
  %v1511 = vpop.f32.mrb[0].mxu0
  %v1512 = vadd.f32 0.0, %v1511
  %v1513 = vpop.f32.mrb[0].mxu0
  %1514 = vmatprep.mubr.bf16.mxu0 0
  %1515 = vmatmul.mubr.bf16.gmra.mrb[0].mxu0 %v892
  %v1516 = vpop.f32.mrb[0].mxu0
  %v1517 = vadd.f32 0.0, %v1516
  %v1518 = vpop.f32.mrb[0].mxu0
  %v1519 = vpop.f32.mrb[0].mxu0
  %v1520 = vadd.f32 0.0, %v1519
  %v1521 = vpop.f32.mrb[0].mxu0
  %1522 = vmatprep.mubr.bf16.mxu0 0
  %1523 = vmatmul.mubr.bf16.gmra.mrb[0].mxu0 %v895
  %v1524 = vpop.f32.mrb[0].mxu0
  %v1525 = vadd.f32 0.0, %v1524
  %v1526 = vpop.f32.mrb[0].mxu0
  %v1527 = vpop.f32.mrb[0].mxu0
  %v1528 = vadd.f32 0.0, %v1527
  %v1529 = vpop.f32.mrb[0].mxu0
  %1530 = vmatprep.mubr.bf16.mxu0 0
  %1531 = vmatmul.mubr.bf16.gmra.mrb[0].mxu0 %v898
  %v1532 = vpop.f32.mrb[0].mxu0
  %v1533 = vadd.f32 0.0, %v1532
  %v1534 = vpop.f32.mrb[0].mxu0
  %v1535 = vpop.f32.mrb[0].mxu0
  %v1536 = vadd.f32 0.0, %v1535
  %v1537 = vpop.f32.mrb[0].mxu0
  %1538 = vmatprep.mubr.bf16.mxu0 0
  %1539 = vmatmul.mubr.bf16.gmra.mrb[0].mxu0 %v901
  %v1540 = vpop.f32.mrb[0].mxu0
  %v1541 = vadd.f32 0.0, %v1540
  %v1542 = vpop.f32.mrb[0].mxu0
  %v1543 = vpop.f32.mrb[0].mxu0
  %v1544 = vadd.f32 0.0, %v1543
  %v1545 = vpop.f32.mrb[0].mxu0
  %1546 = vmatprep.mubr.bf16.mxu0 0
  %1547 = vmatmul.mubr.bf16.gmra.mrb[0].mxu0 %v904
  %v1548 = vpop.f32.mrb[0].mxu0
  %v1549 = vadd.f32 0.0, %v1548
  %v1550 = vpop.f32.mrb[0].mxu0
  %v1551 = vpop.f32.mrb[0].mxu0
  %v1552 = vadd.f32 0.0, %v1551
  %v1553 = vpop.f32.mrb[0].mxu0
  %1554 = vmatprep.mubr.bf16.mxu0 0
  %1555 = vmatmul.mubr.bf16.gmra.mrb[0].mxu0 %v907
  %v1556 = vpop.f32.mrb[0].mxu0
  %v1557 = vadd.f32 0.0, %v1556
  %v1558 = vpop.f32.mrb[0].mxu0
  %v1559 = vpop.f32.mrb[0].mxu0
  %v1560 = vadd.f32 0.0, %v1559
  %v1561 = vpop.f32.mrb[0].mxu0
  %1562 = vmatprep.mubr.bf16.mxu0 0
  %1563 = vmatmul.mubr.bf16.gmra.mrb[0].mxu0 %v910
  %v1564 = vpop.f32.mrb[0].mxu0
  %v1565 = vadd.f32 0.0, %v1564
  %v1566 = vpop.f32.mrb[0].mxu0
  %v1567 = vpop.f32.mrb[0].mxu0
  %v1568 = vadd.f32 0.0, %v1567
  %v1569 = vpop.f32.mrb[0].mxu0
  %1570 = vmatprep.mubr.bf16.mxu0 0
  %1571 = vmatmul.mubr.bf16.gmra.mrb[0].mxu0 %v913
  %v1572 = vpop.f32.mrb[0].mxu0
  %v1573 = vadd.f32 0.0, %v1572
  %v1574 = vpop.f32.mrb[0].mxu0
  %v1575 = vpop.f32.mrb[0].mxu0
  %v1576 = vadd.f32 0.0, %v1575
  %v1577 = vpop.f32.mrb[0].mxu0
  %1578 = vmatprep.mubr.bf16.mxu0 0
  %1579 = vmatmul.mubr.bf16.gmra.mrb[0].mxu0 %v916
  %v1580 = vpop.f32.mrb[0].mxu0
  %v1581 = vadd.f32 0.0, %v1580
  %v1582 = vpop.f32.mrb[0].mxu0
  %v1583 = vpop.f32.mrb[0].mxu0
  %v1584 = vadd.f32 0.0, %v1583
  %v1585 = vpop.f32.mrb[0].mxu0
  %1586 = vmatprep.mubr.bf16.mxu0 0
  %1587 = vmatmul.mubr.bf16.gmra.mrb[0].mxu0 %v919
  %v1588 = vpop.f32.mrb[0].mxu0
  %v1589 = vadd.f32 0.0, %v1588
  %v1590 = vpop.f32.mrb[0].mxu0
  %v1591 = vpop.f32.mrb[0].mxu0
  %v1592 = vadd.f32 0.0, %v1591
  %v1593 = vpop.f32.mrb[0].mxu0
  %1594 = vmatprep.mubr.bf16.mxu0 0
  %1595 = vmatmul.mubr.bf16.gmra.mrb[0].mxu0 %v922
  %v1596 = vpop.f32.mrb[0].mxu0
  %v1597 = vadd.f32 0.0, %v1596
  %v1598 = vpop.f32.mrb[0].mxu0
  %v1599 = vpop.f32.mrb[0].mxu0
  %v1600 = vadd.f32 0.0, %v1599
  %v1601 = vpop.f32.mrb[0].mxu0
  %1602 = vmatprep.mubr.bf16.mxu0 0
  %1603 = vmatmul.mubr.bf16.gmra.mrb[0].mxu0 %v925
  %v1604 = vpop.f32.mrb[0].mxu0
  %v1605 = vadd.f32 0.0, %v1604
  %v1606 = vpop.f32.mrb[0].mxu0
  %v1607 = vpop.f32.mrb[0].mxu0
  %v1608 = vadd.f32 0.0, %v1607
  %v1609 = vpop.f32.mrb[0].mxu0
  %1610 = vmatprep.mubr.bf16.mxu0 0
  %1611 = vmatmul.mubr.bf16.gmra.mrb[0].mxu0 %v928
  %v1612 = vpop.f32.mrb[0].mxu0
  %v1613 = vadd.f32 0.0, %v1612
  %v1614 = vpop.f32.mrb[0].mxu0
  %v1615 = vpop.f32.mrb[0].mxu0
  %v1616 = vadd.f32 0.0, %v1615
  %v1617 = vpop.f32.mrb[0].mxu0
  %1618 = vmatprep.mubr.bf16.mxu0 0
  %1619 = vmatmul.mubr.bf16.gmra.mrb[0].mxu0 %v931
  %v1620 = vpop.f32.mrb[0].mxu0
  %v1621 = vadd.f32 0.0, %v1620
  %v1622 = vpop.f32.mrb[0].mxu0
  %v1623 = vpop.f32.mrb[0].mxu0
  %v1624 = vadd.f32 0.0, %v1623
  %v1625 = vpop.f32.mrb[0].mxu0
  %1626 = vmatprep.mubr.bf16.mxu0 0
  %1627 = vmatmul.mubr.bf16.gmra.mrb[0].mxu0 %v934
  %v1628 = vpop.f32.mrb[0].mxu0
  %v1629 = vadd.f32 0.0, %v1628
  %v1630 = vpop.f32.mrb[0].mxu0
  %v1631 = vpop.f32.mrb[0].mxu0
  %v1632 = vadd.f32 0.0, %v1631
  %v1633 = vpop.f32.mrb[0].mxu0
  %1634 = vmatprep.mubr.bf16.mxu0 0
  %1635 = vmatmul.mubr.bf16.gmra.mrb[0].mxu0 %v937
  %v1636 = vpop.f32.mrb[0].mxu0
  %v1637 = vadd.f32 0.0, %v1636
  %v1638 = vpop.f32.mrb[0].mxu0
  %v1639 = vpop.f32.mrb[0].mxu0
  %v1640 = vadd.f32 0.0, %v1639
  %v1641 = vpop.f32.mrb[0].mxu0
  %1642 = vmatprep.mubr.bf16.mxu0 0
  %1643 = vmatmul.mubr.bf16.gmra.mrb[0].mxu0 %v940
  %v1644 = vpop.f32.mrb[0].mxu0
  %v1645 = vadd.f32 0.0, %v1644
  %v1646 = vpop.f32.mrb[0].mxu0
  %v1647 = vpop.f32.mrb[0].mxu0
  %v1648 = vadd.f32 0.0, %v1647
  %v1649 = vpop.f32.mrb[0].mxu0
  %1650 = vmatprep.mubr.bf16.mxu0 0
  %1651 = vmatmul.mubr.bf16.gmra.mrb[0].mxu0 %v943
  %v1652 = vpop.f32.mrb[0].mxu0
  %v1653 = vadd.f32 0.0, %v1652
  %v1654 = vpop.f32.mrb[0].mxu0
  %v1655 = vpop.f32.mrb[0].mxu0
  %v1656 = vadd.f32 0.0, %v1655
  %v1657 = vpop.f32.mrb[0].mxu0
  %1658 = vmatprep.mubr.bf16.mxu0 0
  %1659 = vmatmul.mubr.bf16.gmra.mrb[0].mxu0 %v946
  %v1660 = vpop.f32.mrb[0].mxu0
  %v1661 = vadd.f32 0.0, %v1660
  %v1662 = vpop.f32.mrb[0].mxu0
  %v1663 = vpop.f32.mrb[0].mxu0
  %v1664 = vadd.f32 0.0, %v1663
  %v1665 = vpop.f32.mrb[0].mxu0
  %1666 = vmatprep.mubr.bf16.mxu0 0
  %1667 = vmatmul.mubr.bf16.gmra.mrb[0].mxu0 %v949
  %v1668 = vpop.f32.mrb[0].mxu0
  %v1669 = vadd.f32 0.0, %v1668
  %v1670 = vpop.f32.mrb[0].mxu0
  %v1671 = vpop.f32.mrb[0].mxu0
  %v1672 = vadd.f32 0.0, %v1671
  %v1673 = vpop.f32.mrb[0].mxu0
  %1674 = vmatprep.mubr.bf16.mxu0 0
  %1675 = vmatmul.mubr.bf16.gmra.mrb[0].mxu0 %v952
  %v1676 = vpop.f32.mrb[0].mxu0
  %v1677 = vadd.f32 0.0, %v1676
  %v1678 = vpop.f32.mrb[0].mxu0
  %v1679 = vpop.f32.mrb[0].mxu0
  %v1680 = vadd.f32 0.0, %v1679
  %v1681 = vpop.f32.mrb[0].mxu0
  %1682 = vmatprep.mubr.bf16.mxu0 0
  %1683 = vmatmul.mubr.bf16.gmra.mrb[0].mxu0 %v955
  %v1684 = vpop.f32.mrb[0].mxu0
  %v1685 = vadd.f32 0.0, %v1684
  %v1686 = vpop.f32.mrb[0].mxu0
  %v1687 = vpop.f32.mrb[0].mxu0
  %v1688 = vadd.f32 0.0, %v1687
  %v1689 = vpop.f32.mrb[0].mxu0
  %1690 = vmatprep.mubr.bf16.mxu0 0
  %1691 = vmatmul.mubr.bf16.gmra.mrb[0].mxu0 %v958
  %v1692 = vpop.f32.mrb[0].mxu0
  %v1693 = vadd.f32 0.0, %v1692
  %v1694 = vpop.f32.mrb[0].mxu0
  %v1695 = vpop.f32.mrb[0].mxu0
  %v1696 = vadd.f32 0.0, %v1695
  %v1697 = vpop.f32.mrb[0].mxu0
  %1698 = vmatprep.mubr.bf16.mxu0 0
  %1699 = vmatmul.mubr.bf16.gmra.mrb[0].mxu0 %v961
  %v1700 = vpop.f32.mrb[0].mxu0
  %v1701 = vadd.f32 0.0, %v1700
  %v1702 = vpop.f32.mrb[0].mxu0
  %v1703 = vpop.f32.mrb[0].mxu0
  %v1704 = vadd.f32 0.0, %v1703
  %v1705 = vpop.f32.mrb[0].mxu0
  %1706 = vmatprep.mubr.bf16.mxu0 0
  %1707 = vmatmul.mubr.bf16.gmra.mrb[0].mxu0 %v964
  %v1708 = vpop.f32.mrb[0].mxu0
  %v1709 = vadd.f32 0.0, %v1708
  %v1710 = vpop.f32.mrb[0].mxu0
  %v1711 = vpop.f32.mrb[0].mxu0
  %v1712 = vadd.f32 0.0, %v1711
  %v1713 = vpop.f32.mrb[0].mxu0
  %1714 = vmatprep.mubr.bf16.mxu0 0
  %1715 = vmatmul.mubr.bf16.gmra.mrb[0].mxu0 %v967
  %v1716 = vpop.f32.mrb[0].mxu0
  %v1717 = vadd.f32 0.0, %v1716
  %v1718 = vpop.f32.mrb[0].mxu0
  %v1719 = vpop.f32.mrb[0].mxu0
  %v1720 = vadd.f32 0.0, %v1719
  %v1721 = vpop.f32.mrb[0].mxu0
  %1722 = vmatprep.mubr.bf16.mxu0 0
  %1723 = vmatmul.mubr.bf16.gmra.mrb[0].mxu0 %v970
  %v1724 = vpop.f32.mrb[0].mxu0
  %v1725 = vadd.f32 0.0, %v1724
  %v1726 = vpop.f32.mrb[0].mxu0
  %v1727 = vpop.f32.mrb[0].mxu0
  %v1728 = vadd.f32 0.0, %v1727
  %v1729 = vpop.f32.mrb[0].mxu0
  %1730 = vmatprep.mubr.bf16.mxu0 0
  %1731 = vmatmul.mubr.bf16.gmra.mrb[0].mxu0 %v973
  %v1732 = vpop.f32.mrb[0].mxu0
  %v1733 = vadd.f32 0.0, %v1732
  %v1734 = vpop.f32.mrb[0].mxu0
  %v1735 = vpop.f32.mrb[0].mxu0
  %v1736 = vadd.f32 0.0, %v1735
  %v1737 = vpop.f32.mrb[0].mxu0
  %1738 = vmatprep.mubr.bf16.mxu0 0
  %1739 = vmatmul.mubr.bf16.gmra.mrb[0].mxu0 %v976
  %v1740 = vpop.f32.mrb[0].mxu0
  %v1741 = vadd.f32 0.0, %v1740
  %v1742 = vpop.f32.mrb[0].mxu0
  %v1743 = vpop.f32.mrb[0].mxu0
  %v1744 = vadd.f32 0.0, %v1743
  %v1745 = vpop.f32.mrb[0].mxu0
  %1746 = vmatprep.mubr.bf16.mxu0 0
  %1747 = vmatmul.mubr.bf16.gmra.mrb[0].mxu0 %v979
  %v1748 = vpop.f32.mrb[0].mxu0
  %v1749 = vadd.f32 0.0, %v1748
  %v1750 = vpop.f32.mrb[0].mxu0
  %v1751 = vpop.f32.mrb[0].mxu0
  %v1752 = vadd.f32 0.0, %v1751
  %v1753 = vpop.f32.mrb[0].mxu0
  %1754 = vmatprep.mubr.bf16.mxu0 0
  %1755 = vmatmul.mubr.bf16.gmra.mrb[0].mxu0 %v982
  %v1756 = vpop.f32.mrb[0].mxu0
  %v1757 = vadd.f32 0.0, %v1756
  %v1758 = vpop.f32.mrb[0].mxu0
  %v1759 = vpop.f32.mrb[0].mxu0
  %v1760 = vadd.f32 0.0, %v1759
  %v1761 = vpop.f32.mrb[0].mxu0
  %1762 = vmatprep.mubr.bf16.mxu0 0
  %1763 = vmatmul.mubr.bf16.gmra.mrb[0].mxu0 %v985
  %v1764 = vpop.f32.mrb[0].mxu0
  %v1765 = vadd.f32 0.0, %v1764
  %v1766 = vpop.f32.mrb[0].mxu0
  %v1767 = vpop.f32.mrb[0].mxu0
  %v1768 = vadd.f32 0.0, %v1767
  %v1769 = vpop.f32.mrb[0].mxu0
  %1770 = vmatprep.mubr.bf16.mxu0 0
  %1771 = vmatmul.mubr.bf16.gmra.mrb[0].mxu0 %v988
  %v1772 = vpop.f32.mrb[0].mxu0
  %v1773 = vadd.f32 0.0, %v1772
  %v1774 = vpop.f32.mrb[0].mxu0
  %v1775 = vpop.f32.mrb[0].mxu0
  %v1776 = vadd.f32 0.0, %v1775
  %v1777 = vpop.f32.mrb[0].mxu0
  %1778 = vmatprep.mubr.bf16.mxu0 0
  %1779 = vmatmul.mubr.bf16.gmra.mrb[0].mxu0 %v991
  %v1780 = vpop.f32.mrb[0].mxu0
  %v1781 = vadd.f32 0.0, %v1780
  %v1782 = vpop.f32.mrb[0].mxu0
  %v1783 = vpop.f32.mrb[0].mxu0
  %v1784 = vadd.f32 0.0, %v1783
  %v1785 = vpop.f32.mrb[0].mxu0
  %1786 = vmatprep.mubr.bf16.mxu0 0
  %1787 = vmatmul.mubr.bf16.gmra.mrb[0].mxu0 %v994
  %v1788 = vpop.f32.mrb[0].mxu0
  %v1789 = vadd.f32 0.0, %v1788
  %v1790 = vpop.f32.mrb[0].mxu0
  %v1791 = vpop.f32.mrb[0].mxu0
  %v1792 = vadd.f32 0.0, %v1791
  %v1793 = vpop.f32.mrb[0].mxu0
  %1794 = vmatprep.mubr.bf16.mxu0 0
  %1795 = vmatmul.mubr.bf16.gmra.mrb[0].mxu0 %v997
  %v1796 = vpop.f32.mrb[0].mxu0
  %v1797 = vadd.f32 0.0, %v1796
  %v1798 = vpop.f32.mrb[0].mxu0
  %v1799 = vpop.f32.mrb[0].mxu0
  %v1800 = vadd.f32 0.0, %v1799
  %v1801 = vpop.f32.mrb[0].mxu0
  %1802 = vmatprep.mubr.bf16.mxu0 0
  %1803 = vmatmul.mubr.bf16.gmra.mrb[0].mxu0 %v1000
  %v1804 = vpop.f32.mrb[0].mxu0
  %v1805 = vadd.f32 0.0, %v1804
  %v1806 = vpop.f32.mrb[0].mxu0
  %v1807 = vpop.f32.mrb[0].mxu0
  %v1808 = vadd.f32 0.0, %v1807
  %v1809 = vpop.f32.mrb[0].mxu0
  %1810 = vmatprep.mubr.bf16.mxu0 0
  %1811 = vmatmul.mubr.bf16.gmra.mrb[0].mxu0 %v1003
  %v1812 = vpop.f32.mrb[0].mxu0
  %v1813 = vadd.f32 0.0, %v1812
  %v1814 = vpop.f32.mrb[0].mxu0
  %v1815 = vpop.f32.mrb[0].mxu0
  %v1816 = vadd.f32 0.0, %v1815
  %v1817 = vpop.f32.mrb[0].mxu0
  %1818 = vmatprep.mubr.bf16.mxu0 0
  %1819 = vmatmul.mubr.bf16.gmra.mrb[0].mxu0 %v1006
  %v1820 = vpop.f32.mrb[0].mxu0
  %v1821 = vadd.f32 0.0, %v1820
  %v1822 = vpop.f32.mrb[0].mxu0
  %v1823 = vpop.f32.mrb[0].mxu0
  %v1824 = vadd.f32 0.0, %v1823
  %v1825 = vpop.f32.mrb[0].mxu0
  %1826 = vmatprep.mubr.bf16.mxu0 0
  %1827 = vmatmul.mubr.bf16.gmra.mrb[0].mxu0 %v1009
  %v1828 = vpop.f32.mrb[0].mxu0
  %v1829 = vadd.f32 0.0, %v1828
  %v1830 = vpop.f32.mrb[0].mxu0
  %v1831 = vpop.f32.mrb[0].mxu0
  %v1832 = vadd.f32 0.0, %v1831
  %v1833 = vpop.f32.mrb[0].mxu0
  %1834 = vdwg.mxu0
  %vm1835 = vcmask 130048
  %v1836 = vsel %vm1835, %v1053, -inf
  %v1837 = vsel %vm1835, %v1248, -inf
  %v1838 = vmax.f32 %v1836, %v1837
  %v1839 = vsel %vm1835, %v1445, -inf
  %v1840 = vmax.f32 %v1838, %v1839
  %v1841 = vsel %vm1835, %v1640, -inf
  %v1842 = vmax.f32 %v1840, %v1841
  %v1843 = vsel %vm1835, %v1056, -inf
  %v1844 = vsel %vm1835, %v1253, -inf
  %v1845 = vmax.f32 %v1843, %v1844
  %v1846 = vsel %vm1835, %v1448, -inf
  %v1847 = vmax.f32 %v1845, %v1846
  %v1848 = vsel %vm1835, %v1645, -inf
  %v1849 = vmax.f32 %v1847, %v1848
  %v1850 = vsel %vm1835, %v1061, -inf
  %v1851 = vsel %vm1835, %v1256, -inf
  %v1852 = vmax.f32 %v1850, %v1851
  %v1853 = vsel %vm1835, %v1453, -inf
  %v1854 = vmax.f32 %v1852, %v1853
  %v1855 = vsel %vm1835, %v1648, -inf
  %v1856 = vmax.f32 %v1854, %v1855
  %v1857 = vsel %vm1835, %v1064, -inf
  %v1858 = vsel %vm1835, %v1261, -inf
  %v1859 = vmax.f32 %v1857, %v1858
  %v1860 = vsel %vm1835, %v1456, -inf
  %v1861 = vmax.f32 %v1859, %v1860
  %v1862 = vsel %vm1835, %v1653, -inf
  %v1863 = vmax.f32 %v1861, %v1862
  %v1864 = vsel %vm1835, %v1069, -inf
  %v1865 = vsel %vm1835, %v1264, -inf
  %v1866 = vmax.f32 %v1864, %v1865
  %v1867 = vsel %vm1835, %v1461, -inf
  %v1868 = vmax.f32 %v1866, %v1867
  %v1869 = vsel %vm1835, %v1656, -inf
  %v1870 = vmax.f32 %v1868, %v1869
  %v1871 = vsel %vm1835, %v1072, -inf
  %v1872 = vsel %vm1835, %v1269, -inf
  %v1873 = vmax.f32 %v1871, %v1872
  %v1874 = vsel %vm1835, %v1464, -inf
  %v1875 = vmax.f32 %v1873, %v1874
  %v1876 = vsel %vm1835, %v1661, -inf
  %v1877 = vmax.f32 %v1875, %v1876
  %v1878 = vsel %vm1835, %v1077, -inf
  %v1879 = vsel %vm1835, %v1272, -inf
  %v1880 = vmax.f32 %v1878, %v1879
  %v1881 = vsel %vm1835, %v1469, -inf
  %v1882 = vmax.f32 %v1880, %v1881
  %v1883 = vsel %vm1835, %v1664, -inf
  %v1884 = vmax.f32 %v1882, %v1883
  %v1885 = vsel %vm1835, %v1080, -inf
  %v1886 = vsel %vm1835, %v1277, -inf
  %v1887 = vmax.f32 %v1885, %v1886
  %v1888 = vsel %vm1835, %v1472, -inf
  %v1889 = vmax.f32 %v1887, %v1888
  %v1890 = vsel %vm1835, %v1669, -inf
  %v1891 = vmax.f32 %v1889, %v1890
  %v1892 = vsel %vm1835, %v1085, -inf
  %v1893 = vsel %vm1835, %v1280, -inf
  %v1894 = vmax.f32 %v1892, %v1893
  %v1895 = vsel %vm1835, %v1477, -inf
  %v1896 = vmax.f32 %v1894, %v1895
  %v1897 = vsel %vm1835, %v1672, -inf
  %v1898 = vmax.f32 %v1896, %v1897
  %v1899 = vsel %vm1835, %v1088, -inf
  %v1900 = vsel %vm1835, %v1285, -inf
  %v1901 = vmax.f32 %v1899, %v1900
  %v1902 = vsel %vm1835, %v1480, -inf
  %v1903 = vmax.f32 %v1901, %v1902
  %v1904 = vsel %vm1835, %v1677, -inf
  %v1905 = vmax.f32 %v1903, %v1904
  %v1906 = vsel %vm1835, %v1093, -inf
  %v1907 = vsel %vm1835, %v1288, -inf
  %v1908 = vmax.f32 %v1906, %v1907
  %v1909 = vsel %vm1835, %v1485, -inf
  %v1910 = vmax.f32 %v1908, %v1909
  %v1911 = vsel %vm1835, %v1680, -inf
  %v1912 = vmax.f32 %v1910, %v1911
  %v1913 = vsel %vm1835, %v1096, -inf
  %v1914 = vsel %vm1835, %v1293, -inf
  %v1915 = vmax.f32 %v1913, %v1914
  %v1916 = vsel %vm1835, %v1488, -inf
  %v1917 = vmax.f32 %v1915, %v1916
  %v1918 = vsel %vm1835, %v1685, -inf
  %v1919 = vmax.f32 %v1917, %v1918
  %v1920 = vsel %vm1835, %v1101, -inf
  %v1921 = vsel %vm1835, %v1296, -inf
  %v1922 = vmax.f32 %v1920, %v1921
  %v1923 = vsel %vm1835, %v1493, -inf
  %v1924 = vmax.f32 %v1922, %v1923
  %v1925 = vsel %vm1835, %v1688, -inf
  %v1926 = vmax.f32 %v1924, %v1925
  %v1927 = vsel %vm1835, %v1104, -inf
  %v1928 = vsel %vm1835, %v1301, -inf
  %v1929 = vmax.f32 %v1927, %v1928
  %v1930 = vsel %vm1835, %v1496, -inf
  %v1931 = vmax.f32 %v1929, %v1930
  %v1932 = vsel %vm1835, %v1693, -inf
  %v1933 = vmax.f32 %v1931, %v1932
  %v1934 = vsel %vm1835, %v1109, -inf
  %v1935 = vsel %vm1835, %v1304, -inf
  %v1936 = vmax.f32 %v1934, %v1935
  %v1937 = vsel %vm1835, %v1501, -inf
  %v1938 = vmax.f32 %v1936, %v1937
  %v1939 = vsel %vm1835, %v1696, -inf
  %v1940 = vmax.f32 %v1938, %v1939
  %v1941 = vsel %vm1835, %v1112, -inf
  %v1942 = vsel %vm1835, %v1309, -inf
  %v1943 = vmax.f32 %v1941, %v1942
  %v1944 = vsel %vm1835, %v1504, -inf
  %v1945 = vmax.f32 %v1943, %v1944
  %v1946 = vsel %vm1835, %v1701, -inf
  %v1947 = vmax.f32 %v1945, %v1946
  %v1948 = vsel %vm1835, %v1117, -inf
  %v1949 = vsel %vm1835, %v1312, -inf
  %v1950 = vmax.f32 %v1948, %v1949
  %v1951 = vsel %vm1835, %v1509, -inf
  %v1952 = vmax.f32 %v1950, %v1951
  %v1953 = vsel %vm1835, %v1704, -inf
  %v1954 = vmax.f32 %v1952, %v1953
  %v1955 = vsel %vm1835, %v1120, -inf
  %v1956 = vsel %vm1835, %v1317, -inf
  %v1957 = vmax.f32 %v1955, %v1956
  %v1958 = vsel %vm1835, %v1512, -inf
  %v1959 = vmax.f32 %v1957, %v1958
  %v1960 = vsel %vm1835, %v1709, -inf
  %v1961 = vmax.f32 %v1959, %v1960
  %v1962 = vsel %vm1835, %v1125, -inf
  %v1963 = vsel %vm1835, %v1320, -inf
  %v1964 = vmax.f32 %v1962, %v1963
  %v1965 = vsel %vm1835, %v1517, -inf
  %v1966 = vmax.f32 %v1964, %v1965
  %v1967 = vsel %vm1835, %v1712, -inf
  %v1968 = vmax.f32 %v1966, %v1967
  %v1969 = vsel %vm1835, %v1128, -inf
  %v1970 = vsel %vm1835, %v1325, -inf
  %v1971 = vmax.f32 %v1969, %v1970
  %v1972 = vsel %vm1835, %v1520, -inf
  %v1973 = vmax.f32 %v1971, %v1972
  %v1974 = vsel %vm1835, %v1717, -inf
  %v1975 = vmax.f32 %v1973, %v1974
  %v1976 = vsel %vm1835, %v1133, -inf
  %v1977 = vsel %vm1835, %v1328, -inf
  %v1978 = vmax.f32 %v1976, %v1977
  %v1979 = vsel %vm1835, %v1525, -inf
  %v1980 = vmax.f32 %v1978, %v1979
  %v1981 = vsel %vm1835, %v1720, -inf
  %v1982 = vmax.f32 %v1980, %v1981
  %v1983 = vsel %vm1835, %v1136, -inf
  %v1984 = vsel %vm1835, %v1333, -inf
  %v1985 = vmax.f32 %v1983, %v1984
  %v1986 = vsel %vm1835, %v1528, -inf
  %v1987 = vmax.f32 %v1985, %v1986
  %v1988 = vsel %vm1835, %v1725, -inf
  %v1989 = vmax.f32 %v1987, %v1988
  %v1990 = vsel %vm1835, %v1141, -inf
  %v1991 = vsel %vm1835, %v1336, -inf
  %v1992 = vmax.f32 %v1990, %v1991
  %v1993 = vsel %vm1835, %v1533, -inf
  %v1994 = vmax.f32 %v1992, %v1993
  %v1995 = vsel %vm1835, %v1728, -inf
  %v1996 = vmax.f32 %v1994, %v1995
  %v1997 = vsel %vm1835, %v1144, -inf
  %v1998 = vsel %vm1835, %v1341, -inf
  %v1999 = vmax.f32 %v1997, %v1998
  %v2000 = vsel %vm1835, %v1536, -inf
  %v2001 = vmax.f32 %v1999, %v2000
  %v2002 = vsel %vm1835, %v1733, -inf
  %v2003 = vmax.f32 %v2001, %v2002
  %v2004 = vsel %vm1835, %v1149, -inf
  %v2005 = vsel %vm1835, %v1344, -inf
  %v2006 = vmax.f32 %v2004, %v2005
  %v2007 = vsel %vm1835, %v1541, -inf
  %v2008 = vmax.f32 %v2006, %v2007
  %v2009 = vsel %vm1835, %v1736, -inf
  %v2010 = vmax.f32 %v2008, %v2009
  %v2011 = vsel %vm1835, %v1152, -inf
  %v2012 = vsel %vm1835, %v1349, -inf
  %v2013 = vmax.f32 %v2011, %v2012
  %v2014 = vsel %vm1835, %v1544, -inf
  %v2015 = vmax.f32 %v2013, %v2014
  %v2016 = vsel %vm1835, %v1741, -inf
  %v2017 = vmax.f32 %v2015, %v2016
  %v2018 = vsel %vm1835, %v1157, -inf
  %v2019 = vsel %vm1835, %v1352, -inf
  %v2020 = vmax.f32 %v2018, %v2019
  %v2021 = vsel %vm1835, %v1549, -inf
  %v2022 = vmax.f32 %v2020, %v2021
  %v2023 = vsel %vm1835, %v1744, -inf
  %v2024 = vmax.f32 %v2022, %v2023
  %v2025 = vsel %vm1835, %v1160, -inf
  %v2026 = vsel %vm1835, %v1357, -inf
  %v2027 = vmax.f32 %v2025, %v2026
  %v2028 = vsel %vm1835, %v1552, -inf
  %v2029 = vmax.f32 %v2027, %v2028
  %v2030 = vsel %vm1835, %v1749, -inf
  %v2031 = vmax.f32 %v2029, %v2030
  %v2032 = vsel %vm1835, %v1165, -inf
  %v2033 = vsel %vm1835, %v1360, -inf
  %v2034 = vmax.f32 %v2032, %v2033
  %v2035 = vsel %vm1835, %v1557, -inf
  %v2036 = vmax.f32 %v2034, %v2035
  %v2037 = vsel %vm1835, %v1752, -inf
  %v2038 = vmax.f32 %v2036, %v2037
  %v2039 = vsel %vm1835, %v1168, -inf
  %v2040 = vsel %vm1835, %v1365, -inf
  %v2041 = vmax.f32 %v2039, %v2040
  %v2042 = vsel %vm1835, %v1560, -inf
  %v2043 = vmax.f32 %v2041, %v2042
  %v2044 = vsel %vm1835, %v1757, -inf
  %v2045 = vmax.f32 %v2043, %v2044
  %v2046 = vsel %vm1835, %v1173, -inf
  %v2047 = vsel %vm1835, %v1368, -inf
  %v2048 = vmax.f32 %v2046, %v2047
  %v2049 = vsel %vm1835, %v1565, -inf
  %v2050 = vmax.f32 %v2048, %v2049
  %v2051 = vsel %vm1835, %v1760, -inf
  %v2052 = vmax.f32 %v2050, %v2051
  %v2053 = vsel %vm1835, %v1176, -inf
  %v2054 = vsel %vm1835, %v1373, -inf
  %v2055 = vmax.f32 %v2053, %v2054
  %v2056 = vsel %vm1835, %v1568, -inf
  %v2057 = vmax.f32 %v2055, %v2056
  %v2058 = vsel %vm1835, %v1765, -inf
  %v2059 = vmax.f32 %v2057, %v2058
  %v2060 = vsel %vm1835, %v1181, -inf
  %v2061 = vsel %vm1835, %v1376, -inf
  %v2062 = vmax.f32 %v2060, %v2061
  %v2063 = vsel %vm1835, %v1573, -inf
  %v2064 = vmax.f32 %v2062, %v2063
  %v2065 = vsel %vm1835, %v1768, -inf
  %v2066 = vmax.f32 %v2064, %v2065
  %v2067 = vsel %vm1835, %v1184, -inf
  %v2068 = vsel %vm1835, %v1381, -inf
  %v2069 = vmax.f32 %v2067, %v2068
  %v2070 = vsel %vm1835, %v1576, -inf
  %v2071 = vmax.f32 %v2069, %v2070
  %v2072 = vsel %vm1835, %v1773, -inf
  %v2073 = vmax.f32 %v2071, %v2072
  %v2074 = vsel %vm1835, %v1189, -inf
  %v2075 = vsel %vm1835, %v1384, -inf
  %v2076 = vmax.f32 %v2074, %v2075
  %v2077 = vsel %vm1835, %v1581, -inf
  %v2078 = vmax.f32 %v2076, %v2077
  %v2079 = vsel %vm1835, %v1776, -inf
  %v2080 = vmax.f32 %v2078, %v2079
  %v2081 = vsel %vm1835, %v1192, -inf
  %v2082 = vsel %vm1835, %v1389, -inf
  %v2083 = vmax.f32 %v2081, %v2082
  %v2084 = vsel %vm1835, %v1584, -inf
  %v2085 = vmax.f32 %v2083, %v2084
  %v2086 = vsel %vm1835, %v1781, -inf
  %v2087 = vmax.f32 %v2085, %v2086
  %v2088 = vsel %vm1835, %v1197, -inf
  %v2089 = vsel %vm1835, %v1392, -inf
  %v2090 = vmax.f32 %v2088, %v2089
  %v2091 = vsel %vm1835, %v1589, -inf
  %v2092 = vmax.f32 %v2090, %v2091
  %v2093 = vsel %vm1835, %v1784, -inf
  %v2094 = vmax.f32 %v2092, %v2093
  %v2095 = vsel %vm1835, %v1200, -inf
  %v2096 = vsel %vm1835, %v1397, -inf
  %v2097 = vmax.f32 %v2095, %v2096
  %v2098 = vsel %vm1835, %v1592, -inf
  %v2099 = vmax.f32 %v2097, %v2098
  %v2100 = vsel %vm1835, %v1789, -inf
  %v2101 = vmax.f32 %v2099, %v2100
  %v2102 = vsel %vm1835, %v1205, -inf
  %v2103 = vsel %vm1835, %v1400, -inf
  %v2104 = vmax.f32 %v2102, %v2103
  %v2105 = vsel %vm1835, %v1597, -inf
  %v2106 = vmax.f32 %v2104, %v2105
  %v2107 = vsel %vm1835, %v1792, -inf
  %v2108 = vmax.f32 %v2106, %v2107
  %v2109 = vsel %vm1835, %v1208, -inf
  %v2110 = vsel %vm1835, %v1405, -inf
  %v2111 = vmax.f32 %v2109, %v2110
  %v2112 = vsel %vm1835, %v1600, -inf
  %v2113 = vmax.f32 %v2111, %v2112
  %v2114 = vsel %vm1835, %v1797, -inf
  %v2115 = vmax.f32 %v2113, %v2114
  %v2116 = vsel %vm1835, %v1213, -inf
  %v2117 = vsel %vm1835, %v1408, -inf
  %v2118 = vmax.f32 %v2116, %v2117
  %v2119 = vsel %vm1835, %v1605, -inf
  %v2120 = vmax.f32 %v2118, %v2119
  %v2121 = vsel %vm1835, %v1800, -inf
  %v2122 = vmax.f32 %v2120, %v2121
  %v2123 = vsel %vm1835, %v1216, -inf
  %v2124 = vsel %vm1835, %v1413, -inf
  %v2125 = vmax.f32 %v2123, %v2124
  %v2126 = vsel %vm1835, %v1608, -inf
  %v2127 = vmax.f32 %v2125, %v2126
  %v2128 = vsel %vm1835, %v1805, -inf
  %v2129 = vmax.f32 %v2127, %v2128
  %v2130 = vsel %vm1835, %v1221, -inf
  %v2131 = vsel %vm1835, %v1416, -inf
  %v2132 = vmax.f32 %v2130, %v2131
  %v2133 = vsel %vm1835, %v1613, -inf
  %v2134 = vmax.f32 %v2132, %v2133
  %v2135 = vsel %vm1835, %v1808, -inf
  %v2136 = vmax.f32 %v2134, %v2135
  %v2137 = vsel %vm1835, %v1224, -inf
  %v2138 = vsel %vm1835, %v1421, -inf
  %v2139 = vmax.f32 %v2137, %v2138
  %v2140 = vsel %vm1835, %v1616, -inf
  %v2141 = vmax.f32 %v2139, %v2140
  %v2142 = vsel %vm1835, %v1813, -inf
  %v2143 = vmax.f32 %v2141, %v2142
  %v2144 = vsel %vm1835, %v1229, -inf
  %v2145 = vsel %vm1835, %v1424, -inf
  %v2146 = vmax.f32 %v2144, %v2145
  %v2147 = vsel %vm1835, %v1621, -inf
  %v2148 = vmax.f32 %v2146, %v2147
  %v2149 = vsel %vm1835, %v1816, -inf
  %v2150 = vmax.f32 %v2148, %v2149
  %v2151 = vsel %vm1835, %v1232, -inf
  %v2152 = vsel %vm1835, %v1429, -inf
  %v2153 = vmax.f32 %v2151, %v2152
  %v2154 = vsel %vm1835, %v1624, -inf
  %v2155 = vmax.f32 %v2153, %v2154
  %v2156 = vsel %vm1835, %v1821, -inf
  %v2157 = vmax.f32 %v2155, %v2156
  %v2158 = vsel %vm1835, %v1237, -inf
  %v2159 = vsel %vm1835, %v1432, -inf
  %v2160 = vmax.f32 %v2158, %v2159
  %v2161 = vsel %vm1835, %v1629, -inf
  %v2162 = vmax.f32 %v2160, %v2161
  %v2163 = vsel %vm1835, %v1824, -inf
  %v2164 = vmax.f32 %v2162, %v2163
  %v2165 = vsel %vm1835, %v1240, -inf
  %v2166 = vsel %vm1835, %v1437, -inf
  %v2167 = vmax.f32 %v2165, %v2166
  %v2168 = vsel %vm1835, %v1632, -inf
  %v2169 = vmax.f32 %v2167, %v2168
  %v2170 = vsel %vm1835, %v1829, -inf
  %v2171 = vmax.f32 %v2169, %v2170
  %v2172 = vsel %vm1835, %v1245, -inf
  %v2173 = vsel %vm1835, %v1440, -inf
  %v2174 = vmax.f32 %v2172, %v2173
  %v2175 = vsel %vm1835, %v1637, -inf
  %v2176 = vmax.f32 %v2174, %v2175
  %v2177 = vsel %vm1835, %v1832, -inf
  %v2178 = vmax.f32 %v2176, %v2177
  %v2179 = vld [vmem:[%s2] sm:$0x1]
  %v2181 = vlaneseq
  %v2182 = vshrl.u32 %v2181, 7
  %v2183 = vsub.s32 0, %v2182
  %v2184 = vrot.slane %v2179, %v2183
  %v2186 = vadd.f32 %v1842, %v2184
  %v2187 = vadd.f32 %v1849, %v2184
  %v2188 = vadd.f32 %v1856, %v2184
  %v2189 = vadd.f32 %v1863, %v2184
  %v2190 = vadd.f32 %v1870, %v2184
  %v2191 = vadd.f32 %v1877, %v2184
  %v2192 = vadd.f32 %v1884, %v2184
  %v2193 = vadd.f32 %v1891, %v2184
  %v2194 = vadd.f32 %v1898, %v2184
  %v2195 = vadd.f32 %v1905, %v2184
  %v2196 = vadd.f32 %v1912, %v2184
  %v2197 = vadd.f32 %v1919, %v2184
  %v2198 = vadd.f32 %v1926, %v2184
  %v2199 = vadd.f32 %v1933, %v2184
  %v2200 = vadd.f32 %v1940, %v2184
  %v2201 = vadd.f32 %v1947, %v2184
  %v2202 = vadd.f32 %v1954, %v2184
  %v2203 = vadd.f32 %v1961, %v2184
  %v2204 = vadd.f32 %v1968, %v2184
  %v2205 = vadd.f32 %v1975, %v2184
  %v2206 = vadd.f32 %v1982, %v2184
  %v2207 = vadd.f32 %v1989, %v2184
  %v2208 = vadd.f32 %v1996, %v2184
  %v2209 = vadd.f32 %v2003, %v2184
  %v2210 = vadd.f32 %v2010, %v2184
  %v2211 = vadd.f32 %v2017, %v2184
  %v2212 = vadd.f32 %v2024, %v2184
  %v2213 = vadd.f32 %v2031, %v2184
  %v2214 = vadd.f32 %v2038, %v2184
  %v2215 = vadd.f32 %v2045, %v2184
  %v2216 = vadd.f32 %v2052, %v2184
  %v2217 = vadd.f32 %v2059, %v2184
  %v2218 = vadd.f32 %v2066, %v2184
  %v2219 = vadd.f32 %v2073, %v2184
  %v2220 = vadd.f32 %v2080, %v2184
  %v2221 = vadd.f32 %v2087, %v2184
  %v2222 = vadd.f32 %v2094, %v2184
  %v2223 = vadd.f32 %v2101, %v2184
  %v2224 = vadd.f32 %v2108, %v2184
  %v2225 = vadd.f32 %v2115, %v2184
  %v2226 = vadd.f32 %v2122, %v2184
  %v2227 = vadd.f32 %v2129, %v2184
  %v2228 = vadd.f32 %v2136, %v2184
  %v2229 = vadd.f32 %v2143, %v2184
  %v2230 = vadd.f32 %v2150, %v2184
  %v2231 = vadd.f32 %v2157, %v2184
  %v2232 = vadd.f32 %v2164, %v2184
  %v2233 = vadd.f32 %v2171, %v2184
  %v2234 = vadd.f32 %v2178, %v2184
  %v2235 = vmax.f32 %v2186, 0.0
  %v2236 = vmax.f32 %v2187, 0.0
  %v2237 = vmax.f32 %v2188, 0.0
  %v2238 = vmax.f32 %v2189, 0.0
  %v2239 = vmax.f32 %v2190, 0.0
  %v2240 = vmax.f32 %v2191, 0.0
  %v2241 = vmax.f32 %v2192, 0.0
  %v2242 = vmax.f32 %v2193, 0.0
  %v2243 = vmax.f32 %v2194, 0.0
  %v2244 = vmax.f32 %v2195, 0.0
  %v2245 = vmax.f32 %v2196, 0.0
  %v2246 = vmax.f32 %v2197, 0.0
  %v2247 = vmax.f32 %v2198, 0.0
  %v2248 = vmax.f32 %v2199, 0.0
  %v2249 = vmax.f32 %v2200, 0.0
  %v2250 = vmax.f32 %v2201, 0.0
  %v2251 = vmax.f32 %v2202, 0.0
  %v2252 = vmax.f32 %v2203, 0.0
  %v2253 = vmax.f32 %v2204, 0.0
  %v2254 = vmax.f32 %v2205, 0.0
  %v2255 = vmax.f32 %v2206, 0.0
  %v2256 = vmax.f32 %v2207, 0.0
  %v2257 = vmax.f32 %v2208, 0.0
  %v2258 = vmax.f32 %v2209, 0.0
  %v2259 = vmax.f32 %v2210, 0.0
  %v2260 = vmax.f32 %v2211, 0.0
  %v2261 = vmax.f32 %v2212, 0.0
  %v2262 = vmax.f32 %v2213, 0.0
  %v2263 = vmax.f32 %v2214, 0.0
  %v2264 = vmax.f32 %v2215, 0.0
  %v2265 = vmax.f32 %v2216, 0.0
  %v2266 = vmax.f32 %v2217, 0.0
  %v2267 = vmax.f32 %v2218, 0.0
  %v2268 = vmax.f32 %v2219, 0.0
  %v2269 = vmax.f32 %v2220, 0.0
  %v2270 = vmax.f32 %v2221, 0.0
  %v2271 = vmax.f32 %v2222, 0.0
  %v2272 = vmax.f32 %v2223, 0.0
  %v2273 = vmax.f32 %v2224, 0.0
  %v2274 = vmax.f32 %v2225, 0.0
  %v2275 = vmax.f32 %v2226, 0.0
  %v2276 = vmax.f32 %v2227, 0.0
  %v2277 = vmax.f32 %v2228, 0.0
  %v2278 = vmax.f32 %v2229, 0.0
  %v2279 = vmax.f32 %v2230, 0.0
  %v2280 = vmax.f32 %v2231, 0.0
  %v2281 = vmax.f32 %v2232, 0.0
  %v2282 = vmax.f32 %v2233, 0.0
  %v2283 = vmax.f32 %v2234, 0.0
  %2284 = vst.msk [vmem:[%s3] sm:$0xff] %vm1835, %v2235
  %2285 = vst.msk [vmem:[%s3 + $0x8] sm:$0xff] %vm1835, %v2236
  %2286 = vst.msk [vmem:[%s3 + $0x10] sm:$0xff] %vm1835, %v2237
  %2287 = vst.msk [vmem:[%s3 + $0x18] sm:$0xff] %vm1835, %v2238
  %2288 = vst.msk [vmem:[%s3 + $0x20] sm:$0xff] %vm1835, %v2239
  %2289 = vst.msk [vmem:[%s3 + $0x28] sm:$0xff] %vm1835, %v2240
  %2290 = vst.msk [vmem:[%s3 + $0x30] sm:$0xff] %vm1835, %v2241
  %2291 = vst.msk [vmem:[%s3 + $0x38] sm:$0xff] %vm1835, %v2242
  %2292 = vst.msk [vmem:[%s3 + $0x40] sm:$0xff] %vm1835, %v2243
  %2293 = vst.msk [vmem:[%s3 + $0x48] sm:$0xff] %vm1835, %v2244
  %2294 = vst.msk [vmem:[%s3 + $0x50] sm:$0xff] %vm1835, %v2245
  %2295 = vst.msk [vmem:[%s3 + $0x58] sm:$0xff] %vm1835, %v2246
  %2296 = vst.msk [vmem:[%s3 + $0x60] sm:$0xff] %vm1835, %v2247
  %2297 = vst.msk [vmem:[%s3 + $0x68] sm:$0xff] %vm1835, %v2248
  %2298 = vst.msk [vmem:[%s3 + $0x70] sm:$0xff] %vm1835, %v2249
  %2299 = vst.msk [vmem:[%s3 + $0x78] sm:$0xff] %vm1835, %v2250
  %2300 = vst.msk [vmem:[%s3 + $0x80] sm:$0xff] %vm1835, %v2251
  %2301 = vst.msk [vmem:[%s3 + $0x88] sm:$0xff] %vm1835, %v2252
  %2302 = vst.msk [vmem:[%s3 + $0x90] sm:$0xff] %vm1835, %v2253
  %2303 = vst.msk [vmem:[%s3 + $0x98] sm:$0xff] %vm1835, %v2254
  %2304 = vst.msk [vmem:[%s3 + $0xa0] sm:$0xff] %vm1835, %v2255
  %2305 = vst.msk [vmem:[%s3 + $0xa8] sm:$0xff] %vm1835, %v2256
  %2306 = vst.msk [vmem:[%s3 + $0xb0] sm:$0xff] %vm1835, %v2257
  %2307 = vst.msk [vmem:[%s3 + $0xb8] sm:$0xff] %vm1835, %v2258
  %2308 = vst.msk [vmem:[%s3 + $0xc0] sm:$0xff] %vm1835, %v2259
  %2309 = vst.msk [vmem:[%s3 + $0xc8] sm:$0xff] %vm1835, %v2260
  %2310 = vst.msk [vmem:[%s3 + $0xd0] sm:$0xff] %vm1835, %v2261
  %2311 = vst.msk [vmem:[%s3 + $0xd8] sm:$0xff] %vm1835, %v2262
  %2312 = vst.msk [vmem:[%s3 + $0xe0] sm:$0xff] %vm1835, %v2263
  %2313 = vst.msk [vmem:[%s3 + $0xe8] sm:$0xff] %vm1835, %v2264
  %2314 = vst.msk [vmem:[%s3 + $0xf0] sm:$0xff] %vm1835, %v2265
  %2315 = vst.msk [vmem:[%s3 + $0xf8] sm:$0xff] %vm1835, %v2266
  %2316 = vst.msk [vmem:[%s3 + $0x100] sm:$0xff] %vm1835, %v2267
  %2317 = vst.msk [vmem:[%s3 + $0x108] sm:$0xff] %vm1835, %v2268
  %2318 = vst.msk [vmem:[%s3 + $0x110] sm:$0xff] %vm1835, %v2269
  %2319 = vst.msk [vmem:[%s3 + $0x118] sm:$0xff] %vm1835, %v2270
  %2320 = vst.msk [vmem:[%s3 + $0x120] sm:$0xff] %vm1835, %v2271
  %2321 = vst.msk [vmem:[%s3 + $0x128] sm:$0xff] %vm1835, %v2272
  %2322 = vst.msk [vmem:[%s3 + $0x130] sm:$0xff] %vm1835, %v2273
  %2323 = vst.msk [vmem:[%s3 + $0x138] sm:$0xff] %vm1835, %v2274
  %2324 = vst.msk [vmem:[%s3 + $0x140] sm:$0xff] %vm1835, %v2275
  %2325 = vst.msk [vmem:[%s3 + $0x148] sm:$0xff] %vm1835, %v2276
  %2326 = vst.msk [vmem:[%s3 + $0x150] sm:$0xff] %vm1835, %v2277
  %2327 = vst.msk [vmem:[%s3 + $0x158] sm:$0xff] %vm1835, %v2278
  %2328 = vst.msk [vmem:[%s3 + $0x160] sm:$0xff] %vm1835, %v2279
  %2329 = vst.msk [vmem:[%s3 + $0x168] sm:$0xff] %vm1835, %v2280
  %2330 = vst.msk [vmem:[%s3 + $0x170] sm:$0xff] %vm1835, %v2281
  %2331 = vst.msk [vmem:[%s3 + $0x178] sm:$0xff] %vm1835, %v2282
  %2332 = vst.msk [vmem:[%s3 + $0x180] sm:$0xff] %vm1835, %v2283
  // Predicated region
  $region14: #{cnn_forward.3} parent=0 // pred_check
    _
  $region15: #{cnn_forward.3} parent=0 // pred_check_branch
    %2334 = sbr.rel (0) target = $region17
  $region16: #{cnn_forward.3} parent=0 // pred_region
    _
  $region17: #{cnn_forward.3} parent=0 // pred_fallthru
    _
  // Predicated region
  $region18: #{cnn_forward.3} parent=0 // pred_check
    _
  $region19: #{cnn_forward.3} parent=0 // pred_check_branch
    %2336 = sbr.rel (0) target = $region21
  $region20: #{cnn_forward.3} parent=0 // pred_region
    _
  $region21: #{cnn_forward.3} parent=0 // pred_fallthru
    _

// kernel: cnn_forward.4
$region0: #{cnn_forward.4}
  #allocation0 [shape = 'u32[]', space=smem, size = 0x4, offset = 0x4, fixed_abs, tag = 'smem constant byte address 0x4 - core index']
  #allocation1 [shape = 'u32[144,128]{1,0:T(1,128)}', space=vmem, size = 0x12000, scoped, tag = 'internal scratch']
  %s0 = inlined_call_operand.vmem [shape: bf16[4,98,400], index: 0, kind: input, shape index: {}]
  %s1 = inlined_call_operand.vmem [shape: bf16[400,32], index: 1, kind: input, shape index: {}]
  %s2 = inlined_call_operand.vmem [shape: f32[1,32], index: 2, kind: input, shape index: {}]
  %s3 = inlined_call_operand.vmem [shape: f32[98,32], index: 3, kind: output, shape index: {}]
  %s4 = sld [smem:[#allocation0]]
  $region22: #{cnn_forward.4} parent=0
    _
  %s6 = ssub.s32 1, %s4
  %s7 = scalar_select 0, %s6, %s4
  // Predicated region
  $region2: #{cnn_forward.4} parent=0 // pred_check
    _
  $region3: #{cnn_forward.4} parent=0 // pred_check_branch
    %9 = sbr.rel (0) target = $region5
  $region4: #{cnn_forward.4} parent=0 // pred_region
    _
  $region5: #{cnn_forward.4} parent=0 // pred_fallthru
    _
  // Predicated region
  $region6: #{cnn_forward.4} parent=0 // pred_check
    _
  $region7: #{cnn_forward.4} parent=0 // pred_check_branch
    %11 = sbr.rel (0) target = $region9
  $region8: #{cnn_forward.4} parent=0 // pred_region
    _
  $region9: #{cnn_forward.4} parent=0 // pred_fallthru
    _
  // Predicated region
  $region10: #{cnn_forward.4} parent=0 // pred_check
    _
  $region11: #{cnn_forward.4} parent=0 // pred_check_branch
    %13 = sbr.rel (0) target = $region13
  $region12: #{cnn_forward.4} parent=0 // pred_region
    _
  $region13: #{cnn_forward.4} parent=0 // pred_fallthru
    _
  %v15 = vld [vmem:[%s0] sm:$0xff]
  %v16 = vld [vmem:[%s0 + $0x8] sm:$0xff]
  %v17 = vld [vmem:[%s0 + $0x10] sm:$0xff]
  %v18 = vld [vmem:[%s0 + $0x18] sm:$0xff]
  %v19 = vld [vmem:[%s0 + $0x20] sm:$0xff]
  %v20 = vld [vmem:[%s0 + $0x28] sm:$0xff]
  %v21 = vld [vmem:[%s0 + $0x30] sm:$0xff]
  %v22 = vld [vmem:[%s0 + $0x38] sm:$0xff]
  %v23 = vld [vmem:[%s0 + $0x40] sm:$0xff]
  %v24 = vld [vmem:[%s0 + $0x48] sm:$0xff]
  %v25 = vld [vmem:[%s0 + $0x50] sm:$0xff]
  %v26 = vld [vmem:[%s0 + $0x58] sm:$0xff]
  %v27 = vld [vmem:[%s0 + $0x60] sm:$0xff]
  %v28 = vld [vmem:[%s0 + $0x68] sm:$0xff]
  %v29 = vld [vmem:[%s0 + $0x70] sm:$0xff]
  %v30 = vld [vmem:[%s0 + $0x78] sm:$0xff]
  %v31 = vld [vmem:[%s0 + $0x80] sm:$0xff]
  %v32 = vld [vmem:[%s0 + $0x88] sm:$0xff]
  %v33 = vld [vmem:[%s0 + $0x90] sm:$0xff]
  %v34 = vld [vmem:[%s0 + $0x98] sm:$0xff]
  %v35 = vld [vmem:[%s0 + $0xa0] sm:$0xff]
  %v36 = vld [vmem:[%s0 + $0xa8] sm:$0xff]
  %v37 = vld [vmem:[%s0 + $0xb0] sm:$0xff]
  %v38 = vld [vmem:[%s0 + $0xb8] sm:$0xff]
  %v39 = vld [vmem:[%s0 + $0xc0] sm:$0xff]
  %v40 = vld [vmem:[%s0 + $0xc8] sm:$0xff]
  %v41 = vld [vmem:[%s0 + $0xd0] sm:$0xff]
  %v42 = vld [vmem:[%s0 + $0xd8] sm:$0xff]
  %v43 = vld [vmem:[%s0 + $0xe0] sm:$0xff]
  %v44 = vld [vmem:[%s0 + $0xe8] sm:$0xff]
  %v45 = vld [vmem:[%s0 + $0xf0] sm:$0xff]
  %v46 = vld [vmem:[%s0 + $0xf8] sm:$0xff]
  %v47 = vld [vmem:[%s0 + $0x100] sm:$0xff]
  %v48 = vld [vmem:[%s0 + $0x108] sm:$0xff]
  %v49 = vld [vmem:[%s0 + $0x110] sm:$0xff]
  %v50 = vld [vmem:[%s0 + $0x118] sm:$0xff]
  %v51 = vld [vmem:[%s0 + $0x120] sm:$0xff]
  %v52 = vld [vmem:[%s0 + $0x128] sm:$0xff]
  %v53 = vld [vmem:[%s0 + $0x130] sm:$0xff]
  %v54 = vld [vmem:[%s0 + $0x138] sm:$0xff]
  %v55 = vld [vmem:[%s0 + $0x140] sm:$0xff]
  %v56 = vld [vmem:[%s0 + $0x148] sm:$0xff]
  %v57 = vld [vmem:[%s0 + $0x150] sm:$0xff]
  %v58 = vld [vmem:[%s0 + $0x158] sm:$0xff]
  %v59 = vld [vmem:[%s0 + $0x160] sm:$0xff]
  %v60 = vld [vmem:[%s0 + $0x168] sm:$0xff]
  %v61 = vld [vmem:[%s0 + $0x170] sm:$0xff]
  %v62 = vld [vmem:[%s0 + $0x178] sm:$0xff]
  %v63 = vld [vmem:[%s0 + $0x180] sm:$0xff]
  %v64 = vld [vmem:[%s0 + $0x188] sm:$0xff]
  %v65 = vld [vmem:[%s0 + $0x190] sm:$0xff]
  %v66 = vld [vmem:[%s0 + $0x198] sm:$0xff]
  %v67 = vld [vmem:[%s0 + $0x1a0] sm:$0xff]
  %v68 = vld [vmem:[%s0 + $0x1a8] sm:$0xff]
  %v69 = vld [vmem:[%s0 + $0x1b0] sm:$0xff]
  %v70 = vld [vmem:[%s0 + $0x1b8] sm:$0xff]
  %v71 = vld [vmem:[%s0 + $0x1c0] sm:$0xff]
  %v72 = vld [vmem:[%s0 + $0x1c8] sm:$0xff]
  %v73 = vld [vmem:[%s0 + $0x1d0] sm:$0xff]
  %v74 = vld [vmem:[%s0 + $0x1d8] sm:$0xff]
  %v75 = vld [vmem:[%s0 + $0x1e0] sm:$0xff]
  %v76 = vld [vmem:[%s0 + $0x1e8] sm:$0xff]
  %v77 = vld [vmem:[%s0 + $0x1f0] sm:$0xff]
  %v78 = vld [vmem:[%s0 + $0x1f8] sm:$0xff]
  %v79 = vld [vmem:[%s0 + $0x200] sm:$0xff]
  %v80 = vld [vmem:[%s0 + $0x208] sm:$0xff]
  %v81 = vld [vmem:[%s0 + $0x210] sm:$0xff]
  %v82 = vld [vmem:[%s0 + $0x218] sm:$0xff]
  %v83 = vld [vmem:[%s0 + $0x220] sm:$0xff]
  %v84 = vld [vmem:[%s0 + $0x228] sm:$0xff]
  %v85 = vld [vmem:[%s0 + $0x230] sm:$0xff]
  %v86 = vld [vmem:[%s0 + $0x238] sm:$0xff]
  %v87 = vld [vmem:[%s0 + $0x240] sm:$0xff]
  %v88 = vld [vmem:[%s0 + $0x248] sm:$0xff]
  %v89 = vld [vmem:[%s0 + $0x250] sm:$0xff]
  %v90 = vld [vmem:[%s0 + $0x258] sm:$0xff]
  %v91 = vld [vmem:[%s0 + $0x260] sm:$0xff]
  %v92 = vld [vmem:[%s0 + $0x268] sm:$0xff]
  %v93 = vld [vmem:[%s0 + $0x270] sm:$0xff]
  %v94 = vld [vmem:[%s0 + $0x278] sm:$0xff]
  %v95 = vld [vmem:[%s0 + $0x280] sm:$0xff]
  %v96 = vld [vmem:[%s0 + $0x288] sm:$0xff]
  %v97 = vld [vmem:[%s0 + $0x290] sm:$0xff]
  %v98 = vld [vmem:[%s0 + $0x298] sm:$0xff]
  %v99 = vld [vmem:[%s0 + $0x2a0] sm:$0xff]
  %v100 = vld [vmem:[%s0 + $0x2a8] sm:$0xff]
  %v101 = vld [vmem:[%s0 + $0x2b0] sm:$0xff]
  %v102 = vld [vmem:[%s0 + $0x2b8] sm:$0xff]
  %v103 = vld [vmem:[%s0 + $0x2c0] sm:$0xff]
  %v104 = vld [vmem:[%s0 + $0x2c8] sm:$0xff]
  %v105 = vld [vmem:[%s0 + $0x2d0] sm:$0xff]
  %v106 = vld [vmem:[%s0 + $0x2d8] sm:$0xff]
  %v107 = vld [vmem:[%s0 + $0x2e0] sm:$0xff]
  %v108 = vld [vmem:[%s0 + $0x2e8] sm:$0xff]
  %v109 = vld [vmem:[%s0 + $0x2f0] sm:$0xff]
  %v110 = vld [vmem:[%s0 + $0x2f8] sm:$0xff]
  %v111 = vld [vmem:[%s0 + $0x300] sm:$0xff]
  %v112 = vld [vmem:[%s0 + $0x308] sm:$0xff]
  %v113 = vld [vmem:[%s0 + $0x310] sm:$0xff]
  %v114 = vld [vmem:[%s0 + $0x318] sm:$0xff]
  %v115 = vld [vmem:[%s0 + $0x320] sm:$0xff]
  %v116 = vld [vmem:[%s0 + $0x328] sm:$0xff]
  %v117 = vld [vmem:[%s0 + $0x330] sm:$0xff]
  %v118 = vld [vmem:[%s0 + $0x338] sm:$0xff]
  %v119 = vld [vmem:[%s1] sm:$0xf]
  %v120 = vld [vmem:[%s1 + $0x4] sm:$0xf]
  %v121 = vld [vmem:[%s1 + $0x8] sm:$0xf]
  %v122 = vld [vmem:[%s1 + $0xc] sm:$0xf]
  %v123 = vld [vmem:[%s1 + $0x10] sm:$0xf]
  %v124 = vld [vmem:[%s1 + $0x14] sm:$0xf]
  %v125 = vld [vmem:[%s1 + $0x18] sm:$0xf]
  %v126 = vld [vmem:[%s1 + $0x1c] sm:$0xf]
  %v127 = vld [vmem:[%s1 + $0x20] sm:$0xf]
  %v128 = vld [vmem:[%s1 + $0x24] sm:$0xf]
  %v129 = vld [vmem:[%s1 + $0x28] sm:$0xf]
  %v130 = vld [vmem:[%s1 + $0x2c] sm:$0xf]
  %v131 = vld [vmem:[%s1 + $0x30] sm:$0xf]
  %v132 = vld [vmem:[%s1 + $0x34] sm:$0xf]
  %v133 = vld [vmem:[%s1 + $0x38] sm:$0xf]
  %v134 = vld [vmem:[%s1 + $0x3c] sm:$0xf]
  %v135 = vld [vmem:[%s1 + $0x40] sm:$0xf]
  %v136 = vld [vmem:[%s1 + $0x44] sm:$0xf]
  %v137 = vld [vmem:[%s1 + $0x48] sm:$0xf]
  %v138 = vld [vmem:[%s1 + $0x4c] sm:$0xf]
  %v139 = vld [vmem:[%s1 + $0x50] sm:$0xf]
  %v140 = vld [vmem:[%s1 + $0x54] sm:$0xf]
  %v141 = vld [vmem:[%s1 + $0x58] sm:$0xf]
  %v142 = vld [vmem:[%s1 + $0x5c] sm:$0xf]
  %v143 = vld [vmem:[%s1 + $0x60] sm:$0xf]
  %v144 = vld [vmem:[%s1 + $0x64] sm:$0xf]
  %v145 = vld [vmem:[%s1 + $0x68] sm:$0xf]
  %v146 = vld [vmem:[%s1 + $0x6c] sm:$0xf]
  %v147 = vld [vmem:[%s1 + $0x70] sm:$0xf]
  %v148 = vld [vmem:[%s1 + $0x74] sm:$0xf]
  %v149 = vld [vmem:[%s1 + $0x78] sm:$0xf]
  %v150 = vld [vmem:[%s1 + $0x7c] sm:$0xf]
  %v151 = vld [vmem:[%s1 + $0x80] sm:$0xf]
  %v152 = vld [vmem:[%s1 + $0x84] sm:$0xf]
  %v153 = vld [vmem:[%s1 + $0x88] sm:$0xf]
  %v154 = vld [vmem:[%s1 + $0x8c] sm:$0xf]
  %v155 = vld [vmem:[%s1 + $0x90] sm:$0xf]
  %v156 = vld [vmem:[%s1 + $0x94] sm:$0xf]
  %v157 = vld [vmem:[%s1 + $0x98] sm:$0xf]
  %v158 = vld [vmem:[%s1 + $0x9c] sm:$0xf]
  %v159 = vld [vmem:[%s1 + $0xa0] sm:$0xf]
  %v160 = vld [vmem:[%s1 + $0xa4] sm:$0xf]
  %v161 = vld [vmem:[%s1 + $0xa8] sm:$0xf]
  %v162 = vld [vmem:[%s1 + $0xac] sm:$0xf]
  %v163 = vld [vmem:[%s1 + $0xb0] sm:$0xf]
  %v164 = vld [vmem:[%s1 + $0xb4] sm:$0xf]
  %v165 = vld [vmem:[%s1 + $0xb8] sm:$0xf]
  %v166 = vld [vmem:[%s1 + $0xbc] sm:$0xf]
  %v167 = vld [vmem:[%s1 + $0xc0] sm:$0xf]
  %v168 = vld [vmem:[%s1 + $0xc4] sm:$0xf]
  %v273 = vunpack.c.l.b16 %v15
  %v274 = vunpack.c.h.b16 %v15
  %v275 = vunpack.c.l.b16 %v16
  %v276 = vunpack.c.h.b16 %v16
  %v277 = vunpack.c.l.b16 %v17
  %v278 = vunpack.c.h.b16 %v17
  %v279 = vunpack.c.l.b16 %v18
  %v280 = vunpack.c.h.b16 %v18
  %v281 = vunpack.c.l.b16 %v19
  %v282 = vunpack.c.h.b16 %v19
  %v283 = vunpack.c.l.b16 %v20
  %v284 = vunpack.c.h.b16 %v20
  %v285 = vunpack.c.l.b16 %v21
  %v286 = vunpack.c.h.b16 %v21
  %v287 = vunpack.c.l.b16 %v22
  %v288 = vunpack.c.h.b16 %v22
  %v289 = vunpack.c.l.b16 %v23
  %v290 = vunpack.c.h.b16 %v23
  %v291 = vunpack.c.l.b16 %v24
  %v292 = vunpack.c.h.b16 %v24
  %v293 = vunpack.c.l.b16 %v25
  %v294 = vunpack.c.h.b16 %v25
  %v295 = vunpack.c.l.b16 %v26
  %v296 = vunpack.c.h.b16 %v26
  %v297 = vunpack.c.l.b16 %v27
  %v298 = vunpack.c.h.b16 %v27
  %v299 = vunpack.c.l.b16 %v28
  %v300 = vunpack.c.h.b16 %v28
  %v301 = vunpack.c.l.b16 %v29
  %v302 = vunpack.c.h.b16 %v29
  %v303 = vunpack.c.l.b16 %v30
  %v304 = vunpack.c.h.b16 %v30
  %v305 = vunpack.c.l.b16 %v31
  %v306 = vunpack.c.h.b16 %v31
  %v307 = vunpack.c.l.b16 %v32
  %v308 = vunpack.c.h.b16 %v32
  %v309 = vunpack.c.l.b16 %v33
  %v310 = vunpack.c.h.b16 %v33
  %v311 = vunpack.c.l.b16 %v34
  %v312 = vunpack.c.h.b16 %v34
  %v313 = vunpack.c.l.b16 %v35
  %v314 = vunpack.c.h.b16 %v35
  %v315 = vunpack.c.l.b16 %v36
  %v316 = vunpack.c.h.b16 %v36
  %v317 = vunpack.c.l.b16 %v37
  %v318 = vunpack.c.h.b16 %v37
  %v319 = vunpack.c.l.b16 %v38
  %v320 = vunpack.c.h.b16 %v38
  %v321 = vunpack.c.l.b16 %v39
  %v322 = vunpack.c.h.b16 %v39
  %v323 = vunpack.c.l.b16 %v40
  %v324 = vunpack.c.h.b16 %v40
  %v325 = vunpack.c.l.b16 %v41
  %v326 = vunpack.c.h.b16 %v41
  %v327 = vunpack.c.l.b16 %v42
  %v328 = vunpack.c.h.b16 %v42
  %v329 = vunpack.c.l.b16 %v43
  %v330 = vunpack.c.h.b16 %v43
  %v331 = vunpack.c.l.b16 %v44
  %v332 = vunpack.c.h.b16 %v44
  %v333 = vunpack.c.l.b16 %v45
  %v334 = vunpack.c.h.b16 %v45
  %v335 = vunpack.c.l.b16 %v46
  %v336 = vunpack.c.h.b16 %v46
  %v337 = vunpack.c.l.b16 %v47
  %v338 = vunpack.c.h.b16 %v47
  %v339 = vunpack.c.l.b16 %v48
  %v340 = vunpack.c.h.b16 %v48
  %v341 = vunpack.c.l.b16 %v49
  %v342 = vunpack.c.h.b16 %v49
  %v343 = vunpack.c.l.b16 %v50
  %v344 = vunpack.c.h.b16 %v50
  %v345 = vunpack.c.l.b16 %v51
  %v346 = vunpack.c.h.b16 %v51
  %v347 = vunpack.c.l.b16 %v52
  %v348 = vunpack.c.h.b16 %v52
  %v349 = vunpack.c.l.b16 %v53
  %v350 = vunpack.c.h.b16 %v53
  %v351 = vunpack.c.l.b16 %v54
  %v352 = vunpack.c.h.b16 %v54
  %v353 = vunpack.c.l.b16 %v55
  %v354 = vunpack.c.h.b16 %v55
  %v355 = vunpack.c.l.b16 %v56
  %v356 = vunpack.c.h.b16 %v56
  %v357 = vunpack.c.l.b16 %v57
  %v358 = vunpack.c.h.b16 %v57
  %v359 = vunpack.c.l.b16 %v58
  %v360 = vunpack.c.h.b16 %v58
  %v361 = vunpack.c.l.b16 %v59
  %v362 = vunpack.c.h.b16 %v59
  %v363 = vunpack.c.l.b16 %v60
  %v364 = vunpack.c.h.b16 %v60
  %v365 = vunpack.c.l.b16 %v61
  %v366 = vunpack.c.h.b16 %v61
  %v367 = vunpack.c.l.b16 %v62
  %v368 = vunpack.c.h.b16 %v62
  %v369 = vunpack.c.l.b16 %v63
  %v370 = vunpack.c.h.b16 %v63
  %v371 = vunpack.c.l.b16 %v64
  %v372 = vunpack.c.h.b16 %v64
  %v373 = vunpack.c.l.b16 %v65
  %v374 = vunpack.c.h.b16 %v65
  %v375 = vunpack.c.l.b16 %v66
  %v376 = vunpack.c.h.b16 %v66
  %v377 = vunpack.c.l.b16 %v67
  %v378 = vunpack.c.h.b16 %v67
  %v379 = vunpack.c.l.b16 %v68
  %v380 = vunpack.c.h.b16 %v68
  %v381 = vunpack.c.l.b16 %v69
  %v382 = vunpack.c.h.b16 %v69
  %v383 = vunpack.c.l.b16 %v70
  %v384 = vunpack.c.h.b16 %v70
  %v385 = vunpack.c.l.b16 %v71
  %v386 = vunpack.c.h.b16 %v71
  %v387 = vunpack.c.l.b16 %v72
  %v388 = vunpack.c.h.b16 %v72
  %v389 = vunpack.c.l.b16 %v73
  %v390 = vunpack.c.h.b16 %v73
  %v391 = vunpack.c.l.b16 %v74
  %v392 = vunpack.c.h.b16 %v74
  %v393 = vunpack.c.l.b16 %v75
  %v394 = vunpack.c.h.b16 %v75
  %v395 = vunpack.c.l.b16 %v76
  %v396 = vunpack.c.h.b16 %v76
  %v397 = vunpack.c.l.b16 %v77
  %v398 = vunpack.c.h.b16 %v77
  %v399 = vunpack.c.l.b16 %v78
  %v400 = vunpack.c.h.b16 %v78
  %v401 = vunpack.c.l.b16 %v79
  %v402 = vunpack.c.h.b16 %v79
  %v403 = vunpack.c.l.b16 %v80
  %v404 = vunpack.c.h.b16 %v80
  %v405 = vunpack.c.l.b16 %v81
  %v406 = vunpack.c.h.b16 %v81
  %v407 = vunpack.c.l.b16 %v82
  %v408 = vunpack.c.h.b16 %v82
  %v409 = vunpack.c.l.b16 %v83
  %v410 = vunpack.c.h.b16 %v83
  %v411 = vunpack.c.l.b16 %v84
  %v412 = vunpack.c.h.b16 %v84
  %v413 = vunpack.c.l.b16 %v85
  %v414 = vunpack.c.h.b16 %v85
  %v415 = vunpack.c.l.b16 %v86
  %v416 = vunpack.c.h.b16 %v86
  %v417 = vunpack.c.l.b16 %v87
  %v418 = vunpack.c.h.b16 %v87
  %v419 = vunpack.c.l.b16 %v88
  %v420 = vunpack.c.h.b16 %v88
  %v421 = vunpack.c.l.b16 %v89
  %v422 = vunpack.c.h.b16 %v89
  %v423 = vunpack.c.l.b16 %v90
  %v424 = vunpack.c.h.b16 %v90
  %v425 = vunpack.c.l.b16 %v91
  %v426 = vunpack.c.h.b16 %v91
  %v427 = vunpack.c.l.b16 %v92
  %v428 = vunpack.c.h.b16 %v92
  %v429 = vunpack.c.l.b16 %v93
  %v430 = vunpack.c.h.b16 %v93
  %v431 = vunpack.c.l.b16 %v94
  %v432 = vunpack.c.h.b16 %v94
  %v433 = vunpack.c.l.b16 %v95
  %v434 = vunpack.c.h.b16 %v95
  %v435 = vunpack.c.l.b16 %v96
  %v436 = vunpack.c.h.b16 %v96
  %v437 = vunpack.c.l.b16 %v97
  %v438 = vunpack.c.h.b16 %v97
  %v439 = vunpack.c.l.b16 %v98
  %v440 = vunpack.c.h.b16 %v98
  %v441 = vunpack.c.l.b16 %v99
  %v442 = vunpack.c.h.b16 %v99
  %v443 = vunpack.c.l.b16 %v100
  %v444 = vunpack.c.h.b16 %v100
  %v445 = vunpack.c.l.b16 %v101
  %v446 = vunpack.c.h.b16 %v101
  %v447 = vunpack.c.l.b16 %v102
  %v448 = vunpack.c.h.b16 %v102
  %v449 = vunpack.c.l.b16 %v103
  %v450 = vunpack.c.h.b16 %v103
  %v451 = vunpack.c.l.b16 %v104
  %v452 = vunpack.c.h.b16 %v104
  %v453 = vunpack.c.l.b16 %v105
  %v454 = vunpack.c.h.b16 %v105
  %v455 = vunpack.c.l.b16 %v106
  %v456 = vunpack.c.h.b16 %v106
  %v457 = vunpack.c.l.b16 %v107
  %v458 = vunpack.c.h.b16 %v107
  %v459 = vunpack.c.l.b16 %v108
  %v460 = vunpack.c.h.b16 %v108
  %v461 = vunpack.c.l.b16 %v109
  %v462 = vunpack.c.h.b16 %v109
  %v463 = vunpack.c.l.b16 %v110
  %v464 = vunpack.c.h.b16 %v110
  %v465 = vunpack.c.l.b16 %v111
  %v466 = vunpack.c.h.b16 %v111
  %v467 = vunpack.c.l.b16 %v112
  %v468 = vunpack.c.h.b16 %v112
  %v469 = vunpack.c.l.b16 %v113
  %v470 = vunpack.c.h.b16 %v113
  %v471 = vunpack.c.l.b16 %v114
  %v472 = vunpack.c.h.b16 %v114
  %v473 = vunpack.c.l.b16 %v115
  %v474 = vunpack.c.h.b16 %v115
  %v475 = vunpack.c.l.b16 %v116
  %v476 = vunpack.c.h.b16 %v116
  %v477 = vunpack.c.l.b16 %v117
  %v478 = vunpack.c.h.b16 %v117
  %v479 = vunpack.c.l.b16 %v118
  %v480 = vunpack.c.h.b16 %v118
  %v481 = vpack.c.b16 %v277, %v273
  %v482 = vpack.c.b16 %v278, %v274
  %v483 = vpack.c.b16 %v279, %v275
  %v484 = vpack.c.b16 %v280, %v276
  %v485 = vpack.c.b16 %v285, %v281
  %v486 = vpack.c.b16 %v286, %v282
  %v487 = vpack.c.b16 %v287, %v283
  %v488 = vpack.c.b16 %v288, %v284
  %v489 = vpack.c.b16 %v293, %v289
  %v490 = vpack.c.b16 %v294, %v290
  %v491 = vpack.c.b16 %v295, %v291
  %v492 = vpack.c.b16 %v296, %v292
  %v493 = vpack.c.b16 %v301, %v297
  %v494 = vpack.c.b16 %v302, %v298
  %v495 = vpack.c.b16 %v303, %v299
  %v496 = vpack.c.b16 %v304, %v300
  %v497 = vpack.c.b16 %v309, %v305
  %v498 = vpack.c.b16 %v310, %v306
  %v499 = vpack.c.b16 %v311, %v307
  %v500 = vpack.c.b16 %v312, %v308
  %v501 = vpack.c.b16 %v317, %v313
  %v502 = vpack.c.b16 %v318, %v314
  %v503 = vpack.c.b16 %v319, %v315
  %v504 = vpack.c.b16 %v320, %v316
  %v505 = vpack.c.b16 %v325, %v321
  %v506 = vpack.c.b16 %v326, %v322
  %v507 = vpack.c.b16 %v327, %v323
  %v508 = vpack.c.b16 %v328, %v324
  %v509 = vpack.c.b16 %v333, %v329
  %v510 = vpack.c.b16 %v334, %v330
  %v511 = vpack.c.b16 %v335, %v331
  %v512 = vpack.c.b16 %v336, %v332
  %v513 = vpack.c.b16 %v341, %v337
  %v514 = vpack.c.b16 %v342, %v338
  %v515 = vpack.c.b16 %v343, %v339
  %v516 = vpack.c.b16 %v344, %v340
  %v517 = vpack.c.b16 %v349, %v345
  %v518 = vpack.c.b16 %v350, %v346
  %v519 = vpack.c.b16 %v351, %v347
  %v520 = vpack.c.b16 %v352, %v348
  %v521 = vpack.c.b16 %v357, %v353
  %v522 = vpack.c.b16 %v358, %v354
  %v523 = vpack.c.b16 %v359, %v355
  %v524 = vpack.c.b16 %v360, %v356
  %v525 = vpack.c.b16 %v365, %v361
  %v526 = vpack.c.b16 %v366, %v362
  %v527 = vpack.c.b16 %v367, %v363
  %v528 = vpack.c.b16 %v368, %v364
  %v529 = vpack.c.b16 %v373, %v369
  %v530 = vpack.c.b16 %v374, %v370
  %v531 = vpack.c.b16 %v375, %v371
  %v532 = vpack.c.b16 %v376, %v372
  %v533 = vpack.c.b16 %v381, %v377
  %v534 = vpack.c.b16 %v382, %v378
  %v535 = vpack.c.b16 %v383, %v379
  %v536 = vpack.c.b16 %v384, %v380
  %v537 = vpack.c.b16 %v389, %v385
  %v538 = vpack.c.b16 %v390, %v386
  %v539 = vpack.c.b16 %v391, %v387
  %v540 = vpack.c.b16 %v392, %v388
  %v541 = vpack.c.b16 %v397, %v393
  %v542 = vpack.c.b16 %v398, %v394
  %v543 = vpack.c.b16 %v399, %v395
  %v544 = vpack.c.b16 %v400, %v396
  %v545 = vpack.c.b16 %v405, %v401
  %v546 = vpack.c.b16 %v406, %v402
  %v547 = vpack.c.b16 %v407, %v403
  %v548 = vpack.c.b16 %v408, %v404
  %v549 = vpack.c.b16 %v413, %v409
  %v550 = vpack.c.b16 %v414, %v410
  %v551 = vpack.c.b16 %v415, %v411
  %v552 = vpack.c.b16 %v416, %v412
  %v553 = vpack.c.b16 %v421, %v417
  %v554 = vpack.c.b16 %v422, %v418
  %v555 = vpack.c.b16 %v423, %v419
  %v556 = vpack.c.b16 %v424, %v420
  %v557 = vpack.c.b16 %v429, %v425
  %v558 = vpack.c.b16 %v430, %v426
  %v559 = vpack.c.b16 %v431, %v427
  %v560 = vpack.c.b16 %v432, %v428
  %v561 = vpack.c.b16 %v437, %v433
  %v562 = vpack.c.b16 %v438, %v434
  %v563 = vpack.c.b16 %v439, %v435
  %v564 = vpack.c.b16 %v440, %v436
  %v565 = vpack.c.b16 %v445, %v441
  %v566 = vpack.c.b16 %v446, %v442
  %v567 = vpack.c.b16 %v447, %v443
  %v568 = vpack.c.b16 %v448, %v444
  %v569 = vpack.c.b16 %v453, %v449
  %v570 = vpack.c.b16 %v454, %v450
  %v571 = vpack.c.b16 %v455, %v451
  %v572 = vpack.c.b16 %v456, %v452
  %v573 = vpack.c.b16 %v461, %v457
  %v574 = vpack.c.b16 %v462, %v458
  %v575 = vpack.c.b16 %v463, %v459
  %v576 = vpack.c.b16 %v464, %v460
  %v577 = vpack.c.b16 %v469, %v465
  %v578 = vpack.c.b16 %v470, %v466
  %v579 = vpack.c.b16 %v471, %v467
  %v580 = vpack.c.b16 %v472, %v468
  %v581 = vpack.c.b16 %v477, %v473
  %v582 = vpack.c.b16 %v478, %v474
  %v583 = vpack.c.b16 %v479, %v475
  %v584 = vpack.c.b16 %v480, %v476
  %v713 = vunpack.c.l.b16 %v119
  %v714 = vunpack.c.l.b16 %v120
  %v715 = vunpack.c.l.b16 %v121
  %v716 = vunpack.c.l.b16 %v122
  %v717 = vunpack.c.l.b16 %v123
  %v718 = vunpack.c.l.b16 %v124
  %v719 = vunpack.c.l.b16 %v125
  %v720 = vunpack.c.l.b16 %v126
  %v721 = vunpack.c.l.b16 %v127
  %v722 = vunpack.c.l.b16 %v128
  %v723 = vunpack.c.l.b16 %v129
  %v724 = vunpack.c.l.b16 %v130
  %v725 = vunpack.c.l.b16 %v131
  %v726 = vunpack.c.l.b16 %v132
  %v727 = vunpack.c.l.b16 %v133
  %v728 = vunpack.c.l.b16 %v134
  %v729 = vunpack.c.l.b16 %v135
  %v730 = vunpack.c.l.b16 %v136
  %v731 = vunpack.c.l.b16 %v137
  %v732 = vunpack.c.l.b16 %v138
  %v733 = vunpack.c.l.b16 %v139
  %v734 = vunpack.c.l.b16 %v140
  %v735 = vunpack.c.l.b16 %v141
  %v736 = vunpack.c.l.b16 %v142
  %v737 = vunpack.c.l.b16 %v143
  %v738 = vunpack.c.l.b16 %v144
  %v739 = vunpack.c.l.b16 %v145
  %v740 = vunpack.c.l.b16 %v146
  %v741 = vunpack.c.l.b16 %v147
  %v742 = vunpack.c.l.b16 %v148
  %v743 = vunpack.c.l.b16 %v149
  %v744 = vunpack.c.l.b16 %v150
  %v745 = vunpack.c.l.b16 %v151
  %v746 = vunpack.c.l.b16 %v152
  %v747 = vunpack.c.l.b16 %v153
  %v748 = vunpack.c.l.b16 %v154
  %v749 = vunpack.c.l.b16 %v155
  %v750 = vunpack.c.l.b16 %v156
  %v751 = vunpack.c.l.b16 %v157
  %v752 = vunpack.c.l.b16 %v158
  %v753 = vunpack.c.l.b16 %v159
  %v754 = vunpack.c.l.b16 %v160
  %v755 = vunpack.c.l.b16 %v161
  %v756 = vunpack.c.l.b16 %v162
  %v757 = vunpack.c.l.b16 %v163
  %v758 = vunpack.c.l.b16 %v164
  %v759 = vunpack.c.l.b16 %v165
  %v760 = vunpack.c.l.b16 %v166
  %v761 = vunpack.c.l.b16 %v167
  %v762 = vunpack.c.l.b16 %v168
  %v763 = vpack.c.b16 %v714, %v713
  %v764 = vpack.c.b16 %v716, %v715
  %v765 = vpack.c.b16 %v718, %v717
  %v766 = vpack.c.b16 %v720, %v719
  %v767 = vpack.c.b16 %v722, %v721
  %v768 = vpack.c.b16 %v724, %v723
  %v769 = vpack.c.b16 %v726, %v725
  %v770 = vpack.c.b16 %v728, %v727
  %v771 = vpack.c.b16 %v730, %v729
  %v772 = vpack.c.b16 %v732, %v731
  %v773 = vpack.c.b16 %v734, %v733
  %v774 = vpack.c.b16 %v736, %v735
  %v775 = vpack.c.b16 %v738, %v737
  %v776 = vpack.c.b16 %v740, %v739
  %v777 = vpack.c.b16 %v742, %v741
  %v778 = vpack.c.b16 %v744, %v743
  %v779 = vpack.c.b16 %v746, %v745
  %v780 = vpack.c.b16 %v748, %v747
  %v781 = vpack.c.b16 %v750, %v749
  %v782 = vpack.c.b16 %v752, %v751
  %v783 = vpack.c.b16 %v754, %v753
  %v784 = vpack.c.b16 %v756, %v755
  %v785 = vpack.c.b16 %v758, %v757
  %v786 = vpack.c.b16 %v760, %v759
  %v787 = vpack.c.b16 %v762, %v761
  %vm813 = vcmask 130048
  %v815 = vsel %vm813, %v484, 0
  %v818 = vsel %vm813, %v488, 0
  %v821 = vsel %vm813, %v492, 0
  %v824 = vsel %vm813, %v496, 0
  %v827 = vsel %vm813, %v500, 0
  %v830 = vsel %vm813, %v504, 0
  %v833 = vsel %vm813, %v508, 0
  %v836 = vsel %vm813, %v512, 0
  %v839 = vsel %vm813, %v516, 0
  %v842 = vsel %vm813, %v520, 0
  %v845 = vsel %vm813, %v524, 0
  %v848 = vsel %vm813, %v528, 0
  %v851 = vsel %vm813, %v532, 0
  %v854 = vsel %vm813, %v536, 0
  %v857 = vsel %vm813, %v540, 0
  %v860 = vsel %vm813, %v544, 0
  %v863 = vsel %vm813, %v548, 0
  %v866 = vsel %vm813, %v552, 0
  %v869 = vsel %vm813, %v556, 0
  %v872 = vsel %vm813, %v560, 0
  %v875 = vsel %vm813, %v564, 0
  %v878 = vsel %vm813, %v568, 0
  %v881 = vsel %vm813, %v572, 0
  %v884 = vsel %vm813, %v576, 0
  %v887 = vsel %vm813, %v580, 0
  %v890 = vsel %vm813, %v584, 0
  %892 = vmatprep.subr.bf16.mxu0 0
  %893 = vmatpush1.bf16.msra.mxu0 %v763
  %894 = vmatprep.subr.bf16.mxu0 0
  %895 = vmatpush1.bf16.msra.mxu0 %v764
  %896 = vmatprep.subr.bf16.mxu0 0
  %897 = vmatpush1.bf16.msra.mxu0 %v765
  %898 = vmatprep.subr.bf16.mxu0 0
  %899 = vmatpush1.bf16.msra.mxu0 %v766
  %900 = vmatprep.subr.bf16.mxu0 0
  %901 = vmatpush1.bf16.msra.mxu0 %v767
  %902 = vmatprep.subr.bf16.mxu0 0
  %903 = vmatpush1.bf16.msra.mxu0 %v768
  %904 = vmatprep.subr.bf16.mxu0 0
  %905 = vmatpush1.bf16.msra.mxu0 %v769
  %906 = vmatprep.subr.bf16.mxu0 0
  %907 = vmatpush1.bf16.msra.mxu0 %v770
  %908 = vmatprep.subr.bf16.mxu0 0
  %909 = vmatpush1.bf16.msra.mxu0 %v771
  %910 = vmatprep.subr.bf16.mxu0 0
  %911 = vmatpush1.bf16.msra.mxu0 %v772
  %912 = vmatprep.subr.bf16.mxu0 0
  %913 = vmatpush1.bf16.msra.mxu0 %v773
  %914 = vmatprep.subr.bf16.mxu0 0
  %915 = vmatpush1.bf16.msra.mxu0 %v774
  %916 = vmatprep.subr.bf16.mxu0 0
  %917 = vmatpush1.bf16.msra.mxu0 %v775
  %918 = vmatprep.subr.bf16.mxu0 0
  %919 = vmatpush1.bf16.msra.mxu0 %v776
  %920 = vmatprep.subr.bf16.mxu0 0
  %921 = vmatpush1.bf16.msra.mxu0 %v777
  %922 = vmatprep.subr.bf16.mxu0 0
  %923 = vmatpush1.bf16.msra.mxu0 %v778
  %924 = vmatprep.mubr.bf16.mxu0 %v482
  %925 = vmatmul.mubr.bf16.gmra.mrb[0].mxu0 %v481
  %v926 = vpop.f32.mrb[0].mxu0
  %v927 = vadd.f32 0.0, %v926
  %v928 = vpop.f32.mrb[0].mxu0
  %v929 = vpop.f32.mrb[0].mxu0
  %v930 = vadd.f32 0.0, %v929
  %v931 = vpop.f32.mrb[0].mxu0
  %932 = vmatprep.mubr.bf16.mxu0 %v486
  %933 = vmatmul.mubr.bf16.gmra.mrb[0].mxu0 %v485
  %v934 = vpop.f32.mrb[0].mxu0
  %v935 = vadd.f32 0.0, %v934
  %v936 = vpop.f32.mrb[0].mxu0
  %v937 = vpop.f32.mrb[0].mxu0
  %v938 = vadd.f32 0.0, %v937
  %v939 = vpop.f32.mrb[0].mxu0
  %940 = vmatprep.mubr.bf16.mxu0 %v490
  %941 = vmatmul.mubr.bf16.gmra.mrb[0].mxu0 %v489
  %v942 = vpop.f32.mrb[0].mxu0
  %v943 = vadd.f32 0.0, %v942
  %v944 = vpop.f32.mrb[0].mxu0
  %v945 = vpop.f32.mrb[0].mxu0
  %v946 = vadd.f32 0.0, %v945
  %v947 = vpop.f32.mrb[0].mxu0
  %948 = vmatprep.mubr.bf16.mxu0 %v494
  %949 = vmatmul.mubr.bf16.gmra.mrb[0].mxu0 %v493
  %v950 = vpop.f32.mrb[0].mxu0
  %v951 = vadd.f32 0.0, %v950
  %v952 = vpop.f32.mrb[0].mxu0
  %v953 = vpop.f32.mrb[0].mxu0
  %v954 = vadd.f32 0.0, %v953
  %v955 = vpop.f32.mrb[0].mxu0
  %956 = vmatprep.mubr.bf16.mxu0 %v498
  %957 = vmatmul.mubr.bf16.gmra.mrb[0].mxu0 %v497
  %v958 = vpop.f32.mrb[0].mxu0
  %v959 = vadd.f32 0.0, %v958
  %v960 = vpop.f32.mrb[0].mxu0
  %v961 = vpop.f32.mrb[0].mxu0
  %v962 = vadd.f32 0.0, %v961
  %v963 = vpop.f32.mrb[0].mxu0
  %964 = vmatprep.mubr.bf16.mxu0 %v502
  %965 = vmatmul.mubr.bf16.gmra.mrb[0].mxu0 %v501
  %v966 = vpop.f32.mrb[0].mxu0
  %v967 = vadd.f32 0.0, %v966
  %v968 = vpop.f32.mrb[0].mxu0
  %v969 = vpop.f32.mrb[0].mxu0
  %v970 = vadd.f32 0.0, %v969
  %v971 = vpop.f32.mrb[0].mxu0
  %972 = vmatprep.mubr.bf16.mxu0 %v506
  %973 = vmatmul.mubr.bf16.gmra.mrb[0].mxu0 %v505
  %v974 = vpop.f32.mrb[0].mxu0
  %v975 = vadd.f32 0.0, %v974
  %v976 = vpop.f32.mrb[0].mxu0
  %v977 = vpop.f32.mrb[0].mxu0
  %v978 = vadd.f32 0.0, %v977
  %v979 = vpop.f32.mrb[0].mxu0
  %980 = vmatprep.mubr.bf16.mxu0 %v510
  %981 = vmatmul.mubr.bf16.gmra.mrb[0].mxu0 %v509
  %v982 = vpop.f32.mrb[0].mxu0
  %v983 = vadd.f32 0.0, %v982
  %v984 = vpop.f32.mrb[0].mxu0
  %v985 = vpop.f32.mrb[0].mxu0
  %v986 = vadd.f32 0.0, %v985
  %v987 = vpop.f32.mrb[0].mxu0
  %988 = vmatprep.mubr.bf16.mxu0 %v514
  %989 = vmatmul.mubr.bf16.gmra.mrb[0].mxu0 %v513
  %v990 = vpop.f32.mrb[0].mxu0
  %v991 = vadd.f32 0.0, %v990
  %v992 = vpop.f32.mrb[0].mxu0
  %v993 = vpop.f32.mrb[0].mxu0
  %v994 = vadd.f32 0.0, %v993
  %v995 = vpop.f32.mrb[0].mxu0
  %996 = vmatprep.mubr.bf16.mxu0 %v518
  %997 = vmatmul.mubr.bf16.gmra.mrb[0].mxu0 %v517
  %v998 = vpop.f32.mrb[0].mxu0
  %v999 = vadd.f32 0.0, %v998
  %v1000 = vpop.f32.mrb[0].mxu0
  %v1001 = vpop.f32.mrb[0].mxu0
  %v1002 = vadd.f32 0.0, %v1001
  %v1003 = vpop.f32.mrb[0].mxu0
  %1004 = vmatprep.mubr.bf16.mxu0 %v522
  %1005 = vmatmul.mubr.bf16.gmra.mrb[0].mxu0 %v521
  %v1006 = vpop.f32.mrb[0].mxu0
  %v1007 = vadd.f32 0.0, %v1006
  %v1008 = vpop.f32.mrb[0].mxu0
  %v1009 = vpop.f32.mrb[0].mxu0
  %v1010 = vadd.f32 0.0, %v1009
  %v1011 = vpop.f32.mrb[0].mxu0
  %1012 = vmatprep.mubr.bf16.mxu0 %v526
  %1013 = vmatmul.mubr.bf16.gmra.mrb[0].mxu0 %v525
  %v1014 = vpop.f32.mrb[0].mxu0
  %v1015 = vadd.f32 0.0, %v1014
  %v1016 = vpop.f32.mrb[0].mxu0
  %v1017 = vpop.f32.mrb[0].mxu0
  %v1018 = vadd.f32 0.0, %v1017
  %v1019 = vpop.f32.mrb[0].mxu0
  %1020 = vmatprep.mubr.bf16.mxu0 %v530
  %1021 = vmatmul.mubr.bf16.gmra.mrb[0].mxu0 %v529
  %v1022 = vpop.f32.mrb[0].mxu0
  %v1023 = vadd.f32 0.0, %v1022
  %v1024 = vpop.f32.mrb[0].mxu0
  %v1025 = vpop.f32.mrb[0].mxu0
  %v1026 = vadd.f32 0.0, %v1025
  %v1027 = vpop.f32.mrb[0].mxu0
  %1028 = vmatprep.mubr.bf16.mxu0 %v534
  %1029 = vmatmul.mubr.bf16.gmra.mrb[0].mxu0 %v533
  %v1030 = vpop.f32.mrb[0].mxu0
  %v1031 = vadd.f32 0.0, %v1030
  %v1032 = vpop.f32.mrb[0].mxu0
  %v1033 = vpop.f32.mrb[0].mxu0
  %v1034 = vadd.f32 0.0, %v1033
  %v1035 = vpop.f32.mrb[0].mxu0
  %1036 = vmatprep.mubr.bf16.mxu0 %v538
  %1037 = vmatmul.mubr.bf16.gmra.mrb[0].mxu0 %v537
  %v1038 = vpop.f32.mrb[0].mxu0
  %v1039 = vadd.f32 0.0, %v1038
  %v1040 = vpop.f32.mrb[0].mxu0
  %v1041 = vpop.f32.mrb[0].mxu0
  %v1042 = vadd.f32 0.0, %v1041
  %v1043 = vpop.f32.mrb[0].mxu0
  %1044 = vmatprep.mubr.bf16.mxu0 %v542
  %1045 = vmatmul.mubr.bf16.gmra.mrb[0].mxu0 %v541
  %v1046 = vpop.f32.mrb[0].mxu0
  %v1047 = vadd.f32 0.0, %v1046
  %v1048 = vpop.f32.mrb[0].mxu0
  %v1049 = vpop.f32.mrb[0].mxu0
  %v1050 = vadd.f32 0.0, %v1049
  %v1051 = vpop.f32.mrb[0].mxu0
  %1052 = vmatprep.mubr.bf16.mxu0 %v546
  %1053 = vmatmul.mubr.bf16.gmra.mrb[0].mxu0 %v545
  %v1054 = vpop.f32.mrb[0].mxu0
  %v1055 = vadd.f32 0.0, %v1054
  %v1056 = vpop.f32.mrb[0].mxu0
  %v1057 = vpop.f32.mrb[0].mxu0
  %v1058 = vadd.f32 0.0, %v1057
  %v1059 = vpop.f32.mrb[0].mxu0
  %1060 = vmatprep.mubr.bf16.mxu0 %v550
  %1061 = vmatmul.mubr.bf16.gmra.mrb[0].mxu0 %v549
  %v1062 = vpop.f32.mrb[0].mxu0
  %v1063 = vadd.f32 0.0, %v1062
  %v1064 = vpop.f32.mrb[0].mxu0
  %v1065 = vpop.f32.mrb[0].mxu0
  %v1066 = vadd.f32 0.0, %v1065
  %v1067 = vpop.f32.mrb[0].mxu0
  %1068 = vmatprep.mubr.bf16.mxu0 %v554
  %1069 = vmatmul.mubr.bf16.gmra.mrb[0].mxu0 %v553
  %v1070 = vpop.f32.mrb[0].mxu0
  %v1071 = vadd.f32 0.0, %v1070
  %v1072 = vpop.f32.mrb[0].mxu0
  %v1073 = vpop.f32.mrb[0].mxu0
  %v1074 = vadd.f32 0.0, %v1073
  %v1075 = vpop.f32.mrb[0].mxu0
  %1076 = vmatprep.mubr.bf16.mxu0 %v558
  %1077 = vmatmul.mubr.bf16.gmra.mrb[0].mxu0 %v557
  %v1078 = vpop.f32.mrb[0].mxu0
  %v1079 = vadd.f32 0.0, %v1078
  %v1080 = vpop.f32.mrb[0].mxu0
  %v1081 = vpop.f32.mrb[0].mxu0
  %v1082 = vadd.f32 0.0, %v1081
  %v1083 = vpop.f32.mrb[0].mxu0
  %1084 = vmatprep.mubr.bf16.mxu0 %v562
  %1085 = vmatmul.mubr.bf16.gmra.mrb[0].mxu0 %v561
  %v1086 = vpop.f32.mrb[0].mxu0
  %v1087 = vadd.f32 0.0, %v1086
  %v1088 = vpop.f32.mrb[0].mxu0
  %v1089 = vpop.f32.mrb[0].mxu0
  %v1090 = vadd.f32 0.0, %v1089
  %v1091 = vpop.f32.mrb[0].mxu0
  %1092 = vmatprep.mubr.bf16.mxu0 %v566
  %1093 = vmatmul.mubr.bf16.gmra.mrb[0].mxu0 %v565
  %v1094 = vpop.f32.mrb[0].mxu0
  %v1095 = vadd.f32 0.0, %v1094
  %v1096 = vpop.f32.mrb[0].mxu0
  %v1097 = vpop.f32.mrb[0].mxu0
  %v1098 = vadd.f32 0.0, %v1097
  %v1099 = vpop.f32.mrb[0].mxu0
  %1100 = vmatprep.mubr.bf16.mxu0 %v570
  %1101 = vmatmul.mubr.bf16.gmra.mrb[0].mxu0 %v569
  %v1102 = vpop.f32.mrb[0].mxu0
  %v1103 = vadd.f32 0.0, %v1102
  %v1104 = vpop.f32.mrb[0].mxu0
  %v1105 = vpop.f32.mrb[0].mxu0
  %v1106 = vadd.f32 0.0, %v1105
  %v1107 = vpop.f32.mrb[0].mxu0
  %1108 = vmatprep.mubr.bf16.mxu0 %v574
  %1109 = vmatmul.mubr.bf16.gmra.mrb[0].mxu0 %v573
  %v1110 = vpop.f32.mrb[0].mxu0
  %v1111 = vadd.f32 0.0, %v1110
  %v1112 = vpop.f32.mrb[0].mxu0
  %v1113 = vpop.f32.mrb[0].mxu0
  %v1114 = vadd.f32 0.0, %v1113
  %v1115 = vpop.f32.mrb[0].mxu0
  %1116 = vmatprep.mubr.bf16.mxu0 %v578
  %1117 = vmatmul.mubr.bf16.gmra.mrb[0].mxu0 %v577
  %v1118 = vpop.f32.mrb[0].mxu0
  %v1119 = vadd.f32 0.0, %v1118
  %v1120 = vpop.f32.mrb[0].mxu0
  %v1121 = vpop.f32.mrb[0].mxu0
  %v1122 = vadd.f32 0.0, %v1121
  %v1123 = vpop.f32.mrb[0].mxu0
  %1124 = vmatprep.mubr.bf16.mxu0 %v582
  %1125 = vmatmul.mubr.bf16.gmra.mrb[0].mxu0 %v581
  %v1126 = vpop.f32.mrb[0].mxu0
  %v1127 = vadd.f32 0.0, %v1126
  %v1128 = vpop.f32.mrb[0].mxu0
  %v1129 = vpop.f32.mrb[0].mxu0
  %v1130 = vadd.f32 0.0, %v1129
  %v1131 = vpop.f32.mrb[0].mxu0
  %1132 = vdwg.mxu0
  %1133 = vmatprep.subr.bf16.mxu0 0
  %1134 = vmatpush1.bf16.msra.mxu0 %v779
  %1135 = vmatprep.subr.bf16.mxu0 0
  %1136 = vmatpush1.bf16.msra.mxu0 %v780
  %1137 = vmatprep.subr.bf16.mxu0 0
  %1138 = vmatpush1.bf16.msra.mxu0 %v781
  %1139 = vmatprep.subr.bf16.mxu0 0
  %1140 = vmatpush1.bf16.msra.mxu0 %v782
  %1141 = vmatprep.subr.bf16.mxu0 0
  %1142 = vmatpush1.bf16.msra.mxu0 %v783
  %1143 = vmatprep.subr.bf16.mxu0 0
  %1144 = vmatpush1.bf16.msra.mxu0 %v784
  %1145 = vmatprep.subr.bf16.mxu0 0
  %1146 = vmatpush1.bf16.msra.mxu0 %v785
  %1147 = vmatprep.subr.bf16.mxu0 0
  %1148 = vmatpush1.bf16.msra.mxu0 %v786
  %1149 = vmatprep.subr.bf16.mxu0 0
  %1150 = vmatpush1.bf16.msra.mxu0 %v787
  %1151 = vmatprep.subr.bf16.mxu0 0
  %1152 = vmatpush1.bf16.msra.mxu0 0
  %1153 = vmatprep.subr.bf16.mxu0 0
  %1154 = vmatpush1.bf16.msra.mxu0 0
  %1155 = vmatprep.subr.bf16.mxu0 0
  %1156 = vmatpush1.bf16.msra.mxu0 0
  %1157 = vmatprep.subr.bf16.mxu0 0
  %1158 = vmatpush1.bf16.msra.mxu0 0
  %1159 = vmatprep.subr.bf16.mxu0 0
  %1160 = vmatpush1.bf16.msra.mxu0 0
  %1161 = vmatprep.subr.bf16.mxu0 0
  %1162 = vmatpush1.bf16.msra.mxu0 0
  %1163 = vmatprep.subr.bf16.mxu0 0
  %1164 = vmatpush1.bf16.msra.mxu0 0
  %1165 = vmatprep.mubr.bf16.mxu0 %v815
  %1166 = vmatmul.mubr.bf16.gmra.mrb[0].mxu0 %v483
  %v1167 = vpop.f32.mrb[0].mxu0
  %v1168 = vadd.f32 %v927, %v1167
  %v1169 = vpop.f32.mrb[0].mxu0
  %v1170 = vpop.f32.mrb[0].mxu0
  %v1171 = vadd.f32 %v930, %v1170
  %v1172 = vpop.f32.mrb[0].mxu0
  %1173 = vmatprep.mubr.bf16.mxu0 %v818
  %1174 = vmatmul.mubr.bf16.gmra.mrb[0].mxu0 %v487
  %v1175 = vpop.f32.mrb[0].mxu0
  %v1176 = vadd.f32 %v935, %v1175
  %v1177 = vpop.f32.mrb[0].mxu0
  %v1178 = vpop.f32.mrb[0].mxu0
  %v1179 = vadd.f32 %v938, %v1178
  %v1180 = vpop.f32.mrb[0].mxu0
  %1181 = vmatprep.mubr.bf16.mxu0 %v821
  %1182 = vmatmul.mubr.bf16.gmra.mrb[0].mxu0 %v491
  %v1183 = vpop.f32.mrb[0].mxu0
  %v1184 = vadd.f32 %v943, %v1183
  %v1185 = vpop.f32.mrb[0].mxu0
  %v1186 = vpop.f32.mrb[0].mxu0
  %v1187 = vadd.f32 %v946, %v1186
  %v1188 = vpop.f32.mrb[0].mxu0
  %1189 = vmatprep.mubr.bf16.mxu0 %v824
  %1190 = vmatmul.mubr.bf16.gmra.mrb[0].mxu0 %v495
  %v1191 = vpop.f32.mrb[0].mxu0
  %v1192 = vadd.f32 %v951, %v1191
  %v1193 = vpop.f32.mrb[0].mxu0
  %v1194 = vpop.f32.mrb[0].mxu0
  %v1195 = vadd.f32 %v954, %v1194
  %v1196 = vpop.f32.mrb[0].mxu0
  %1197 = vmatprep.mubr.bf16.mxu0 %v827
  %1198 = vmatmul.mubr.bf16.gmra.mrb[0].mxu0 %v499
  %v1199 = vpop.f32.mrb[0].mxu0
  %v1200 = vadd.f32 %v959, %v1199
  %v1201 = vpop.f32.mrb[0].mxu0
  %v1202 = vpop.f32.mrb[0].mxu0
  %v1203 = vadd.f32 %v962, %v1202
  %v1204 = vpop.f32.mrb[0].mxu0
  %1205 = vmatprep.mubr.bf16.mxu0 %v830
  %1206 = vmatmul.mubr.bf16.gmra.mrb[0].mxu0 %v503
  %v1207 = vpop.f32.mrb[0].mxu0
  %v1208 = vadd.f32 %v967, %v1207
  %v1209 = vpop.f32.mrb[0].mxu0
  %v1210 = vpop.f32.mrb[0].mxu0
  %v1211 = vadd.f32 %v970, %v1210
  %v1212 = vpop.f32.mrb[0].mxu0
  %1213 = vmatprep.mubr.bf16.mxu0 %v833
  %1214 = vmatmul.mubr.bf16.gmra.mrb[0].mxu0 %v507
  %v1215 = vpop.f32.mrb[0].mxu0
  %v1216 = vadd.f32 %v975, %v1215
  %v1217 = vpop.f32.mrb[0].mxu0
  %v1218 = vpop.f32.mrb[0].mxu0
  %v1219 = vadd.f32 %v978, %v1218
  %v1220 = vpop.f32.mrb[0].mxu0
  %1221 = vmatprep.mubr.bf16.mxu0 %v836
  %1222 = vmatmul.mubr.bf16.gmra.mrb[0].mxu0 %v511
  %v1223 = vpop.f32.mrb[0].mxu0
  %v1224 = vadd.f32 %v983, %v1223
  %v1225 = vpop.f32.mrb[0].mxu0
  %v1226 = vpop.f32.mrb[0].mxu0
  %v1227 = vadd.f32 %v986, %v1226
  %v1228 = vpop.f32.mrb[0].mxu0
  %1229 = vmatprep.mubr.bf16.mxu0 %v839
  %1230 = vmatmul.mubr.bf16.gmra.mrb[0].mxu0 %v515
  %v1231 = vpop.f32.mrb[0].mxu0
  %v1232 = vadd.f32 %v991, %v1231
  %v1233 = vpop.f32.mrb[0].mxu0
  %v1234 = vpop.f32.mrb[0].mxu0
  %v1235 = vadd.f32 %v994, %v1234
  %v1236 = vpop.f32.mrb[0].mxu0
  %1237 = vmatprep.mubr.bf16.mxu0 %v842
  %1238 = vmatmul.mubr.bf16.gmra.mrb[0].mxu0 %v519
  %v1239 = vpop.f32.mrb[0].mxu0
  %v1240 = vadd.f32 %v999, %v1239
  %v1241 = vpop.f32.mrb[0].mxu0
  %v1242 = vpop.f32.mrb[0].mxu0
  %v1243 = vadd.f32 %v1002, %v1242
  %v1244 = vpop.f32.mrb[0].mxu0
  %1245 = vmatprep.mubr.bf16.mxu0 %v845
  %1246 = vmatmul.mubr.bf16.gmra.mrb[0].mxu0 %v523
  %v1247 = vpop.f32.mrb[0].mxu0
  %v1248 = vadd.f32 %v1007, %v1247
  %v1249 = vpop.f32.mrb[0].mxu0
  %v1250 = vpop.f32.mrb[0].mxu0
  %v1251 = vadd.f32 %v1010, %v1250
  %v1252 = vpop.f32.mrb[0].mxu0
  %1253 = vmatprep.mubr.bf16.mxu0 %v848
  %1254 = vmatmul.mubr.bf16.gmra.mrb[0].mxu0 %v527
  %v1255 = vpop.f32.mrb[0].mxu0
  %v1256 = vadd.f32 %v1015, %v1255
  %v1257 = vpop.f32.mrb[0].mxu0
  %v1258 = vpop.f32.mrb[0].mxu0
  %v1259 = vadd.f32 %v1018, %v1258
  %v1260 = vpop.f32.mrb[0].mxu0
  %1261 = vmatprep.mubr.bf16.mxu0 %v851
  %1262 = vmatmul.mubr.bf16.gmra.mrb[0].mxu0 %v531
  %v1263 = vpop.f32.mrb[0].mxu0
  %v1264 = vadd.f32 %v1023, %v1263
  %v1265 = vpop.f32.mrb[0].mxu0
  %v1266 = vpop.f32.mrb[0].mxu0
  %v1267 = vadd.f32 %v1026, %v1266
  %v1268 = vpop.f32.mrb[0].mxu0
  %1269 = vmatprep.mubr.bf16.mxu0 %v854
  %1270 = vmatmul.mubr.bf16.gmra.mrb[0].mxu0 %v535
  %v1271 = vpop.f32.mrb[0].mxu0
  %v1272 = vadd.f32 %v1031, %v1271
  %v1273 = vpop.f32.mrb[0].mxu0
  %v1274 = vpop.f32.mrb[0].mxu0
  %v1275 = vadd.f32 %v1034, %v1274
  %v1276 = vpop.f32.mrb[0].mxu0
  %1277 = vmatprep.mubr.bf16.mxu0 %v857
  %1278 = vmatmul.mubr.bf16.gmra.mrb[0].mxu0 %v539
  %v1279 = vpop.f32.mrb[0].mxu0
  %v1280 = vadd.f32 %v1039, %v1279
  %v1281 = vpop.f32.mrb[0].mxu0
  %v1282 = vpop.f32.mrb[0].mxu0
  %v1283 = vadd.f32 %v1042, %v1282
  %v1284 = vpop.f32.mrb[0].mxu0
  %1285 = vmatprep.mubr.bf16.mxu0 %v860
  %1286 = vmatmul.mubr.bf16.gmra.mrb[0].mxu0 %v543
  %v1287 = vpop.f32.mrb[0].mxu0
  %v1288 = vadd.f32 %v1047, %v1287
  %v1289 = vpop.f32.mrb[0].mxu0
  %v1290 = vpop.f32.mrb[0].mxu0
  %v1291 = vadd.f32 %v1050, %v1290
  %v1292 = vpop.f32.mrb[0].mxu0
  %1293 = vmatprep.mubr.bf16.mxu0 %v863
  %1294 = vmatmul.mubr.bf16.gmra.mrb[0].mxu0 %v547
  %v1295 = vpop.f32.mrb[0].mxu0
  %v1296 = vadd.f32 %v1055, %v1295
  %v1297 = vpop.f32.mrb[0].mxu0
  %v1298 = vpop.f32.mrb[0].mxu0
  %v1299 = vadd.f32 %v1058, %v1298
  %v1300 = vpop.f32.mrb[0].mxu0
  %1301 = vmatprep.mubr.bf16.mxu0 %v866
  %1302 = vmatmul.mubr.bf16.gmra.mrb[0].mxu0 %v551
  %v1303 = vpop.f32.mrb[0].mxu0
  %v1304 = vadd.f32 %v1063, %v1303
  %v1305 = vpop.f32.mrb[0].mxu0
  %v1306 = vpop.f32.mrb[0].mxu0
  %v1307 = vadd.f32 %v1066, %v1306
  %v1308 = vpop.f32.mrb[0].mxu0
  %1309 = vmatprep.mubr.bf16.mxu0 %v869
  %1310 = vmatmul.mubr.bf16.gmra.mrb[0].mxu0 %v555
  %v1311 = vpop.f32.mrb[0].mxu0
  %v1312 = vadd.f32 %v1071, %v1311
  %v1313 = vpop.f32.mrb[0].mxu0
  %v1314 = vpop.f32.mrb[0].mxu0
  %v1315 = vadd.f32 %v1074, %v1314
  %v1316 = vpop.f32.mrb[0].mxu0
  %1317 = vmatprep.mubr.bf16.mxu0 %v872
  %1318 = vmatmul.mubr.bf16.gmra.mrb[0].mxu0 %v559
  %v1319 = vpop.f32.mrb[0].mxu0
  %v1320 = vadd.f32 %v1079, %v1319
  %v1321 = vpop.f32.mrb[0].mxu0
  %v1322 = vpop.f32.mrb[0].mxu0
  %v1323 = vadd.f32 %v1082, %v1322
  %v1324 = vpop.f32.mrb[0].mxu0
  %1325 = vmatprep.mubr.bf16.mxu0 %v875
  %1326 = vmatmul.mubr.bf16.gmra.mrb[0].mxu0 %v563
  %v1327 = vpop.f32.mrb[0].mxu0
  %v1328 = vadd.f32 %v1087, %v1327
  %v1329 = vpop.f32.mrb[0].mxu0
  %v1330 = vpop.f32.mrb[0].mxu0
  %v1331 = vadd.f32 %v1090, %v1330
  %v1332 = vpop.f32.mrb[0].mxu0
  %1333 = vmatprep.mubr.bf16.mxu0 %v878
  %1334 = vmatmul.mubr.bf16.gmra.mrb[0].mxu0 %v567
  %v1335 = vpop.f32.mrb[0].mxu0
  %v1336 = vadd.f32 %v1095, %v1335
  %v1337 = vpop.f32.mrb[0].mxu0
  %v1338 = vpop.f32.mrb[0].mxu0
  %v1339 = vadd.f32 %v1098, %v1338
  %v1340 = vpop.f32.mrb[0].mxu0
  %1341 = vmatprep.mubr.bf16.mxu0 %v881
  %1342 = vmatmul.mubr.bf16.gmra.mrb[0].mxu0 %v571
  %v1343 = vpop.f32.mrb[0].mxu0
  %v1344 = vadd.f32 %v1103, %v1343
  %v1345 = vpop.f32.mrb[0].mxu0
  %v1346 = vpop.f32.mrb[0].mxu0
  %v1347 = vadd.f32 %v1106, %v1346
  %v1348 = vpop.f32.mrb[0].mxu0
  %1349 = vmatprep.mubr.bf16.mxu0 %v884
  %1350 = vmatmul.mubr.bf16.gmra.mrb[0].mxu0 %v575
  %v1351 = vpop.f32.mrb[0].mxu0
  %v1352 = vadd.f32 %v1111, %v1351
  %v1353 = vpop.f32.mrb[0].mxu0
  %v1354 = vpop.f32.mrb[0].mxu0
  %v1355 = vadd.f32 %v1114, %v1354
  %v1356 = vpop.f32.mrb[0].mxu0
  %1357 = vmatprep.mubr.bf16.mxu0 %v887
  %1358 = vmatmul.mubr.bf16.gmra.mrb[0].mxu0 %v579
  %v1359 = vpop.f32.mrb[0].mxu0
  %v1360 = vadd.f32 %v1119, %v1359
  %v1361 = vpop.f32.mrb[0].mxu0
  %v1362 = vpop.f32.mrb[0].mxu0
  %v1363 = vadd.f32 %v1122, %v1362
  %v1364 = vpop.f32.mrb[0].mxu0
  %1365 = vmatprep.mubr.bf16.mxu0 %v890
  %1366 = vmatmul.mubr.bf16.gmra.mrb[0].mxu0 %v583
  %v1367 = vpop.f32.mrb[0].mxu0
  %v1368 = vadd.f32 %v1127, %v1367
  %v1369 = vpop.f32.mrb[0].mxu0
  %v1370 = vpop.f32.mrb[0].mxu0
  %v1371 = vadd.f32 %v1130, %v1370
  %v1372 = vpop.f32.mrb[0].mxu0
  %1373 = vdwg.mxu0
  %vm1374 = vcmask 261120
  %v1375 = vsel %vm1374, %v1168, -inf
  %v1376 = vsel %vm1374, %v1219, -inf
  %v1377 = vmax.f32 %v1375, %v1376
  %v1378 = vsel %vm1374, %v1272, -inf
  %v1379 = vmax.f32 %v1377, %v1378
  %v1380 = vsel %vm1374, %v1323, -inf
  %v1381 = vmax.f32 %v1379, %v1380
  %v1382 = vsel %vm1374, %v1171, -inf
  %v1383 = vsel %vm1374, %v1224, -inf
  %v1384 = vmax.f32 %v1382, %v1383
  %v1385 = vsel %vm1374, %v1275, -inf
  %v1386 = vmax.f32 %v1384, %v1385
  %v1387 = vsel %vm1374, %v1328, -inf
  %v1388 = vmax.f32 %v1386, %v1387
  %v1389 = vsel %vm1374, %v1176, -inf
  %v1390 = vsel %vm1374, %v1227, -inf
  %v1391 = vmax.f32 %v1389, %v1390
  %v1392 = vsel %vm1374, %v1280, -inf
  %v1393 = vmax.f32 %v1391, %v1392
  %v1394 = vsel %vm1374, %v1331, -inf
  %v1395 = vmax.f32 %v1393, %v1394
  %v1396 = vsel %vm1374, %v1179, -inf
  %v1397 = vsel %vm1374, %v1232, -inf
  %v1398 = vmax.f32 %v1396, %v1397
  %v1399 = vsel %vm1374, %v1283, -inf
  %v1400 = vmax.f32 %v1398, %v1399
  %v1401 = vsel %vm1374, %v1336, -inf
  %v1402 = vmax.f32 %v1400, %v1401
  %v1403 = vsel %vm1374, %v1184, -inf
  %v1404 = vsel %vm1374, %v1235, -inf
  %v1405 = vmax.f32 %v1403, %v1404
  %v1406 = vsel %vm1374, %v1288, -inf
  %v1407 = vmax.f32 %v1405, %v1406
  %v1408 = vsel %vm1374, %v1339, -inf
  %v1409 = vmax.f32 %v1407, %v1408
  %v1410 = vsel %vm1374, %v1187, -inf
  %v1411 = vsel %vm1374, %v1240, -inf
  %v1412 = vmax.f32 %v1410, %v1411
  %v1413 = vsel %vm1374, %v1291, -inf
  %v1414 = vmax.f32 %v1412, %v1413
  %v1415 = vsel %vm1374, %v1344, -inf
  %v1416 = vmax.f32 %v1414, %v1415
  %v1417 = vsel %vm1374, %v1192, -inf
  %v1418 = vsel %vm1374, %v1243, -inf
  %v1419 = vmax.f32 %v1417, %v1418
  %v1420 = vsel %vm1374, %v1296, -inf
  %v1421 = vmax.f32 %v1419, %v1420
  %v1422 = vsel %vm1374, %v1347, -inf
  %v1423 = vmax.f32 %v1421, %v1422
  %v1424 = vsel %vm1374, %v1195, -inf
  %v1425 = vsel %vm1374, %v1248, -inf
  %v1426 = vmax.f32 %v1424, %v1425
  %v1427 = vsel %vm1374, %v1299, -inf
  %v1428 = vmax.f32 %v1426, %v1427
  %v1429 = vsel %vm1374, %v1352, -inf
  %v1430 = vmax.f32 %v1428, %v1429
  %v1431 = vsel %vm1374, %v1200, -inf
  %v1432 = vsel %vm1374, %v1251, -inf
  %v1433 = vmax.f32 %v1431, %v1432
  %v1434 = vsel %vm1374, %v1304, -inf
  %v1435 = vmax.f32 %v1433, %v1434
  %v1436 = vsel %vm1374, %v1355, -inf
  %v1437 = vmax.f32 %v1435, %v1436
  %v1438 = vsel %vm1374, %v1203, -inf
  %v1439 = vsel %vm1374, %v1256, -inf
  %v1440 = vmax.f32 %v1438, %v1439
  %v1441 = vsel %vm1374, %v1307, -inf
  %v1442 = vmax.f32 %v1440, %v1441
  %v1443 = vsel %vm1374, %v1360, -inf
  %v1444 = vmax.f32 %v1442, %v1443
  %v1445 = vsel %vm1374, %v1208, -inf
  %v1446 = vsel %vm1374, %v1259, -inf
  %v1447 = vmax.f32 %v1445, %v1446
  %v1448 = vsel %vm1374, %v1312, -inf
  %v1449 = vmax.f32 %v1447, %v1448
  %v1450 = vsel %vm1374, %v1363, -inf
  %v1451 = vmax.f32 %v1449, %v1450
  %v1452 = vsel %vm1374, %v1211, -inf
  %v1453 = vsel %vm1374, %v1264, -inf
  %v1454 = vmax.f32 %v1452, %v1453
  %v1455 = vsel %vm1374, %v1315, -inf
  %v1456 = vmax.f32 %v1454, %v1455
  %v1457 = vsel %vm1374, %v1368, -inf
  %v1458 = vmax.f32 %v1456, %v1457
  %v1459 = vsel %vm1374, %v1216, -inf
  %v1460 = vsel %vm1374, %v1267, -inf
  %v1461 = vmax.f32 %v1459, %v1460
  %v1462 = vsel %vm1374, %v1320, -inf
  %v1463 = vmax.f32 %v1461, %v1462
  %v1464 = vsel %vm1374, %v1371, -inf
  %v1465 = vmax.f32 %v1463, %v1464
  %v1466 = vld [vmem:[%s2] sm:$0x1]
  %v1468 = vlaneseq
  %v1469 = vshrl.u32 %v1468, 7
  %v1470 = vsub.s32 0, %v1469
  %v1471 = vrot.slane %v1466, %v1470
  %v1473 = vadd.f32 %v1381, %v1471
  %v1474 = vadd.f32 %v1388, %v1471
  %v1475 = vadd.f32 %v1395, %v1471
  %v1476 = vadd.f32 %v1402, %v1471
  %v1477 = vadd.f32 %v1409, %v1471
  %v1478 = vadd.f32 %v1416, %v1471
  %v1479 = vadd.f32 %v1423, %v1471
  %v1480 = vadd.f32 %v1430, %v1471
  %v1481 = vadd.f32 %v1437, %v1471
  %v1482 = vadd.f32 %v1444, %v1471
  %v1483 = vadd.f32 %v1451, %v1471
  %v1484 = vadd.f32 %v1458, %v1471
  %v1485 = vadd.f32 %v1465, %v1471
  %v1486 = vmax.f32 %v1473, 0.0
  %v1487 = vmax.f32 %v1474, 0.0
  %v1488 = vmax.f32 %v1475, 0.0
  %v1489 = vmax.f32 %v1476, 0.0
  %v1490 = vmax.f32 %v1477, 0.0
  %v1491 = vmax.f32 %v1478, 0.0
  %v1492 = vmax.f32 %v1479, 0.0
  %v1493 = vmax.f32 %v1480, 0.0
  %v1494 = vmax.f32 %v1481, 0.0
  %v1495 = vmax.f32 %v1482, 0.0
  %v1496 = vmax.f32 %v1483, 0.0
  %v1497 = vmax.f32 %v1484, 0.0
  %v1498 = vmax.f32 %v1485, 0.0
  %1499 = vst.msk [vmem:[%s3] sm:$0xff] %vm1374, %v1486
  %1500 = vst.msk [vmem:[%s3 + $0x8] sm:$0xff] %vm1374, %v1487
  %1501 = vst.msk [vmem:[%s3 + $0x10] sm:$0xff] %vm1374, %v1488
  %1502 = vst.msk [vmem:[%s3 + $0x18] sm:$0xff] %vm1374, %v1489
  %1503 = vst.msk [vmem:[%s3 + $0x20] sm:$0xff] %vm1374, %v1490
  %1504 = vst.msk [vmem:[%s3 + $0x28] sm:$0xff] %vm1374, %v1491
  %1505 = vst.msk [vmem:[%s3 + $0x30] sm:$0xff] %vm1374, %v1492
  %1506 = vst.msk [vmem:[%s3 + $0x38] sm:$0xff] %vm1374, %v1493
  %1507 = vst.msk [vmem:[%s3 + $0x40] sm:$0xff] %vm1374, %v1494
  %1508 = vst.msk [vmem:[%s3 + $0x48] sm:$0xff] %vm1374, %v1495
  %1509 = vst.msk [vmem:[%s3 + $0x50] sm:$0xff] %vm1374, %v1496
  %1510 = vst.msk [vmem:[%s3 + $0x58] sm:$0xff] %vm1374, %v1497
  %1511 = vst.msk [vmem:[%s3 + $0x60] sm:$0xff] %vm1374, %v1498
  // Predicated region
  $region14: #{cnn_forward.4} parent=0 // pred_check
    _
  $region15: #{cnn_forward.4} parent=0 // pred_check_branch
    %1513 = sbr.rel (0) target = $region17
  $region16: #{cnn_forward.4} parent=0 // pred_region
    _
  $region17: #{cnn_forward.4} parent=0 // pred_fallthru
    _
  // Predicated region
  $region18: #{cnn_forward.4} parent=0 // pred_check
    _
  $region19: #{cnn_forward.4} parent=0 // pred_check_branch
    %1515 = sbr.rel (0) target = $region21
  $region20: #{cnn_forward.4} parent=0 // pred_region
    _
  $region21: #{cnn_forward.4} parent=0 // pred_fallthru
    _

// kernel: cnn_forward.5
$region0: #{cnn_forward.5}
  #allocation0 [shape = 'u32[]', space=smem, size = 0x4, offset = 0x4, fixed_abs, tag = 'smem constant byte address 0x4 - core index']
  #allocation1 [shape = 'u32[144,128]{1,0:T(1,128)}', space=vmem, size = 0x12000, scoped, tag = 'internal scratch']
  %s0 = inlined_call_operand.vmem [shape: bf16[2,1568], index: 0, kind: input, shape index: {}]
  %s1 = inlined_call_operand.vmem [shape: bf16[1568,128], index: 1, kind: input, shape index: {}]
  %s2 = inlined_call_operand.vmem [shape: f32[1,128], index: 2, kind: input, shape index: {}]
  %s3 = inlined_call_operand.hbm [shape: f32[2,128], index: 3, kind: output, shape index: {}]
  %s4 = sld [smem:[#allocation0]]
  $region22: #{cnn_forward.5} parent=0
    _
  %s6 = ssub.s32 1, %s4
  %s7 = scalar_select 0, %s6, %s4
  $region1: #{cnn_forward.5} parent=0
    #allocation2 [shape = 'u8[4096]{0}', space=vmem, size = 0x1000, scoped, tag = 'output window, operand 0, single buffered']
    #allocation3 [shape = 's32[1]{0}', space=sflag, size = 0x4, scoped, tag = 'scoped memory for cnn_forward.5']
    %8 = vsyncpa [#allocation3], 0
    // Predicated region
    $region2: #{cnn_forward.5} parent=1 // pred_check
      _
    $region3: #{cnn_forward.5} parent=1 // pred_check_branch
      %10 = sbr.rel (0) target = $region5
    $region4: #{cnn_forward.5} parent=1 // pred_region
      _
    $region5: #{cnn_forward.5} parent=1 // pred_fallthru
      _
    // Predicated region
    $region6: #{cnn_forward.5} parent=1 // pred_check
      _
    $region7: #{cnn_forward.5} parent=1 // pred_check_branch
      %12 = sbr.rel (0) target = $region9
    $region8: #{cnn_forward.5} parent=1 // pred_region
      _
    $region9: #{cnn_forward.5} parent=1 // pred_fallthru
      _
    // Predicated region
    $region10: #{cnn_forward.5} parent=1 // pred_check
      _
    $region11: #{cnn_forward.5} parent=1 // pred_check_branch
      %14 = sbr.rel (0) target = $region13
    $region12: #{cnn_forward.5} parent=1 // pred_region
      _
    $region13: #{cnn_forward.5} parent=1 // pred_fallthru
      _
    %v16 = vld [vmem:[%s0] sm:$0xff]
    %v17 = vld [vmem:[%s0 + $0x8] sm:$0x1f]
    %v18 = vld [vmem:[%s0 + $0xd] sm:$0xff]
    %v19 = vld [vmem:[%s0 + $0x15] sm:$0x1f]
    %v20 = vld [vmem:[%s0 + $0x1a] sm:$0xff]
    %v21 = vld [vmem:[%s0 + $0x22] sm:$0x1f]
    %v22 = vld [vmem:[%s0 + $0x27] sm:$0xff]
    %v23 = vld [vmem:[%s0 + $0x2f] sm:$0x1f]
    %v24 = vld [vmem:[%s1] sm:$0xf]
    %v25 = vld [vmem:[%s1 + $0x4] sm:$0xf]
    %v26 = vld [vmem:[%s1 + $0x8] sm:$0xf]
    %v27 = vld [vmem:[%s1 + $0xc] sm:$0xf]
    %v28 = vld [vmem:[%s1 + $0x10] sm:$0xf]
    %v29 = vld [vmem:[%s1 + $0x14] sm:$0xf]
    %v30 = vld [vmem:[%s1 + $0x18] sm:$0xf]
    %v31 = vld [vmem:[%s1 + $0x1c] sm:$0xf]
    %v32 = vld [vmem:[%s1 + $0x20] sm:$0xf]
    %v33 = vld [vmem:[%s1 + $0x24] sm:$0xf]
    %v34 = vld [vmem:[%s1 + $0x28] sm:$0xf]
    %v35 = vld [vmem:[%s1 + $0x2c] sm:$0xf]
    %v36 = vld [vmem:[%s1 + $0x30] sm:$0xf]
    %v37 = vld [vmem:[%s1 + $0x34] sm:$0xf]
    %v38 = vld [vmem:[%s1 + $0x38] sm:$0xf]
    %v39 = vld [vmem:[%s1 + $0x3c] sm:$0xf]
    %v40 = vld [vmem:[%s1 + $0x40] sm:$0xf]
    %v41 = vld [vmem:[%s1 + $0x44] sm:$0xf]
    %v42 = vld [vmem:[%s1 + $0x48] sm:$0xf]
    %v43 = vld [vmem:[%s1 + $0x4c] sm:$0xf]
    %v44 = vld [vmem:[%s1 + $0x50] sm:$0xf]
    %v45 = vld [vmem:[%s1 + $0x54] sm:$0xf]
    %v46 = vld [vmem:[%s1 + $0x58] sm:$0xf]
    %v47 = vld [vmem:[%s1 + $0x5c] sm:$0xf]
    %v48 = vld [vmem:[%s1 + $0x60] sm:$0xf]
    %v49 = vld [vmem:[%s1 + $0x64] sm:$0xf]
    %v50 = vld [vmem:[%s1 + $0x68] sm:$0xf]
    %v51 = vld [vmem:[%s1 + $0x6c] sm:$0xf]
    %v52 = vld [vmem:[%s1 + $0x70] sm:$0xf]
    %v53 = vld [vmem:[%s1 + $0x74] sm:$0xf]
    %v54 = vld [vmem:[%s1 + $0x78] sm:$0xf]
    %v55 = vld [vmem:[%s1 + $0x7c] sm:$0xf]
    %v56 = vld [vmem:[%s1 + $0x80] sm:$0xf]
    %v57 = vld [vmem:[%s1 + $0x84] sm:$0xf]
    %v58 = vld [vmem:[%s1 + $0x88] sm:$0xf]
    %v59 = vld [vmem:[%s1 + $0x8c] sm:$0xf]
    %v60 = vld [vmem:[%s1 + $0x90] sm:$0xf]
    %v61 = vld [vmem:[%s1 + $0x94] sm:$0xf]
    %v62 = vld [vmem:[%s1 + $0x98] sm:$0xf]
    %v63 = vld [vmem:[%s1 + $0x9c] sm:$0xf]
    %v64 = vld [vmem:[%s1 + $0xa0] sm:$0xf]
    %v65 = vld [vmem:[%s1 + $0xa4] sm:$0xf]
    %v66 = vld [vmem:[%s1 + $0xa8] sm:$0xf]
    %v67 = vld [vmem:[%s1 + $0xac] sm:$0xf]
    %v68 = vld [vmem:[%s1 + $0xb0] sm:$0xf]
    %v69 = vld [vmem:[%s1 + $0xb4] sm:$0xf]
    %v70 = vld [vmem:[%s1 + $0xb8] sm:$0xf]
    %v71 = vld [vmem:[%s1 + $0xbc] sm:$0xf]
    %v72 = vld [vmem:[%s1 + $0xc0] sm:$0xf]
    %v73 = vld [vmem:[%s1 + $0xc4] sm:$0xf]
    %v74 = vld [vmem:[%s1 + $0xc8] sm:$0xf]
    %v75 = vld [vmem:[%s1 + $0xcc] sm:$0xf]
    %v76 = vld [vmem:[%s1 + $0xd0] sm:$0xf]
    %v77 = vld [vmem:[%s1 + $0xd4] sm:$0xf]
    %v78 = vld [vmem:[%s1 + $0xd8] sm:$0xf]
    %v79 = vld [vmem:[%s1 + $0xdc] sm:$0xf]
    %v80 = vld [vmem:[%s1 + $0xe0] sm:$0xf]
    %v81 = vld [vmem:[%s1 + $0xe4] sm:$0xf]
    %v82 = vld [vmem:[%s1 + $0xe8] sm:$0xf]
    %v83 = vld [vmem:[%s1 + $0xec] sm:$0xf]
    %v84 = vld [vmem:[%s1 + $0xf0] sm:$0xf]
    %v85 = vld [vmem:[%s1 + $0xf4] sm:$0xf]
    %v86 = vld [vmem:[%s1 + $0xf8] sm:$0xf]
    %v87 = vld [vmem:[%s1 + $0xfc] sm:$0xf]
    %v88 = vld [vmem:[%s1 + $0x100] sm:$0xf]
    %v89 = vld [vmem:[%s1 + $0x104] sm:$0xf]
    %v90 = vld [vmem:[%s1 + $0x108] sm:$0xf]
    %v91 = vld [vmem:[%s1 + $0x10c] sm:$0xf]
    %v92 = vld [vmem:[%s1 + $0x110] sm:$0xf]
    %v93 = vld [vmem:[%s1 + $0x114] sm:$0xf]
    %v94 = vld [vmem:[%s1 + $0x118] sm:$0xf]
    %v95 = vld [vmem:[%s1 + $0x11c] sm:$0xf]
    %v96 = vld [vmem:[%s1 + $0x120] sm:$0xf]
    %v97 = vld [vmem:[%s1 + $0x124] sm:$0xf]
    %v98 = vld [vmem:[%s1 + $0x128] sm:$0xf]
    %v99 = vld [vmem:[%s1 + $0x12c] sm:$0xf]
    %v100 = vld [vmem:[%s1 + $0x130] sm:$0xf]
    %v101 = vld [vmem:[%s1 + $0x134] sm:$0xf]
    %v102 = vld [vmem:[%s1 + $0x138] sm:$0xf]
    %v103 = vld [vmem:[%s1 + $0x13c] sm:$0xf]
    %v104 = vld [vmem:[%s1 + $0x140] sm:$0xf]
    %v105 = vld [vmem:[%s1 + $0x144] sm:$0xf]
    %v106 = vld [vmem:[%s1 + $0x148] sm:$0xf]
    %v107 = vld [vmem:[%s1 + $0x14c] sm:$0xf]
    %v108 = vld [vmem:[%s1 + $0x150] sm:$0xf]
    %v109 = vld [vmem:[%s1 + $0x154] sm:$0xf]
    %v110 = vld [vmem:[%s1 + $0x158] sm:$0xf]
    %v111 = vld [vmem:[%s1 + $0x15c] sm:$0xf]
    %v112 = vld [vmem:[%s1 + $0x160] sm:$0xf]
    %v113 = vld [vmem:[%s1 + $0x164] sm:$0xf]
    %v114 = vld [vmem:[%s1 + $0x168] sm:$0xf]
    %v115 = vld [vmem:[%s1 + $0x16c] sm:$0xf]
    %v116 = vld [vmem:[%s1 + $0x170] sm:$0xf]
    %v117 = vld [vmem:[%s1 + $0x174] sm:$0xf]
    %v118 = vld [vmem:[%s1 + $0x178] sm:$0xf]
    %v119 = vld [vmem:[%s1 + $0x17c] sm:$0xf]
    %v120 = vld [vmem:[%s1 + $0x180] sm:$0xf]
    %v121 = vld [vmem:[%s1 + $0x184] sm:$0xf]
    %v122 = vld [vmem:[%s1 + $0x188] sm:$0xf]
    %v123 = vld [vmem:[%s1 + $0x18c] sm:$0xf]
    %v124 = vld [vmem:[%s1 + $0x190] sm:$0xf]
    %v125 = vld [vmem:[%s1 + $0x194] sm:$0xf]
    %v126 = vld [vmem:[%s1 + $0x198] sm:$0xf]
    %v127 = vld [vmem:[%s1 + $0x19c] sm:$0xf]
    %v128 = vld [vmem:[%s1 + $0x1a0] sm:$0xf]
    %v129 = vld [vmem:[%s1 + $0x1a4] sm:$0xf]
    %v130 = vld [vmem:[%s1 + $0x1a8] sm:$0xf]
    %v131 = vld [vmem:[%s1 + $0x1ac] sm:$0xf]
    %v132 = vld [vmem:[%s1 + $0x1b0] sm:$0xf]
    %v133 = vld [vmem:[%s1 + $0x1b4] sm:$0xf]
    %v134 = vld [vmem:[%s1 + $0x1b8] sm:$0xf]
    %v135 = vld [vmem:[%s1 + $0x1bc] sm:$0xf]
    %v136 = vld [vmem:[%s1 + $0x1c0] sm:$0xf]
    %v137 = vld [vmem:[%s1 + $0x1c4] sm:$0xf]
    %v138 = vld [vmem:[%s1 + $0x1c8] sm:$0xf]
    %v139 = vld [vmem:[%s1 + $0x1cc] sm:$0xf]
    %v140 = vld [vmem:[%s1 + $0x1d0] sm:$0xf]
    %v141 = vld [vmem:[%s1 + $0x1d4] sm:$0xf]
    %v142 = vld [vmem:[%s1 + $0x1d8] sm:$0xf]
    %v143 = vld [vmem:[%s1 + $0x1dc] sm:$0xf]
    %v144 = vld [vmem:[%s1 + $0x1e0] sm:$0xf]
    %v145 = vld [vmem:[%s1 + $0x1e4] sm:$0xf]
    %v146 = vld [vmem:[%s1 + $0x1e8] sm:$0xf]
    %v147 = vld [vmem:[%s1 + $0x1ec] sm:$0xf]
    %v148 = vld [vmem:[%s1 + $0x1f0] sm:$0xf]
    %v149 = vld [vmem:[%s1 + $0x1f4] sm:$0xf]
    %v150 = vld [vmem:[%s1 + $0x1f8] sm:$0xf]
    %v151 = vld [vmem:[%s1 + $0x1fc] sm:$0xf]
    %v152 = vld [vmem:[%s1 + $0x200] sm:$0xf]
    %v153 = vld [vmem:[%s1 + $0x204] sm:$0xf]
    %v154 = vld [vmem:[%s1 + $0x208] sm:$0xf]
    %v155 = vld [vmem:[%s1 + $0x20c] sm:$0xf]
    %v156 = vld [vmem:[%s1 + $0x210] sm:$0xf]
    %v157 = vld [vmem:[%s1 + $0x214] sm:$0xf]
    %v158 = vld [vmem:[%s1 + $0x218] sm:$0xf]
    %v159 = vld [vmem:[%s1 + $0x21c] sm:$0xf]
    %v160 = vld [vmem:[%s1 + $0x220] sm:$0xf]
    %v161 = vld [vmem:[%s1 + $0x224] sm:$0xf]
    %v162 = vld [vmem:[%s1 + $0x228] sm:$0xf]
    %v163 = vld [vmem:[%s1 + $0x22c] sm:$0xf]
    %v164 = vld [vmem:[%s1 + $0x230] sm:$0xf]
    %v165 = vld [vmem:[%s1 + $0x234] sm:$0xf]
    %v166 = vld [vmem:[%s1 + $0x238] sm:$0xf]
    %v167 = vld [vmem:[%s1 + $0x23c] sm:$0xf]
    %v168 = vld [vmem:[%s1 + $0x240] sm:$0xf]
    %v169 = vld [vmem:[%s1 + $0x244] sm:$0xf]
    %v170 = vld [vmem:[%s1 + $0x248] sm:$0xf]
    %v171 = vld [vmem:[%s1 + $0x24c] sm:$0xf]
    %v172 = vld [vmem:[%s1 + $0x250] sm:$0xf]
    %v173 = vld [vmem:[%s1 + $0x254] sm:$0xf]
    %v174 = vld [vmem:[%s1 + $0x258] sm:$0xf]
    %v175 = vld [vmem:[%s1 + $0x25c] sm:$0xf]
    %v176 = vld [vmem:[%s1 + $0x260] sm:$0xf]
    %v177 = vld [vmem:[%s1 + $0x264] sm:$0xf]
    %v178 = vld [vmem:[%s1 + $0x268] sm:$0xf]
    %v179 = vld [vmem:[%s1 + $0x26c] sm:$0xf]
    %v180 = vld [vmem:[%s1 + $0x270] sm:$0xf]
    %v181 = vld [vmem:[%s1 + $0x274] sm:$0xf]
    %v182 = vld [vmem:[%s1 + $0x278] sm:$0xf]
    %v183 = vld [vmem:[%s1 + $0x27c] sm:$0xf]
    %v184 = vld [vmem:[%s1 + $0x280] sm:$0xf]
    %v185 = vld [vmem:[%s1 + $0x284] sm:$0xf]
    %v186 = vld [vmem:[%s1 + $0x288] sm:$0xf]
    %v187 = vld [vmem:[%s1 + $0x28c] sm:$0xf]
    %v188 = vld [vmem:[%s1 + $0x290] sm:$0xf]
    %v189 = vld [vmem:[%s1 + $0x294] sm:$0xf]
    %v190 = vld [vmem:[%s1 + $0x298] sm:$0xf]
    %v191 = vld [vmem:[%s1 + $0x29c] sm:$0xf]
    %v192 = vld [vmem:[%s1 + $0x2a0] sm:$0xf]
    %v193 = vld [vmem:[%s1 + $0x2a4] sm:$0xf]
    %v194 = vld [vmem:[%s1 + $0x2a8] sm:$0xf]
    %v195 = vld [vmem:[%s1 + $0x2ac] sm:$0xf]
    %v196 = vld [vmem:[%s1 + $0x2b0] sm:$0xf]
    %v197 = vld [vmem:[%s1 + $0x2b4] sm:$0xf]
    %v198 = vld [vmem:[%s1 + $0x2b8] sm:$0xf]
    %v199 = vld [vmem:[%s1 + $0x2bc] sm:$0xf]
    %v200 = vld [vmem:[%s1 + $0x2c0] sm:$0xf]
    %v201 = vld [vmem:[%s1 + $0x2c4] sm:$0xf]
    %v202 = vld [vmem:[%s1 + $0x2c8] sm:$0xf]
    %v203 = vld [vmem:[%s1 + $0x2cc] sm:$0xf]
    %v204 = vld [vmem:[%s1 + $0x2d0] sm:$0xf]
    %v205 = vld [vmem:[%s1 + $0x2d4] sm:$0xf]
    %v206 = vld [vmem:[%s1 + $0x2d8] sm:$0xf]
    %v207 = vld [vmem:[%s1 + $0x2dc] sm:$0xf]
    %v208 = vld [vmem:[%s1 + $0x2e0] sm:$0xf]
    %v209 = vld [vmem:[%s1 + $0x2e4] sm:$0xf]
    %v210 = vld [vmem:[%s1 + $0x2e8] sm:$0xf]
    %v211 = vld [vmem:[%s1 + $0x2ec] sm:$0xf]
    %v212 = vld [vmem:[%s1 + $0x2f0] sm:$0xf]
    %v213 = vld [vmem:[%s1 + $0x2f4] sm:$0xf]
    %v214 = vld [vmem:[%s1 + $0x2f8] sm:$0xf]
    %v215 = vld [vmem:[%s1 + $0x2fc] sm:$0xf]
    %v216 = vld [vmem:[%s1 + $0x300] sm:$0xf]
    %v217 = vld [vmem:[%s1 + $0x304] sm:$0xf]
    %v218 = vld [vmem:[%s1 + $0x308] sm:$0xf]
    %v219 = vld [vmem:[%s1 + $0x30c] sm:$0xf]
    %v220 = vld [vmem:[%s2] sm:$0x1]
    %v222 = vlaneseq
    %v223 = vshrl.u32 %v222, 7
    %v224 = vsub.s32 0, %v223
    %v225 = vrot.slane %v220, %v224
    %v235 = vcombine.low %v16, %v18
    %v236 = vcombine.high %v16, %v18
    %v237 = vcombine.low %v20, %v22
    %v238 = vcombine.high %v20, %v22
    %v240 = vunpack.c.l.s4 1966171168
    %v241 = vunpack.c.0.s8 %v240
    %v242 = vlaneseq
    %v243 = vshrl.u32 %v242, 7
    %v244 = vsub.s32 %v241, %v243
    %v245 = vrot.slane %v235, %v244
    %v247 = vunpack.c.l.s4 1966171168
    %v248 = vunpack.c.0.s8 %v247
    %v249 = vlaneseq
    %v250 = vshrl.u32 %v249, 7
    %v251 = vsub.s32 %v248, %v250
    %v252 = vrot.slane %v236, %v251
    %v254 = vunpack.c.l.s4 1966171168
    %v255 = vunpack.c.0.s8 %v254
    %v256 = vlaneseq
    %v257 = vshrl.u32 %v256, 7
    %v258 = vsub.s32 %v255, %v257
    %v259 = vrot.slane %v237, %v258
    %v261 = vunpack.c.l.s4 1966171168
    %v262 = vunpack.c.0.s8 %v261
    %v263 = vlaneseq
    %v264 = vshrl.u32 %v263, 7
    %v265 = vsub.s32 %v262, %v264
    %v266 = vrot.slane %v238, %v265
    %v267 = vcombine.low %v245, %v259
    %v268 = vcombine.high %v245, %v259
    %v269 = vcombine.low %v252, %v266
    %v270 = vcombine.high %v252, %v266
    %v272 = vunpack.c.l.s4 1966171168
    %v273 = vunpack.c.0.s8 %v272
    %v274 = vlaneseq
    %v275 = vshrl.u32 %v274, 7
    %v276 = vsub.s32 %v273, %v275
    %v277 = vrot.slane %v267, %v276
    %v279 = vunpack.c.l.s4 1966171168
    %v280 = vunpack.c.0.s8 %v279
    %v281 = vlaneseq
    %v282 = vshrl.u32 %v281, 7
    %v283 = vsub.s32 %v280, %v282
    %v284 = vrot.slane %v269, %v283
    %v286 = vunpack.c.l.s4 1966171168
    %v287 = vunpack.c.0.s8 %v286
    %v288 = vlaneseq
    %v289 = vshrl.u32 %v288, 7
    %v290 = vsub.s32 %v287, %v289
    %v291 = vrot.slane %v268, %v290
    %v293 = vunpack.c.l.s4 1966171168
    %v294 = vunpack.c.0.s8 %v293
    %v295 = vlaneseq
    %v296 = vshrl.u32 %v295, 7
    %v297 = vsub.s32 %v294, %v296
    %v298 = vrot.slane %v270, %v297
    %v299 = vcombine.high %v277, %v277
    %v300 = vcombine.high %v284, %v284
    %v301 = vcombine.high %v291, %v291
    %v302 = vcombine.high %v298, %v298
    %v303 = vcombine.low %v17, %v19
    %v304 = vcombine.high %v17, %v19
    %v305 = vcombine.low %v21, %v23
    %v306 = vcombine.high %v21, %v23
    %v308 = vunpack.c.l.s4 1966171168
    %v309 = vunpack.c.0.s8 %v308
    %v310 = vlaneseq
    %v311 = vshrl.u32 %v310, 7
    %v312 = vsub.s32 %v309, %v311
    %v313 = vrot.slane %v303, %v312
    %v315 = vunpack.c.l.s4 1966171168
    %v316 = vunpack.c.0.s8 %v315
    %v317 = vlaneseq
    %v318 = vshrl.u32 %v317, 7
    %v319 = vsub.s32 %v316, %v318
    %v320 = vrot.slane %v304, %v319
    %v322 = vunpack.c.l.s4 1966171168
    %v323 = vunpack.c.0.s8 %v322
    %v324 = vlaneseq
    %v325 = vshrl.u32 %v324, 7
    %v326 = vsub.s32 %v323, %v325
    %v327 = vrot.slane %v305, %v326
    %v329 = vunpack.c.l.s4 1966171168
    %v330 = vunpack.c.0.s8 %v329
    %v331 = vlaneseq
    %v332 = vshrl.u32 %v331, 7
    %v333 = vsub.s32 %v330, %v332
    %v334 = vrot.slane %v306, %v333
    %v335 = vcombine.low %v313, %v327
    %v336 = vcombine.high %v313, %v327
    %v337 = vcombine.low %v320, %v334
    %v339 = vunpack.c.l.s4 1966171168
    %v340 = vunpack.c.0.s8 %v339
    %v341 = vlaneseq
    %v342 = vshrl.u32 %v341, 7
    %v343 = vsub.s32 %v340, %v342
    %v344 = vrot.slane %v335, %v343
    %v346 = vunpack.c.l.s4 1966171168
    %v347 = vunpack.c.0.s8 %v346
    %v348 = vlaneseq
    %v349 = vshrl.u32 %v348, 7
    %v350 = vsub.s32 %v347, %v349
    %v351 = vrot.slane %v337, %v350
    %v353 = vunpack.c.l.s4 1966171168
    %v354 = vunpack.c.0.s8 %v353
    %v355 = vlaneseq
    %v356 = vshrl.u32 %v355, 7
    %v357 = vsub.s32 %v354, %v356
    %v358 = vrot.slane %v336, %v357
    %v359 = vcombine.high %v344, %v344
    %v360 = vcombine.high %v358, %v358
    %v569 = vunpack.c.l.b16 %v24
    %v570 = vunpack.c.l.b16 %v25
    %v571 = vunpack.c.l.b16 %v26
    %v572 = vunpack.c.l.b16 %v27
    %v573 = vunpack.c.l.b16 %v28
    %v574 = vunpack.c.l.b16 %v29
    %v575 = vunpack.c.l.b16 %v30
    %v576 = vunpack.c.l.b16 %v31
    %v577 = vunpack.c.l.b16 %v32
    %v578 = vunpack.c.l.b16 %v33
    %v579 = vunpack.c.l.b16 %v34
    %v580 = vunpack.c.l.b16 %v35
    %v581 = vunpack.c.l.b16 %v36
    %v582 = vunpack.c.l.b16 %v37
    %v583 = vunpack.c.l.b16 %v38
    %v584 = vunpack.c.l.b16 %v39
    %v585 = vunpack.c.l.b16 %v40
    %v586 = vunpack.c.l.b16 %v41
    %v587 = vunpack.c.l.b16 %v42
    %v588 = vunpack.c.l.b16 %v43
    %v589 = vunpack.c.l.b16 %v44
    %v590 = vunpack.c.l.b16 %v45
    %v591 = vunpack.c.l.b16 %v46
    %v592 = vunpack.c.l.b16 %v47
    %v593 = vunpack.c.l.b16 %v48
    %v594 = vunpack.c.l.b16 %v49
    %v595 = vunpack.c.l.b16 %v50
    %v596 = vunpack.c.l.b16 %v51
    %v597 = vunpack.c.l.b16 %v52
    %v598 = vunpack.c.l.b16 %v53
    %v599 = vunpack.c.l.b16 %v54
    %v600 = vunpack.c.l.b16 %v55
    %v601 = vunpack.c.l.b16 %v56
    %v602 = vunpack.c.l.b16 %v57
    %v603 = vunpack.c.l.b16 %v58
    %v604 = vunpack.c.l.b16 %v59
    %v605 = vunpack.c.l.b16 %v60
    %v606 = vunpack.c.l.b16 %v61
    %v607 = vunpack.c.l.b16 %v62
    %v608 = vunpack.c.l.b16 %v63
    %v609 = vunpack.c.l.b16 %v64
    %v610 = vunpack.c.l.b16 %v65
    %v611 = vunpack.c.l.b16 %v66
    %v612 = vunpack.c.l.b16 %v67
    %v613 = vunpack.c.l.b16 %v68
    %v614 = vunpack.c.l.b16 %v69
    %v615 = vunpack.c.l.b16 %v70
    %v616 = vunpack.c.l.b16 %v71
    %v617 = vunpack.c.l.b16 %v72
    %v618 = vunpack.c.l.b16 %v73
    %v619 = vunpack.c.l.b16 %v74
    %v620 = vunpack.c.l.b16 %v75
    %v621 = vunpack.c.l.b16 %v76
    %v622 = vunpack.c.l.b16 %v77
    %v623 = vunpack.c.l.b16 %v78
    %v624 = vunpack.c.l.b16 %v79
    %v625 = vunpack.c.l.b16 %v80
    %v626 = vunpack.c.l.b16 %v81
    %v627 = vunpack.c.l.b16 %v82
    %v628 = vunpack.c.l.b16 %v83
    %v629 = vunpack.c.l.b16 %v84
    %v630 = vunpack.c.l.b16 %v85
    %v631 = vunpack.c.l.b16 %v86
    %v632 = vunpack.c.l.b16 %v87
    %v633 = vunpack.c.l.b16 %v88
    %v634 = vunpack.c.l.b16 %v89
    %v635 = vunpack.c.l.b16 %v90
    %v636 = vunpack.c.l.b16 %v91
    %v637 = vunpack.c.l.b16 %v92
    %v638 = vunpack.c.l.b16 %v93
    %v639 = vunpack.c.l.b16 %v94
    %v640 = vunpack.c.l.b16 %v95
    %v641 = vunpack.c.l.b16 %v96
    %v642 = vunpack.c.l.b16 %v97
    %v643 = vunpack.c.l.b16 %v98
    %v644 = vunpack.c.l.b16 %v99
    %v645 = vunpack.c.l.b16 %v100
    %v646 = vunpack.c.l.b16 %v101
    %v647 = vunpack.c.l.b16 %v102
    %v648 = vunpack.c.l.b16 %v103
    %v649 = vunpack.c.l.b16 %v104
    %v650 = vunpack.c.l.b16 %v105
    %v651 = vunpack.c.l.b16 %v106
    %v652 = vunpack.c.l.b16 %v107
    %v653 = vunpack.c.l.b16 %v108
    %v654 = vunpack.c.l.b16 %v109
    %v655 = vunpack.c.l.b16 %v110
    %v656 = vunpack.c.l.b16 %v111
    %v657 = vunpack.c.l.b16 %v112
    %v658 = vunpack.c.l.b16 %v113
    %v659 = vunpack.c.l.b16 %v114
    %v660 = vunpack.c.l.b16 %v115
    %v661 = vunpack.c.l.b16 %v116
    %v662 = vunpack.c.l.b16 %v117
    %v663 = vunpack.c.l.b16 %v118
    %v664 = vunpack.c.l.b16 %v119
    %v665 = vunpack.c.l.b16 %v120
    %v666 = vunpack.c.l.b16 %v121
    %v667 = vunpack.c.l.b16 %v122
    %v668 = vunpack.c.l.b16 %v123
    %v669 = vunpack.c.l.b16 %v124
    %v670 = vunpack.c.l.b16 %v125
    %v671 = vunpack.c.l.b16 %v126
    %v672 = vunpack.c.l.b16 %v127
    %v673 = vunpack.c.l.b16 %v128
    %v674 = vunpack.c.l.b16 %v129
    %v675 = vunpack.c.l.b16 %v130
    %v676 = vunpack.c.l.b16 %v131
    %v677 = vunpack.c.l.b16 %v132
    %v678 = vunpack.c.l.b16 %v133
    %v679 = vunpack.c.l.b16 %v134
    %v680 = vunpack.c.l.b16 %v135
    %v681 = vunpack.c.l.b16 %v136
    %v682 = vunpack.c.l.b16 %v137
    %v683 = vunpack.c.l.b16 %v138
    %v684 = vunpack.c.l.b16 %v139
    %v685 = vunpack.c.l.b16 %v140
    %v686 = vunpack.c.l.b16 %v141
    %v687 = vunpack.c.l.b16 %v142
    %v688 = vunpack.c.l.b16 %v143
    %v689 = vunpack.c.l.b16 %v144
    %v690 = vunpack.c.l.b16 %v145
    %v691 = vunpack.c.l.b16 %v146
    %v692 = vunpack.c.l.b16 %v147
    %v693 = vunpack.c.l.b16 %v148
    %v694 = vunpack.c.l.b16 %v149
    %v695 = vunpack.c.l.b16 %v150
    %v696 = vunpack.c.l.b16 %v151
    %v697 = vunpack.c.l.b16 %v152
    %v698 = vunpack.c.l.b16 %v153
    %v699 = vunpack.c.l.b16 %v154
    %v700 = vunpack.c.l.b16 %v155
    %v701 = vunpack.c.l.b16 %v156
    %v702 = vunpack.c.l.b16 %v157
    %v703 = vunpack.c.l.b16 %v158
    %v704 = vunpack.c.l.b16 %v159
    %v705 = vunpack.c.l.b16 %v160
    %v706 = vunpack.c.l.b16 %v161
    %v707 = vunpack.c.l.b16 %v162
    %v708 = vunpack.c.l.b16 %v163
    %v709 = vunpack.c.l.b16 %v164
    %v710 = vunpack.c.l.b16 %v165
    %v711 = vunpack.c.l.b16 %v166
    %v712 = vunpack.c.l.b16 %v167
    %v713 = vunpack.c.l.b16 %v168
    %v714 = vunpack.c.l.b16 %v169
    %v715 = vunpack.c.l.b16 %v170
    %v716 = vunpack.c.l.b16 %v171
    %v717 = vunpack.c.l.b16 %v172
    %v718 = vunpack.c.l.b16 %v173
    %v719 = vunpack.c.l.b16 %v174
    %v720 = vunpack.c.l.b16 %v175
    %v721 = vunpack.c.l.b16 %v176
    %v722 = vunpack.c.l.b16 %v177
    %v723 = vunpack.c.l.b16 %v178
    %v724 = vunpack.c.l.b16 %v179
    %v725 = vunpack.c.l.b16 %v180
    %v726 = vunpack.c.l.b16 %v181
    %v727 = vunpack.c.l.b16 %v182
    %v728 = vunpack.c.l.b16 %v183
    %v729 = vunpack.c.l.b16 %v184
    %v730 = vunpack.c.l.b16 %v185
    %v731 = vunpack.c.l.b16 %v186
    %v732 = vunpack.c.l.b16 %v187
    %v733 = vunpack.c.l.b16 %v188
    %v734 = vunpack.c.l.b16 %v189
    %v735 = vunpack.c.l.b16 %v190
    %v736 = vunpack.c.l.b16 %v191
    %v737 = vunpack.c.l.b16 %v192
    %v738 = vunpack.c.l.b16 %v193
    %v739 = vunpack.c.l.b16 %v194
    %v740 = vunpack.c.l.b16 %v195
    %v741 = vunpack.c.l.b16 %v196
    %v742 = vunpack.c.l.b16 %v197
    %v743 = vunpack.c.l.b16 %v198
    %v744 = vunpack.c.l.b16 %v199
    %v745 = vunpack.c.l.b16 %v200
    %v746 = vunpack.c.l.b16 %v201
    %v747 = vunpack.c.l.b16 %v202
    %v748 = vunpack.c.l.b16 %v203
    %v749 = vunpack.c.l.b16 %v204
    %v750 = vunpack.c.l.b16 %v205
    %v751 = vunpack.c.l.b16 %v206
    %v752 = vunpack.c.l.b16 %v207
    %v753 = vunpack.c.l.b16 %v208
    %v754 = vunpack.c.l.b16 %v209
    %v755 = vunpack.c.l.b16 %v210
    %v756 = vunpack.c.l.b16 %v211
    %v757 = vunpack.c.l.b16 %v212
    %v758 = vunpack.c.l.b16 %v213
    %v759 = vunpack.c.l.b16 %v214
    %v760 = vunpack.c.l.b16 %v215
    %v761 = vunpack.c.l.b16 %v216
    %v762 = vunpack.c.l.b16 %v217
    %v763 = vunpack.c.l.b16 %v218
    %v764 = vunpack.c.l.b16 %v219
    %v765 = vpack.c.b16 %v570, %v569
    %v766 = vpack.c.b16 %v572, %v571
    %v767 = vpack.c.b16 %v574, %v573
    %v768 = vpack.c.b16 %v576, %v575
    %v769 = vpack.c.b16 %v578, %v577
    %v770 = vpack.c.b16 %v580, %v579
    %v771 = vpack.c.b16 %v582, %v581
    %v772 = vpack.c.b16 %v584, %v583
    %v773 = vpack.c.b16 %v586, %v585
    %v774 = vpack.c.b16 %v588, %v587
    %v775 = vpack.c.b16 %v590, %v589
    %v776 = vpack.c.b16 %v592, %v591
    %v777 = vpack.c.b16 %v594, %v593
    %v778 = vpack.c.b16 %v596, %v595
    %v779 = vpack.c.b16 %v598, %v597
    %v780 = vpack.c.b16 %v600, %v599
    %v781 = vpack.c.b16 %v602, %v601
    %v782 = vpack.c.b16 %v604, %v603
    %v783 = vpack.c.b16 %v606, %v605
    %v784 = vpack.c.b16 %v608, %v607
    %v785 = vpack.c.b16 %v610, %v609
    %v786 = vpack.c.b16 %v612, %v611
    %v787 = vpack.c.b16 %v614, %v613
    %v788 = vpack.c.b16 %v616, %v615
    %v789 = vpack.c.b16 %v618, %v617
    %v790 = vpack.c.b16 %v620, %v619
    %v791 = vpack.c.b16 %v622, %v621
    %v792 = vpack.c.b16 %v624, %v623
    %v793 = vpack.c.b16 %v626, %v625
    %v794 = vpack.c.b16 %v628, %v627
    %v795 = vpack.c.b16 %v630, %v629
    %v796 = vpack.c.b16 %v632, %v631
    %v797 = vpack.c.b16 %v634, %v633
    %v798 = vpack.c.b16 %v636, %v635
    %v799 = vpack.c.b16 %v638, %v637
    %v800 = vpack.c.b16 %v640, %v639
    %v801 = vpack.c.b16 %v642, %v641
    %v802 = vpack.c.b16 %v644, %v643
    %v803 = vpack.c.b16 %v646, %v645
    %v804 = vpack.c.b16 %v648, %v647
    %v805 = vpack.c.b16 %v650, %v649
    %v806 = vpack.c.b16 %v652, %v651
    %v807 = vpack.c.b16 %v654, %v653
    %v808 = vpack.c.b16 %v656, %v655
    %v809 = vpack.c.b16 %v658, %v657
    %v810 = vpack.c.b16 %v660, %v659
    %v811 = vpack.c.b16 %v662, %v661
    %v812 = vpack.c.b16 %v664, %v663
    %v813 = vpack.c.b16 %v666, %v665
    %v814 = vpack.c.b16 %v668, %v667
    %v815 = vpack.c.b16 %v670, %v669
    %v816 = vpack.c.b16 %v672, %v671
    %v817 = vpack.c.b16 %v674, %v673
    %v818 = vpack.c.b16 %v676, %v675
    %v819 = vpack.c.b16 %v678, %v677
    %v820 = vpack.c.b16 %v680, %v679
    %v821 = vpack.c.b16 %v682, %v681
    %v822 = vpack.c.b16 %v684, %v683
    %v823 = vpack.c.b16 %v686, %v685
    %v824 = vpack.c.b16 %v688, %v687
    %v825 = vpack.c.b16 %v690, %v689
    %v826 = vpack.c.b16 %v692, %v691
    %v827 = vpack.c.b16 %v694, %v693
    %v828 = vpack.c.b16 %v696, %v695
    %v829 = vpack.c.b16 %v698, %v697
    %v830 = vpack.c.b16 %v700, %v699
    %v831 = vpack.c.b16 %v702, %v701
    %v832 = vpack.c.b16 %v704, %v703
    %v833 = vpack.c.b16 %v706, %v705
    %v834 = vpack.c.b16 %v708, %v707
    %v835 = vpack.c.b16 %v710, %v709
    %v836 = vpack.c.b16 %v712, %v711
    %v837 = vpack.c.b16 %v714, %v713
    %v838 = vpack.c.b16 %v716, %v715
    %v839 = vpack.c.b16 %v718, %v717
    %v840 = vpack.c.b16 %v720, %v719
    %v841 = vpack.c.b16 %v722, %v721
    %v842 = vpack.c.b16 %v724, %v723
    %v843 = vpack.c.b16 %v726, %v725
    %v844 = vpack.c.b16 %v728, %v727
    %v845 = vpack.c.b16 %v730, %v729
    %v846 = vpack.c.b16 %v732, %v731
    %v847 = vpack.c.b16 %v734, %v733
    %v848 = vpack.c.b16 %v736, %v735
    %v849 = vpack.c.b16 %v738, %v737
    %v850 = vpack.c.b16 %v740, %v739
    %v851 = vpack.c.b16 %v742, %v741
    %v852 = vpack.c.b16 %v744, %v743
    %v853 = vpack.c.b16 %v746, %v745
    %v854 = vpack.c.b16 %v748, %v747
    %v855 = vpack.c.b16 %v750, %v749
    %v856 = vpack.c.b16 %v752, %v751
    %v857 = vpack.c.b16 %v754, %v753
    %v858 = vpack.c.b16 %v756, %v755
    %v859 = vpack.c.b16 %v758, %v757
    %v860 = vpack.c.b16 %v760, %v759
    %v861 = vpack.c.b16 %v762, %v761
    %v862 = vpack.c.b16 %v764, %v763
    %vm961 = vcmask 261120
    %v963 = vsel %vm961, %v351, 0
    %965 = vmatprep.subr.bf16.mxu0 0
    %966 = vmatpush1.bf16.msra.mxu0 %v765
    %967 = vmatprep.subr.bf16.mxu0 0
    %968 = vmatpush1.bf16.msra.mxu0 %v766
    %969 = vmatprep.subr.bf16.mxu0 0
    %970 = vmatpush1.bf16.msra.mxu0 %v767
    %971 = vmatprep.subr.bf16.mxu0 0
    %972 = vmatpush1.bf16.msra.mxu0 %v768
    %973 = vmatprep.subr.bf16.mxu0 0
    %974 = vmatpush1.bf16.msra.mxu0 %v769
    %975 = vmatprep.subr.bf16.mxu0 0
    %976 = vmatpush1.bf16.msra.mxu0 %v770
    %977 = vmatprep.subr.bf16.mxu0 0
    %978 = vmatpush1.bf16.msra.mxu0 %v771
    %979 = vmatprep.subr.bf16.mxu0 0
    %980 = vmatpush1.bf16.msra.mxu0 %v772
    %981 = vmatprep.subr.bf16.mxu0 0
    %982 = vmatpush1.bf16.msra.mxu0 %v773
    %983 = vmatprep.subr.bf16.mxu0 0
    %984 = vmatpush1.bf16.msra.mxu0 %v774
    %985 = vmatprep.subr.bf16.mxu0 0
    %986 = vmatpush1.bf16.msra.mxu0 %v775
    %987 = vmatprep.subr.bf16.mxu0 0
    %988 = vmatpush1.bf16.msra.mxu0 %v776
    %989 = vmatprep.subr.bf16.mxu0 0
    %990 = vmatpush1.bf16.msra.mxu0 %v777
    %991 = vmatprep.subr.bf16.mxu0 0
    %992 = vmatpush1.bf16.msra.mxu0 %v778
    %993 = vmatprep.subr.bf16.mxu0 0
    %994 = vmatpush1.bf16.msra.mxu0 %v779
    %995 = vmatprep.subr.bf16.mxu0 0
    %996 = vmatpush1.bf16.msra.mxu0 %v780
    %997 = vmatprep.mubr.bf16.mxu0 %v291
    %998 = vmatmul.mubr.bf16.gmra.mrb[0].mxu0 %v277
    %v999 = vpop.f32.mrb[0].mxu0
    %v1000 = vadd.f32 %v225, %v999
    %v1001 = vpop.f32.mrb[0].mxu0
    %v1002 = vpop.f32.mrb[0].mxu0
    %v1003 = vpop.f32.mrb[0].mxu0
    %1004 = vdwg.mxu0
    %1005 = vmatprep.subr.bf16.mxu0 0
    %1006 = vmatpush1.bf16.msra.mxu0 %v781
    %1007 = vmatprep.subr.bf16.mxu0 0
    %1008 = vmatpush1.bf16.msra.mxu0 %v782
    %1009 = vmatprep.subr.bf16.mxu0 0
    %1010 = vmatpush1.bf16.msra.mxu0 %v783
    %1011 = vmatprep.subr.bf16.mxu0 0
    %1012 = vmatpush1.bf16.msra.mxu0 %v784
    %1013 = vmatprep.subr.bf16.mxu0 0
    %1014 = vmatpush1.bf16.msra.mxu0 %v785
    %1015 = vmatprep.subr.bf16.mxu0 0
    %1016 = vmatpush1.bf16.msra.mxu0 %v786
    %1017 = vmatprep.subr.bf16.mxu0 0
    %1018 = vmatpush1.bf16.msra.mxu0 %v787
    %1019 = vmatprep.subr.bf16.mxu0 0
    %1020 = vmatpush1.bf16.msra.mxu0 %v788
    %1021 = vmatprep.subr.bf16.mxu0 0
    %1022 = vmatpush1.bf16.msra.mxu0 %v789
    %1023 = vmatprep.subr.bf16.mxu0 0
    %1024 = vmatpush1.bf16.msra.mxu0 %v790
    %1025 = vmatprep.subr.bf16.mxu0 0
    %1026 = vmatpush1.bf16.msra.mxu0 %v791
    %1027 = vmatprep.subr.bf16.mxu0 0
    %1028 = vmatpush1.bf16.msra.mxu0 %v792
    %1029 = vmatprep.subr.bf16.mxu0 0
    %1030 = vmatpush1.bf16.msra.mxu0 %v793
    %1031 = vmatprep.subr.bf16.mxu0 0
    %1032 = vmatpush1.bf16.msra.mxu0 %v794
    %1033 = vmatprep.subr.bf16.mxu0 0
    %1034 = vmatpush1.bf16.msra.mxu0 %v795
    %1035 = vmatprep.subr.bf16.mxu0 0
    %1036 = vmatpush1.bf16.msra.mxu0 %v796
    %1037 = vmatprep.mubr.bf16.mxu0 %v301
    %1038 = vmatmul.mubr.bf16.gmra.mrb[0].mxu0 %v299
    %v1039 = vpop.f32.mrb[0].mxu0
    %v1040 = vadd.f32 %v1000, %v1039
    %v1041 = vpop.f32.mrb[0].mxu0
    %v1042 = vpop.f32.mrb[0].mxu0
    %v1043 = vpop.f32.mrb[0].mxu0
    %1044 = vdwg.mxu0
    %1045 = vmatprep.subr.bf16.mxu0 0
    %1046 = vmatpush1.bf16.msra.mxu0 %v797
    %1047 = vmatprep.subr.bf16.mxu0 0
    %1048 = vmatpush1.bf16.msra.mxu0 %v798
    %1049 = vmatprep.subr.bf16.mxu0 0
    %1050 = vmatpush1.bf16.msra.mxu0 %v799
    %1051 = vmatprep.subr.bf16.mxu0 0
    %1052 = vmatpush1.bf16.msra.mxu0 %v800
    %1053 = vmatprep.subr.bf16.mxu0 0
    %1054 = vmatpush1.bf16.msra.mxu0 %v801
    %1055 = vmatprep.subr.bf16.mxu0 0
    %1056 = vmatpush1.bf16.msra.mxu0 %v802
    %1057 = vmatprep.subr.bf16.mxu0 0
    %1058 = vmatpush1.bf16.msra.mxu0 %v803
    %1059 = vmatprep.subr.bf16.mxu0 0
    %1060 = vmatpush1.bf16.msra.mxu0 %v804
    %1061 = vmatprep.subr.bf16.mxu0 0
    %1062 = vmatpush1.bf16.msra.mxu0 %v805
    %1063 = vmatprep.subr.bf16.mxu0 0
    %1064 = vmatpush1.bf16.msra.mxu0 %v806
    %1065 = vmatprep.subr.bf16.mxu0 0
    %1066 = vmatpush1.bf16.msra.mxu0 %v807
    %1067 = vmatprep.subr.bf16.mxu0 0
    %1068 = vmatpush1.bf16.msra.mxu0 %v808
    %1069 = vmatprep.subr.bf16.mxu0 0
    %1070 = vmatpush1.bf16.msra.mxu0 %v809
    %1071 = vmatprep.subr.bf16.mxu0 0
    %1072 = vmatpush1.bf16.msra.mxu0 %v810
    %1073 = vmatprep.subr.bf16.mxu0 0
    %1074 = vmatpush1.bf16.msra.mxu0 %v811
    %1075 = vmatprep.subr.bf16.mxu0 0
    %1076 = vmatpush1.bf16.msra.mxu0 %v812
    %1077 = vmatprep.mubr.bf16.mxu0 %v298
    %1078 = vmatmul.mubr.bf16.gmra.mrb[0].mxu0 %v284
    %v1079 = vpop.f32.mrb[0].mxu0
    %v1080 = vadd.f32 %v1040, %v1079
    %v1081 = vpop.f32.mrb[0].mxu0
    %v1082 = vpop.f32.mrb[0].mxu0
    %v1083 = vpop.f32.mrb[0].mxu0
    %1084 = vdwg.mxu0
    %1085 = vmatprep.subr.bf16.mxu0 0
    %1086 = vmatpush1.bf16.msra.mxu0 %v813
    %1087 = vmatprep.subr.bf16.mxu0 0
    %1088 = vmatpush1.bf16.msra.mxu0 %v814
    %1089 = vmatprep.subr.bf16.mxu0 0
    %1090 = vmatpush1.bf16.msra.mxu0 %v815
    %1091 = vmatprep.subr.bf16.mxu0 0
    %1092 = vmatpush1.bf16.msra.mxu0 %v816
    %1093 = vmatprep.subr.bf16.mxu0 0
    %1094 = vmatpush1.bf16.msra.mxu0 %v817
    %1095 = vmatprep.subr.bf16.mxu0 0
    %1096 = vmatpush1.bf16.msra.mxu0 %v818
    %1097 = vmatprep.subr.bf16.mxu0 0
    %1098 = vmatpush1.bf16.msra.mxu0 %v819
    %1099 = vmatprep.subr.bf16.mxu0 0
    %1100 = vmatpush1.bf16.msra.mxu0 %v820
    %1101 = vmatprep.subr.bf16.mxu0 0
    %1102 = vmatpush1.bf16.msra.mxu0 %v821
    %1103 = vmatprep.subr.bf16.mxu0 0
    %1104 = vmatpush1.bf16.msra.mxu0 %v822
    %1105 = vmatprep.subr.bf16.mxu0 0
    %1106 = vmatpush1.bf16.msra.mxu0 %v823
    %1107 = vmatprep.subr.bf16.mxu0 0
    %1108 = vmatpush1.bf16.msra.mxu0 %v824
    %1109 = vmatprep.subr.bf16.mxu0 0
    %1110 = vmatpush1.bf16.msra.mxu0 %v825
    %1111 = vmatprep.subr.bf16.mxu0 0
    %1112 = vmatpush1.bf16.msra.mxu0 %v826
    %1113 = vmatprep.subr.bf16.mxu0 0
    %1114 = vmatpush1.bf16.msra.mxu0 %v827
    %1115 = vmatprep.subr.bf16.mxu0 0
    %1116 = vmatpush1.bf16.msra.mxu0 %v828
    %1117 = vmatprep.mubr.bf16.mxu0 %v302
    %1118 = vmatmul.mubr.bf16.gmra.mrb[0].mxu0 %v300
    %v1119 = vpop.f32.mrb[0].mxu0
    %v1120 = vadd.f32 %v1080, %v1119
    %v1121 = vpop.f32.mrb[0].mxu0
    %v1122 = vpop.f32.mrb[0].mxu0
    %v1123 = vpop.f32.mrb[0].mxu0
    %1124 = vdwg.mxu0
    %1125 = vmatprep.subr.bf16.mxu0 0
    %1126 = vmatpush1.bf16.msra.mxu0 %v829
    %1127 = vmatprep.subr.bf16.mxu0 0
    %1128 = vmatpush1.bf16.msra.mxu0 %v830
    %1129 = vmatprep.subr.bf16.mxu0 0
    %1130 = vmatpush1.bf16.msra.mxu0 %v831
    %1131 = vmatprep.subr.bf16.mxu0 0
    %1132 = vmatpush1.bf16.msra.mxu0 %v832
    %1133 = vmatprep.subr.bf16.mxu0 0
    %1134 = vmatpush1.bf16.msra.mxu0 %v833
    %1135 = vmatprep.subr.bf16.mxu0 0
    %1136 = vmatpush1.bf16.msra.mxu0 %v834
    %1137 = vmatprep.subr.bf16.mxu0 0
    %1138 = vmatpush1.bf16.msra.mxu0 %v835
    %1139 = vmatprep.subr.bf16.mxu0 0
    %1140 = vmatpush1.bf16.msra.mxu0 %v836
    %1141 = vmatprep.subr.bf16.mxu0 0
    %1142 = vmatpush1.bf16.msra.mxu0 %v837
    %1143 = vmatprep.subr.bf16.mxu0 0
    %1144 = vmatpush1.bf16.msra.mxu0 %v838
    %1145 = vmatprep.subr.bf16.mxu0 0
    %1146 = vmatpush1.bf16.msra.mxu0 %v839
    %1147 = vmatprep.subr.bf16.mxu0 0
    %1148 = vmatpush1.bf16.msra.mxu0 %v840
    %1149 = vmatprep.subr.bf16.mxu0 0
    %1150 = vmatpush1.bf16.msra.mxu0 %v841
    %1151 = vmatprep.subr.bf16.mxu0 0
    %1152 = vmatpush1.bf16.msra.mxu0 %v842
    %1153 = vmatprep.subr.bf16.mxu0 0
    %1154 = vmatpush1.bf16.msra.mxu0 %v843
    %1155 = vmatprep.subr.bf16.mxu0 0
    %1156 = vmatpush1.bf16.msra.mxu0 %v844
    %1157 = vmatprep.mubr.bf16.mxu0 %v358
    %1158 = vmatmul.mubr.bf16.gmra.mrb[0].mxu0 %v344
    %v1159 = vpop.f32.mrb[0].mxu0
    %v1160 = vadd.f32 %v1120, %v1159
    %v1161 = vpop.f32.mrb[0].mxu0
    %v1162 = vpop.f32.mrb[0].mxu0
    %v1163 = vpop.f32.mrb[0].mxu0
    %1164 = vdwg.mxu0
    %1165 = vmatprep.subr.bf16.mxu0 0
    %1166 = vmatpush1.bf16.msra.mxu0 %v845
    %1167 = vmatprep.subr.bf16.mxu0 0
    %1168 = vmatpush1.bf16.msra.mxu0 %v846
    %1169 = vmatprep.subr.bf16.mxu0 0
    %1170 = vmatpush1.bf16.msra.mxu0 %v847
    %1171 = vmatprep.subr.bf16.mxu0 0
    %1172 = vmatpush1.bf16.msra.mxu0 %v848
    %1173 = vmatprep.subr.bf16.mxu0 0
    %1174 = vmatpush1.bf16.msra.mxu0 %v849
    %1175 = vmatprep.subr.bf16.mxu0 0
    %1176 = vmatpush1.bf16.msra.mxu0 %v850
    %1177 = vmatprep.subr.bf16.mxu0 0
    %1178 = vmatpush1.bf16.msra.mxu0 %v851
    %1179 = vmatprep.subr.bf16.mxu0 0
    %1180 = vmatpush1.bf16.msra.mxu0 %v852
    %1181 = vmatprep.subr.bf16.mxu0 0
    %1182 = vmatpush1.bf16.msra.mxu0 %v853
    %1183 = vmatprep.subr.bf16.mxu0 0
    %1184 = vmatpush1.bf16.msra.mxu0 %v854
    %1185 = vmatprep.subr.bf16.mxu0 0
    %1186 = vmatpush1.bf16.msra.mxu0 %v855
    %1187 = vmatprep.subr.bf16.mxu0 0
    %1188 = vmatpush1.bf16.msra.mxu0 %v856
    %1189 = vmatprep.subr.bf16.mxu0 0
    %1190 = vmatpush1.bf16.msra.mxu0 %v857
    %1191 = vmatprep.subr.bf16.mxu0 0
    %1192 = vmatpush1.bf16.msra.mxu0 %v858
    %1193 = vmatprep.subr.bf16.mxu0 0
    %1194 = vmatpush1.bf16.msra.mxu0 %v859
    %1195 = vmatprep.subr.bf16.mxu0 0
    %1196 = vmatpush1.bf16.msra.mxu0 %v860
    %1197 = vmatprep.mubr.bf16.mxu0 %v360
    %1198 = vmatmul.mubr.bf16.gmra.mrb[0].mxu0 %v359
    %v1199 = vpop.f32.mrb[0].mxu0
    %v1200 = vadd.f32 %v1160, %v1199
    %v1201 = vpop.f32.mrb[0].mxu0
    %v1202 = vpop.f32.mrb[0].mxu0
    %v1203 = vpop.f32.mrb[0].mxu0
    %1204 = vdwg.mxu0
    %1205 = vmatprep.subr.bf16.mxu0 0
    %1206 = vmatpush1.bf16.msra.mxu0 %v861
    %1207 = vmatprep.subr.bf16.mxu0 0
    %1208 = vmatpush1.bf16.msra.mxu0 %v862
    %1209 = vmatprep.subr.bf16.mxu0 0
    %1210 = vmatpush1.bf16.msra.mxu0 0
    %1211 = vmatprep.subr.bf16.mxu0 0
    %1212 = vmatpush1.bf16.msra.mxu0 0
    %1213 = vmatprep.subr.bf16.mxu0 0
    %1214 = vmatpush1.bf16.msra.mxu0 0
    %1215 = vmatprep.subr.bf16.mxu0 0
    %1216 = vmatpush1.bf16.msra.mxu0 0
    %1217 = vmatprep.subr.bf16.mxu0 0
    %1218 = vmatpush1.bf16.msra.mxu0 0
    %1219 = vmatprep.subr.bf16.mxu0 0
    %1220 = vmatpush1.bf16.msra.mxu0 0
    %1221 = vmatprep.subr.bf16.mxu0 0
    %1222 = vmatpush1.bf16.msra.mxu0 0
    %1223 = vmatprep.subr.bf16.mxu0 0
    %1224 = vmatpush1.bf16.msra.mxu0 0
    %1225 = vmatprep.subr.bf16.mxu0 0
    %1226 = vmatpush1.bf16.msra.mxu0 0
    %1227 = vmatprep.subr.bf16.mxu0 0
    %1228 = vmatpush1.bf16.msra.mxu0 0
    %1229 = vmatprep.subr.bf16.mxu0 0
    %1230 = vmatpush1.bf16.msra.mxu0 0
    %1231 = vmatprep.subr.bf16.mxu0 0
    %1232 = vmatpush1.bf16.msra.mxu0 0
    %1233 = vmatprep.subr.bf16.mxu0 0
    %1234 = vmatpush1.bf16.msra.mxu0 0
    %1235 = vmatprep.subr.bf16.mxu0 0
    %1236 = vmatpush1.bf16.msra.mxu0 0
    %1237 = vmatprep.mubr.bf16.mxu0 0
    %1238 = vmatmul.mubr.bf16.gmra.mrb[0].mxu0 %v963
    %v1239 = vpop.f32.mrb[0].mxu0
    %v1240 = vadd.f32 %v1200, %v1239
    %v1241 = vpop.f32.mrb[0].mxu0
    %v1242 = vpop.f32.mrb[0].mxu0
    %v1243 = vpop.f32.mrb[0].mxu0
    %1244 = vdwg.mxu0
    %1245 = vst [vmem:[#allocation2] sm:$0xff] %v1240
    // Predicated region
    $region14: #{cnn_forward.5} parent=1 // pred_check
      _
    $region15: #{cnn_forward.5} parent=1 // pred_check_branch
      %1247 = sbr.rel (0) target = $region17
    $region16: #{cnn_forward.5} parent=1 // pred_region
      %s1249 = ssub.s32 128, 32
      %1250 = vsyncadd [#allocation3], %s1249
      %s1251 = sshll.u32 [#allocation2], 4
      %s1252 = int_to_ptr.vmem [resolvable:$true] %s1251
      %1257 = dma.vmem_to_hbm [thread:$0]  %s1252, 32, %s3, [#allocation3], 32, 32, 2
    $region17: #{cnn_forward.5} parent=1 // pred_fallthru
      _
    // Predicated region
    $region18: #{cnn_forward.5} parent=1 // pred_check
      _
    $region19: #{cnn_forward.5} parent=1 // pred_check_branch
      %1259 = sbr.rel (0) target = $region21
    $region20: #{cnn_forward.5} parent=1 // pred_region
      %1260 = dma.done [#allocation3], 128
    $region21: #{cnn_forward.5} parent=1 // pred_fallthru
      _
    %1261 = vsyncpa [#allocation3], 1

</llo_original>
